<compile_context>
chip_gen: v7x
topology: tpu7x:2x2x1
jax: 0.10.0
libtpu: 0.0.40
codegen_flags: <defaults>
</compile_context>

<pallas_src>
import jax
import jax.numpy as jnp
from jax.experimental import pallas as pl
from jax.experimental.pallas import tpu as pltpu

HID = 32        # hid_dim
HEADS = 4       # num_heads
LAYERS = 2      # num_layers
B = 2           # batch
N = 16          # number of nodes (sequence length)
EPS = 1e-5      # torch LayerNorm default eps


def _layer_norm(x, gamma, beta):
    mu = jnp.mean(x, axis=-1, keepdims=True)
    var = jnp.mean((x - mu) ** 2, axis=-1, keepdims=True)
    return (x - mu) * jax.lax.rsqrt(var + EPS) * gamma + beta


def fused_kernel(lw_ref, adj_ref, rel_ref, h_ref,
                 wqkv_ref, wo_ref, w1_ref, w2_ref, vec4_ref, vecd_ref,
                 out_ref):
    """All layers + layer-weighted combine, one invocation, batch folded."""
    f32 = jnp.float32
    D = HID
    dh = D // HEADS
    scale = f32(1.0 / (dh ** 0.5))

    adj = adj_ref[...]                               # (B, N, N)
    rel = rel_ref[...].astype(f32)                   # (B, N, N)
    # Adjacency mask + relative-position bias, hoisted out of layer/head loops.
    # NOTE: -1e9 additive mask assumes float32 scores (would overflow in bf16).
    mask_bias = jnp.where(adj > 0, f32(0.0), f32(-1e9)) + rel   # (B, N, N)

    # Fold batch into the row (sublane) dim for all matmuls: (B*N, D).
    h = h_ref[...].astype(f32).reshape(B * N, D)

    acc = jnp.zeros((B * N, D), f32)                 # weighted layer combine
    for l in range(LAYERS):                          # static, fully unrolled
        w_qkv = wqkv_ref[l]                          # (D, 3D)  [Wq|Wk|Wv]
        w_o = wo_ref[l]                              # (D, D)
        w1 = w1_ref[l]                               # (D, 4D)
        w2 = w2_ref[l]                               # (4D, D)
        vec4 = vec4_ref[l]                           # (2, 4D)
        vecd = vecd_ref[l]                           # (5, D)
        b_qkv = vec4[0:1, :3 * D]                    # (1, 3D)  [bq|bk|bv]
        b_o = vec4[0:1, 3 * D:]                      # (1, D)
        b1 = vec4[1:2, :]                            # (1, 4D)
        b2 = vecd[0:1]                               # (1, D)
        g_c, be_c = vecd[1:2], vecd[2:3]             # conv LayerNorm gamma/beta
        g_f, be_f = vecd[3:4], vecd[4:5]             # fc   LayerNorm gamma/beta

        # --- AttentionGCNConv -------------------------------------------
        # Fused QKV projection: one (B*N, D) x (D, 3D) matmul + one bias add.
        qkv = jnp.dot(h, w_qkv, preferred_element_type=f32) + b_qkv  # (BN, 3D)

        # Multi-head adjacency-masked attention. Static head loop; no concat:
        # the output projection is accumulated head-by-head.
        attn = jnp.zeros((B * N, D), f32)
        for hd in range(HEADS):
            qh = qkv[:, hd * dh:(hd + 1) * dh].reshape(B, N, dh)
            kh = qkv[:, D + hd * dh:D + (hd + 1) * dh].reshape(B, N, dh)
            vh = qkv[:, 2 * D + hd * dh:2 * D + (hd + 1) * dh].reshape(B, N, dh)

            s = jnp.einsum('bnd,bmd->bnm', qh, kh,
                           preferred_element_type=f32) * scale + mask_bias
            s = s - jnp.max(s, axis=-1, keepdims=True)
            p = jnp.exp(s)
            p = p * pl.reciprocal(jnp.sum(p, axis=-1, keepdims=True),
                                  approx=True)
            ctx = jnp.einsum('bnm,bmd->bnd', p, vh,
                             preferred_element_type=f32).reshape(B * N, dh)
            attn = attn + jnp.dot(ctx, w_o[hd * dh:(hd + 1) * dh, :],
                                  preferred_element_type=f32)
        attn = attn + b_o
        # dropout -> identity (eval)
        conv = _layer_norm(attn + h, g_c, be_c)

        # --- Intermediate (FFN) ------------------------------------------
        ff = jnp.dot(conv, w1, preferred_element_type=f32) + b1
        ff = jnp.maximum(ff, 0.0)                    # ReLU
        ff = jnp.dot(ff, w2, preferred_element_type=f32) + b2
        # fc_dropout -> identity (eval)
        h = _layer_norm(ff + conv, g_f, be_f)

        # softmax(layer_weight)[l] * h_l accumulated in registers/VMEM.
        acc = acc + lw_ref[0, l] * h

    out_ref[...] = acc.reshape(B, N, D).astype(out_ref.dtype)


def transformer_gcn_forward(adj, relative_pos, h, packed, layer_weight):
    w_qkv, w_o, w1, w2, vec4, vecd = packed
    lw = jax.nn.softmax(layer_weight, axis=-1)       # (1, L) tiny glue op
    b, n, d = h.shape

    def full3(shape):
        return pl.BlockSpec(shape, lambda i: (0, 0, 0))

    return pl.pallas_call(
        fused_kernel,
        out_shape=jax.ShapeDtypeStruct((b, n, d), h.dtype),
        grid=(1,),
        in_specs=[
            pl.BlockSpec(memory_space=pltpu.MemorySpace.SMEM),   # layer weights
            full3(adj.shape),
            full3(relative_pos.shape),
            full3(h.shape),
            full3(w_qkv.shape),
            full3(w_o.shape),
            full3(w1.shape),
            full3(w2.shape),
            full3(vec4.shape),
            full3(vecd.shape),
        ],
        out_specs=full3((b, n, d)),
        compiler_params=pltpu.CompilerParams(
            dimension_semantics=("arbitrary",)),
    )(lw, adj, relative_pos, h, w_qkv, w_o, w1, w2, vec4, vecd)


def init_packed_params(key, d, layers):
    """Per-layer params packed into 6 layer-stacked slabs."""
    keys = jax.random.split(key, layers)
    std = 0.02
    f32 = jnp.float32
    w_qkv_l, w_o_l, w1_l, w2_l, vec4_l, vecd_l = [], [], [], [], [], []
    for lk in keys:
        ks = jax.random.split(lk, 6)
        wq = jax.random.normal(ks[0], (d, d), f32) * std
        wk = jax.random.normal(ks[1], (d, d), f32) * std
        wv = jax.random.normal(ks[2], (d, d), f32) * std
        wo = jax.random.normal(ks[3], (d, d), f32) * std
        wf1 = jax.random.normal(ks[4], (d, 4 * d), f32) * std
        wf2 = jax.random.normal(ks[5], (4 * d, d), f32) * std
        w_qkv_l.append(jnp.concatenate([wq, wk, wv], axis=1))    # (d, 3d)
        w_o_l.append(wo)
        w1_l.append(wf1)
        w2_l.append(wf2)
        # vec4[l]: row0 = [bq|bk|bv|bo] (zeros), row1 = b1 (zeros)
        vec4_l.append(jnp.zeros((2, 4 * d), f32))
        # vecd[l]: rows = [b2, gamma_conv, beta_conv, gamma_fc, beta_fc]
        vecd_l.append(jnp.stack([jnp.zeros((d,), f32),
                                 jnp.ones((d,), f32), jnp.zeros((d,), f32),
                                 jnp.ones((d,), f32), jnp.zeros((d,), f32)],
                                axis=0))
    stack = lambda xs: jnp.stack(xs, axis=0)
    return (stack(w_qkv_l), stack(w_o_l), stack(w1_l), stack(w2_l),
            stack(vec4_l), stack(vecd_l))


if __name__ == "__main__":
    key = jax.random.PRNGKey(0)
    k_adj, k_rel, k_h, k_p = jax.random.split(key, 4)

    # deterministic small inputs
    adj = (jax.random.uniform(k_adj, (B, N, N)) > 0.5).astype(jnp.float32)
    adj = jnp.maximum(adj, jnp.eye(N, dtype=jnp.float32)[None])  # self loops
    relative_pos = jax.random.normal(k_rel, (B, N, N), jnp.float32) * 0.1
    h = jax.random.normal(k_h, (B, N, HID), jnp.float32)

    packed = init_packed_params(k_p, HID, LAYERS)
    layer_weight = jnp.zeros((1, LAYERS), jnp.float32)  # nn.Parameter(zeros(1, L))

    out = transformer_gcn_forward(adj, relative_pos, h, packed, layer_weight)
    out = jax.block_until_ready(out)
    assert out.shape == (B, N, HID) and bool(jnp.all(jnp.isfinite(out)))
    print("KERNEL_OK")
</pallas_src>

<mosaic_0001>
module attributes {stable_mosaic.version = 11 : i64} {
  func.func @fused_kernel(%arg0: i32, %arg1: memref<1x2xf32, #tpu.memory_space<smem>>, %arg2: memref<2x16x16xf32, #tpu.memory_space<vmem>>, %arg3: memref<2x16x16xf32, #tpu.memory_space<vmem>>, %arg4: memref<2x16x32xf32, #tpu.memory_space<vmem>>, %arg5: memref<2x32x96xf32, #tpu.memory_space<vmem>>, %arg6: memref<2x32x32xf32, #tpu.memory_space<vmem>>, %arg7: memref<2x32x128xf32, #tpu.memory_space<vmem>>, %arg8: memref<2x128x32xf32, #tpu.memory_space<vmem>>, %arg9: memref<2x2x128xf32, #tpu.memory_space<vmem>>, %arg10: memref<2x5x32xf32, #tpu.memory_space<vmem>>, %arg11: memref<2x16x32xf32, #tpu.memory_space<vmem>>) attributes {dimension_semantics = [#tpu.dimension_semantics<arbitrary>], iteration_bounds = array<i64: 1>, scalar_prefetch = 0 : i64, scratch_operands = 0 : i64, tpu.core_type = #tpu.core_type<tc>, window_params = [{transform_indices = @transform_0, window_bounds = array<i64: 1, 2>}, {pipeline_mode = #tpu.pipeline_mode<synchronous>, transform_indices = @transform_1, window_bounds = array<i64: 2, 16, 16>}, {pipeline_mode = #tpu.pipeline_mode<synchronous>, transform_indices = @transform_2, window_bounds = array<i64: 2, 16, 16>}, {pipeline_mode = #tpu.pipeline_mode<synchronous>, transform_indices = @transform_3, window_bounds = array<i64: 2, 16, 32>}, {pipeline_mode = #tpu.pipeline_mode<synchronous>, transform_indices = @transform_4, window_bounds = array<i64: 2, 32, 96>}, {pipeline_mode = #tpu.pipeline_mode<synchronous>, transform_indices = @transform_5, window_bounds = array<i64: 2, 32, 32>}, {pipeline_mode = #tpu.pipeline_mode<synchronous>, transform_indices = @transform_6, window_bounds = array<i64: 2, 32, 128>}, {pipeline_mode = #tpu.pipeline_mode<synchronous>, transform_indices = @transform_7, window_bounds = array<i64: 2, 128, 32>}, {pipeline_mode = #tpu.pipeline_mode<synchronous>, transform_indices = @transform_8, window_bounds = array<i64: 2, 2, 128>}, {pipeline_mode = #tpu.pipeline_mode<synchronous>, transform_indices = @transform_9, window_bounds = array<i64: 2, 5, 32>}, {pipeline_mode = #tpu.pipeline_mode<synchronous>, transform_indices = @transform_10, window_bounds = array<i64: 2, 16, 32>}]} {
    %c0 = arith.constant 0 : index
    %c0_0 = arith.constant 0 : index
    %c0_1 = arith.constant 0 : index
    %0 = vector.load %arg2[%c0, %c0_0, %c0_1] : memref<2x16x16xf32, #tpu.memory_space<vmem>>, vector<2x16x16xf32>
    %c0_2 = arith.constant 0 : index
    %c0_3 = arith.constant 0 : index
    %c0_4 = arith.constant 0 : index
    %1 = vector.load %arg3[%c0_2, %c0_3, %c0_4] : memref<2x16x16xf32, #tpu.memory_space<vmem>>, vector<2x16x16xf32>
    %cst = arith.constant 0.000000e+00 : f32
    %2 = vector.broadcast %cst : f32 to vector<2x16x16xf32>
    %3 = arith.cmpf ogt, %0, %2 : vector<2x16x16xf32>
    %cst_5 = arith.constant 0.000000e+00 : f32
    %cst_6 = arith.constant -1.000000e+09 : f32
    %4 = vector.broadcast %cst_5 : f32 to vector<2x16x16xf32>
    %5 = vector.broadcast %cst_6 : f32 to vector<2x16x16xf32>
    %6 = arith.select %3, %4, %5 : vector<2x16x16xi1>, vector<2x16x16xf32>
    %7 = arith.addf %6, %1 : vector<2x16x16xf32>
    %c0_7 = arith.constant 0 : index
    %c0_8 = arith.constant 0 : index
    %c0_9 = arith.constant 0 : index
    %8 = vector.load %arg4[%c0_7, %c0_8, %c0_9] : memref<2x16x32xf32, #tpu.memory_space<vmem>>, vector<2x16x32xf32>
    %9 = vector.shape_cast %8 : vector<2x16x32xf32> to vector<32x32xf32>
    %cst_10 = arith.constant 0.000000e+00 : f32
    %10 = vector.broadcast %cst_10 : f32 to vector<32x32xf32>
    %c0_11 = arith.constant 0 : index
    %c0_12 = arith.constant 0 : index
    %c0_13 = arith.constant 0 : index
    %11 = vector.load %arg5[%c0_11, %c0_12, %c0_13] : memref<2x32x96xf32, #tpu.memory_space<vmem>>, vector<1x32x96xf32>
    %12 = vector.shape_cast %11 : vector<1x32x96xf32> to vector<32x96xf32>
    %c0_14 = arith.constant 0 : index
    %c0_15 = arith.constant 0 : index
    %c0_16 = arith.constant 0 : index
    %13 = vector.load %arg6[%c0_14, %c0_15, %c0_16] : memref<2x32x32xf32, #tpu.memory_space<vmem>>, vector<1x32x32xf32>
    %14 = vector.shape_cast %13 : vector<1x32x32xf32> to vector<32x32xf32>
    %c0_17 = arith.constant 0 : index
    %c0_18 = arith.constant 0 : index
    %c0_19 = arith.constant 0 : index
    %15 = vector.load %arg7[%c0_17, %c0_18, %c0_19] : memref<2x32x128xf32, #tpu.memory_space<vmem>>, vector<1x32x128xf32>
    %16 = vector.shape_cast %15 : vector<1x32x128xf32> to vector<32x128xf32>
    %c0_20 = arith.constant 0 : index
    %c0_21 = arith.constant 0 : index
    %c0_22 = arith.constant 0 : index
    %17 = vector.load %arg8[%c0_20, %c0_21, %c0_22] : memref<2x128x32xf32, #tpu.memory_space<vmem>>, vector<1x128x32xf32>
    %18 = vector.shape_cast %17 : vector<1x128x32xf32> to vector<128x32xf32>
    %c0_23 = arith.constant 0 : index
    %c0_24 = arith.constant 0 : index
    %c0_25 = arith.constant 0 : index
    %19 = vector.load %arg9[%c0_23, %c0_24, %c0_25] : memref<2x2x128xf32, #tpu.memory_space<vmem>>, vector<1x2x128xf32>
    %20 = vector.shape_cast %19 : vector<1x2x128xf32> to vector<2x128xf32>
    %c0_26 = arith.constant 0 : index
    %c0_27 = arith.constant 0 : index
    %c0_28 = arith.constant 0 : index
    %21 = vector.load %arg10[%c0_26, %c0_27, %c0_28] : memref<2x5x32xf32, #tpu.memory_space<vmem>>, vector<1x5x32xf32>
    %22 = vector.shape_cast %21 : vector<1x5x32xf32> to vector<5x32xf32>
    %23 = vector.extract_strided_slice %20 {offsets = [0, 0], sizes = [1, 96], strides = [1, 1]} : vector<2x128xf32> to vector<1x96xf32>
    %24 = vector.extract_strided_slice %20 {offsets = [0, 96], sizes = [1, 32], strides = [1, 1]} : vector<2x128xf32> to vector<1x32xf32>
    %25 = vector.extract_strided_slice %20 {offsets = [1, 0], sizes = [1, 128], strides = [1, 1]} : vector<2x128xf32> to vector<1x128xf32>
    %26 = vector.extract_strided_slice %22 {offsets = [0, 0], sizes = [1, 32], strides = [1, 1]} : vector<5x32xf32> to vector<1x32xf32>
    %27 = vector.extract_strided_slice %22 {offsets = [1, 0], sizes = [1, 32], strides = [1, 1]} : vector<5x32xf32> to vector<1x32xf32>
    %28 = vector.extract_strided_slice %22 {offsets = [2, 0], sizes = [1, 32], strides = [1, 1]} : vector<5x32xf32> to vector<1x32xf32>
    %29 = vector.extract_strided_slice %22 {offsets = [3, 0], sizes = [1, 32], strides = [1, 1]} : vector<5x32xf32> to vector<1x32xf32>
    %30 = vector.extract_strided_slice %22 {offsets = [4, 0], sizes = [1, 32], strides = [1, 1]} : vector<5x32xf32> to vector<1x32xf32>
    %cst_29 = arith.constant dense<0.000000e+00> : vector<32x96xf32>
    %31 = tpu.matmul %9, %12, %cst_29 {dimension_numbers = #tpu.dot_dimension_numbers<[1], [0], [0], [1], [0, 0, 1, 1], [], []>} : vector<32x32xf32>, vector<32x96xf32>, vector<32x96xf32> -> vector<32x96xf32>
    %32 = vector.broadcast %23 : vector<1x96xf32> to vector<32x96xf32>
    %33 = arith.addf %31, %32 : vector<32x96xf32>
    %cst_30 = arith.constant 0.000000e+00 : f32
    %34 = vector.broadcast %cst_30 : f32 to vector<32x32xf32>
    %35 = vector.extract_strided_slice %33 {offsets = [0, 0], sizes = [32, 8], strides = [1, 1]} : vector<32x96xf32> to vector<32x8xf32>
    %36 = vector.shape_cast %35 : vector<32x8xf32> to vector<2x16x8xf32>
    %37 = vector.extract_strided_slice %33 {offsets = [0, 32], sizes = [32, 8], strides = [1, 1]} : vector<32x96xf32> to vector<32x8xf32>
    %38 = vector.shape_cast %37 : vector<32x8xf32> to vector<2x16x8xf32>
    %39 = vector.extract_strided_slice %33 {offsets = [0, 64], sizes = [32, 8], strides = [1, 1]} : vector<32x96xf32> to vector<32x8xf32>
    %40 = vector.shape_cast %39 : vector<32x8xf32> to vector<2x16x8xf32>
    "tpu.trace_start"() <{level = 10 : i32, message = "bnd,bmd->bnm"}> : () -> ()
    %cst_31 = arith.constant dense<0.000000e+00> : vector<2x16x16xf32>
    %41 = tpu.matmul %36, %38, %cst_31 {dimension_numbers = #tpu.dot_dimension_numbers<[2], [2], [1], [1], [0, 0, 0, 1, 1, 1], [0], [0]>} : vector<2x16x8xf32>, vector<2x16x8xf32>, vector<2x16x16xf32> -> vector<2x16x16xf32>
    "tpu.trace_stop"() : () -> ()
    %cst_32 = arith.constant 0.353553385 : f32
    %42 = vector.broadcast %cst_32 : f32 to vector<2x16x16xf32>
    %43 = arith.mulf %41, %42 : vector<2x16x16xf32>
    %44 = arith.addf %43, %7 : vector<2x16x16xf32>
    %cst_33 = arith.constant dense<0xFF800000> : vector<2x16xf32>
    %45 = vector.multi_reduction <maximumf>, %44, %cst_33 [2] : vector<2x16x16xf32> to vector<2x16xf32>
    %46 = vector.shape_cast %45 : vector<2x16xf32> to vector<2x16x1xf32>
    %47 = vector.broadcast %46 : vector<2x16x1xf32> to vector<2x16x16xf32>
    %48 = arith.subf %44, %47 : vector<2x16x16xf32>
    %49 = math.exp %48 : vector<2x16x16xf32>
    %cst_34 = arith.constant dense<0.000000e+00> : vector<2x16xf32>
    %50 = vector.multi_reduction <add>, %49, %cst_34 [2] : vector<2x16x16xf32> to vector<2x16xf32>
    %51 = vector.shape_cast %50 : vector<2x16xf32> to vector<2x16x1xf32>
    %52 = tpu.reciprocal %51 {approx = true} : vector<2x16x1xf32> -> vector<2x16x1xf32>
    %53 = vector.broadcast %52 : vector<2x16x1xf32> to vector<2x16x16xf32>
    %54 = arith.mulf %49, %53 : vector<2x16x16xf32>
    "tpu.trace_start"() <{level = 10 : i32, message = "bnm,bmd->bnd"}> : () -> ()
    %cst_35 = arith.constant dense<0.000000e+00> : vector<2x16x8xf32>
    %55 = tpu.matmul %54, %40, %cst_35 {dimension_numbers = #tpu.dot_dimension_numbers<[2], [1], [1], [2], [0, 0, 0, 1, 1, 2], [0], [0]>} : vector<2x16x16xf32>, vector<2x16x8xf32>, vector<2x16x8xf32> -> vector<2x16x8xf32>
    "tpu.trace_stop"() : () -> ()
    %56 = vector.shape_cast %55 : vector<2x16x8xf32> to vector<32x8xf32>
    %57 = vector.extract_strided_slice %14 {offsets = [0, 0], sizes = [8, 32], strides = [1, 1]} : vector<32x32xf32> to vector<8x32xf32>
    %cst_36 = arith.constant dense<0.000000e+00> : vector<32x32xf32>
    %58 = tpu.matmul %56, %57, %cst_36 {dimension_numbers = #tpu.dot_dimension_numbers<[1], [0], [0], [1], [0, 0, 1, 1], [], []>} : vector<32x8xf32>, vector<8x32xf32>, vector<32x32xf32> -> vector<32x32xf32>
    %59 = arith.addf %34, %58 : vector<32x32xf32>
    %60 = vector.extract_strided_slice %33 {offsets = [0, 8], sizes = [32, 8], strides = [1, 1]} : vector<32x96xf32> to vector<32x8xf32>
    %61 = vector.shape_cast %60 : vector<32x8xf32> to vector<2x16x8xf32>
    %62 = vector.extract_strided_slice %33 {offsets = [0, 40], sizes = [32, 8], strides = [1, 1]} : vector<32x96xf32> to vector<32x8xf32>
    %63 = vector.shape_cast %62 : vector<32x8xf32> to vector<2x16x8xf32>
    %64 = vector.extract_strided_slice %33 {offsets = [0, 72], sizes = [32, 8], strides = [1, 1]} : vector<32x96xf32> to vector<32x8xf32>
    %65 = vector.shape_cast %64 : vector<32x8xf32> to vector<2x16x8xf32>
    "tpu.trace_start"() <{level = 10 : i32, message = "bnd,bmd->bnm"}> : () -> ()
    %cst_37 = arith.constant dense<0.000000e+00> : vector<2x16x16xf32>
    %66 = tpu.matmul %61, %63, %cst_37 {dimension_numbers = #tpu.dot_dimension_numbers<[2], [2], [1], [1], [0, 0, 0, 1, 1, 1], [0], [0]>} : vector<2x16x8xf32>, vector<2x16x8xf32>, vector<2x16x16xf32> -> vector<2x16x16xf32>
    "tpu.trace_stop"() : () -> ()
    %cst_38 = arith.constant 0.353553385 : f32
    %67 = vector.broadcast %cst_38 : f32 to vector<2x16x16xf32>
    %68 = arith.mulf %66, %67 : vector<2x16x16xf32>
    %69 = arith.addf %68, %7 : vector<2x16x16xf32>
    %cst_39 = arith.constant dense<0xFF800000> : vector<2x16xf32>
    %70 = vector.multi_reduction <maximumf>, %69, %cst_39 [2] : vector<2x16x16xf32> to vector<2x16xf32>
    %71 = vector.shape_cast %70 : vector<2x16xf32> to vector<2x16x1xf32>
    %72 = vector.broadcast %71 : vector<2x16x1xf32> to vector<2x16x16xf32>
    %73 = arith.subf %69, %72 : vector<2x16x16xf32>
    %74 = math.exp %73 : vector<2x16x16xf32>
    %cst_40 = arith.constant dense<0.000000e+00> : vector<2x16xf32>
    %75 = vector.multi_reduction <add>, %74, %cst_40 [2] : vector<2x16x16xf32> to vector<2x16xf32>
    %76 = vector.shape_cast %75 : vector<2x16xf32> to vector<2x16x1xf32>
    %77 = tpu.reciprocal %76 {approx = true} : vector<2x16x1xf32> -> vector<2x16x1xf32>
    %78 = vector.broadcast %77 : vector<2x16x1xf32> to vector<2x16x16xf32>
    %79 = arith.mulf %74, %78 : vector<2x16x16xf32>
    "tpu.trace_start"() <{level = 10 : i32, message = "bnm,bmd->bnd"}> : () -> ()
    %cst_41 = arith.constant dense<0.000000e+00> : vector<2x16x8xf32>
    %80 = tpu.matmul %79, %65, %cst_41 {dimension_numbers = #tpu.dot_dimension_numbers<[2], [1], [1], [2], [0, 0, 0, 1, 1, 2], [0], [0]>} : vector<2x16x16xf32>, vector<2x16x8xf32>, vector<2x16x8xf32> -> vector<2x16x8xf32>
    "tpu.trace_stop"() : () -> ()
    %81 = vector.shape_cast %80 : vector<2x16x8xf32> to vector<32x8xf32>
    %82 = vector.extract_strided_slice %14 {offsets = [8, 0], sizes = [8, 32], strides = [1, 1]} : vector<32x32xf32> to vector<8x32xf32>
    %cst_42 = arith.constant dense<0.000000e+00> : vector<32x32xf32>
    %83 = tpu.matmul %81, %82, %cst_42 {dimension_numbers = #tpu.dot_dimension_numbers<[1], [0], [0], [1], [0, 0, 1, 1], [], []>} : vector<32x8xf32>, vector<8x32xf32>, vector<32x32xf32> -> vector<32x32xf32>
    %84 = arith.addf %59, %83 : vector<32x32xf32>
    %85 = vector.extract_strided_slice %33 {offsets = [0, 16], sizes = [32, 8], strides = [1, 1]} : vector<32x96xf32> to vector<32x8xf32>
    %86 = vector.shape_cast %85 : vector<32x8xf32> to vector<2x16x8xf32>
    %87 = vector.extract_strided_slice %33 {offsets = [0, 48], sizes = [32, 8], strides = [1, 1]} : vector<32x96xf32> to vector<32x8xf32>
    %88 = vector.shape_cast %87 : vector<32x8xf32> to vector<2x16x8xf32>
    %89 = vector.extract_strided_slice %33 {offsets = [0, 80], sizes = [32, 8], strides = [1, 1]} : vector<32x96xf32> to vector<32x8xf32>
    %90 = vector.shape_cast %89 : vector<32x8xf32> to vector<2x16x8xf32>
    "tpu.trace_start"() <{level = 10 : i32, message = "bnd,bmd->bnm"}> : () -> ()
    %cst_43 = arith.constant dense<0.000000e+00> : vector<2x16x16xf32>
    %91 = tpu.matmul %86, %88, %cst_43 {dimension_numbers = #tpu.dot_dimension_numbers<[2], [2], [1], [1], [0, 0, 0, 1, 1, 1], [0], [0]>} : vector<2x16x8xf32>, vector<2x16x8xf32>, vector<2x16x16xf32> -> vector<2x16x16xf32>
    "tpu.trace_stop"() : () -> ()
    %cst_44 = arith.constant 0.353553385 : f32
    %92 = vector.broadcast %cst_44 : f32 to vector<2x16x16xf32>
    %93 = arith.mulf %91, %92 : vector<2x16x16xf32>
    %94 = arith.addf %93, %7 : vector<2x16x16xf32>
    %cst_45 = arith.constant dense<0xFF800000> : vector<2x16xf32>
    %95 = vector.multi_reduction <maximumf>, %94, %cst_45 [2] : vector<2x16x16xf32> to vector<2x16xf32>
    %96 = vector.shape_cast %95 : vector<2x16xf32> to vector<2x16x1xf32>
    %97 = vector.broadcast %96 : vector<2x16x1xf32> to vector<2x16x16xf32>
    %98 = arith.subf %94, %97 : vector<2x16x16xf32>
    %99 = math.exp %98 : vector<2x16x16xf32>
    %cst_46 = arith.constant dense<0.000000e+00> : vector<2x16xf32>
    %100 = vector.multi_reduction <add>, %99, %cst_46 [2] : vector<2x16x16xf32> to vector<2x16xf32>
    %101 = vector.shape_cast %100 : vector<2x16xf32> to vector<2x16x1xf32>
    %102 = tpu.reciprocal %101 {approx = true} : vector<2x16x1xf32> -> vector<2x16x1xf32>
    %103 = vector.broadcast %102 : vector<2x16x1xf32> to vector<2x16x16xf32>
    %104 = arith.mulf %99, %103 : vector<2x16x16xf32>
    "tpu.trace_start"() <{level = 10 : i32, message = "bnm,bmd->bnd"}> : () -> ()
    %cst_47 = arith.constant dense<0.000000e+00> : vector<2x16x8xf32>
    %105 = tpu.matmul %104, %90, %cst_47 {dimension_numbers = #tpu.dot_dimension_numbers<[2], [1], [1], [2], [0, 0, 0, 1, 1, 2], [0], [0]>} : vector<2x16x16xf32>, vector<2x16x8xf32>, vector<2x16x8xf32> -> vector<2x16x8xf32>
    "tpu.trace_stop"() : () -> ()
    %106 = vector.shape_cast %105 : vector<2x16x8xf32> to vector<32x8xf32>
    %107 = vector.extract_strided_slice %14 {offsets = [16, 0], sizes = [8, 32], strides = [1, 1]} : vector<32x32xf32> to vector<8x32xf32>
    %cst_48 = arith.constant dense<0.000000e+00> : vector<32x32xf32>
    %108 = tpu.matmul %106, %107, %cst_48 {dimension_numbers = #tpu.dot_dimension_numbers<[1], [0], [0], [1], [0, 0, 1, 1], [], []>} : vector<32x8xf32>, vector<8x32xf32>, vector<32x32xf32> -> vector<32x32xf32>
    %109 = arith.addf %84, %108 : vector<32x32xf32>
    %110 = vector.extract_strided_slice %33 {offsets = [0, 24], sizes = [32, 8], strides = [1, 1]} : vector<32x96xf32> to vector<32x8xf32>
    %111 = vector.shape_cast %110 : vector<32x8xf32> to vector<2x16x8xf32>
    %112 = vector.extract_strided_slice %33 {offsets = [0, 56], sizes = [32, 8], strides = [1, 1]} : vector<32x96xf32> to vector<32x8xf32>
    %113 = vector.shape_cast %112 : vector<32x8xf32> to vector<2x16x8xf32>
    %114 = vector.extract_strided_slice %33 {offsets = [0, 88], sizes = [32, 8], strides = [1, 1]} : vector<32x96xf32> to vector<32x8xf32>
    %115 = vector.shape_cast %114 : vector<32x8xf32> to vector<2x16x8xf32>
    "tpu.trace_start"() <{level = 10 : i32, message = "bnd,bmd->bnm"}> : () -> ()
    %cst_49 = arith.constant dense<0.000000e+00> : vector<2x16x16xf32>
    %116 = tpu.matmul %111, %113, %cst_49 {dimension_numbers = #tpu.dot_dimension_numbers<[2], [2], [1], [1], [0, 0, 0, 1, 1, 1], [0], [0]>} : vector<2x16x8xf32>, vector<2x16x8xf32>, vector<2x16x16xf32> -> vector<2x16x16xf32>
    "tpu.trace_stop"() : () -> ()
    %cst_50 = arith.constant 0.353553385 : f32
    %117 = vector.broadcast %cst_50 : f32 to vector<2x16x16xf32>
    %118 = arith.mulf %116, %117 : vector<2x16x16xf32>
    %119 = arith.addf %118, %7 : vector<2x16x16xf32>
    %cst_51 = arith.constant dense<0xFF800000> : vector<2x16xf32>
    %120 = vector.multi_reduction <maximumf>, %119, %cst_51 [2] : vector<2x16x16xf32> to vector<2x16xf32>
    %121 = vector.shape_cast %120 : vector<2x16xf32> to vector<2x16x1xf32>
    %122 = vector.broadcast %121 : vector<2x16x1xf32> to vector<2x16x16xf32>
    %123 = arith.subf %119, %122 : vector<2x16x16xf32>
    %124 = math.exp %123 : vector<2x16x16xf32>
    %cst_52 = arith.constant dense<0.000000e+00> : vector<2x16xf32>
    %125 = vector.multi_reduction <add>, %124, %cst_52 [2] : vector<2x16x16xf32> to vector<2x16xf32>
    %126 = vector.shape_cast %125 : vector<2x16xf32> to vector<2x16x1xf32>
    %127 = tpu.reciprocal %126 {approx = true} : vector<2x16x1xf32> -> vector<2x16x1xf32>
    %128 = vector.broadcast %127 : vector<2x16x1xf32> to vector<2x16x16xf32>
    %129 = arith.mulf %124, %128 : vector<2x16x16xf32>
    "tpu.trace_start"() <{level = 10 : i32, message = "bnm,bmd->bnd"}> : () -> ()
    %cst_53 = arith.constant dense<0.000000e+00> : vector<2x16x8xf32>
    %130 = tpu.matmul %129, %115, %cst_53 {dimension_numbers = #tpu.dot_dimension_numbers<[2], [1], [1], [2], [0, 0, 0, 1, 1, 2], [0], [0]>} : vector<2x16x16xf32>, vector<2x16x8xf32>, vector<2x16x8xf32> -> vector<2x16x8xf32>
    "tpu.trace_stop"() : () -> ()
    %131 = vector.shape_cast %130 : vector<2x16x8xf32> to vector<32x8xf32>
    %132 = vector.extract_strided_slice %14 {offsets = [24, 0], sizes = [8, 32], strides = [1, 1]} : vector<32x32xf32> to vector<8x32xf32>
    %cst_54 = arith.constant dense<0.000000e+00> : vector<32x32xf32>
    %133 = tpu.matmul %131, %132, %cst_54 {dimension_numbers = #tpu.dot_dimension_numbers<[1], [0], [0], [1], [0, 0, 1, 1], [], []>} : vector<32x8xf32>, vector<8x32xf32>, vector<32x32xf32> -> vector<32x32xf32>
    %134 = arith.addf %109, %133 : vector<32x32xf32>
    %135 = vector.broadcast %24 : vector<1x32xf32> to vector<32x32xf32>
    %136 = arith.addf %134, %135 : vector<32x32xf32>
    %137 = arith.addf %136, %9 : vector<32x32xf32>
    %cst_55 = arith.constant dense<0.000000e+00> : vector<32xf32>
    %138 = vector.multi_reduction <add>, %137, %cst_55 [1] : vector<32x32xf32> to vector<32xf32>
    %139 = vector.shape_cast %138 : vector<32xf32> to vector<32x1xf32>
    %cst_56 = arith.constant 3.200000e+01 : f32
    %140 = vector.broadcast %cst_56 : f32 to vector<32x1xf32>
    %141 = arith.divf %139, %140 : vector<32x1xf32>
    %142 = vector.broadcast %141 : vector<32x1xf32> to vector<32x32xf32>
    %143 = arith.subf %137, %142 : vector<32x32xf32>
    %144 = arith.mulf %143, %143 : vector<32x32xf32>
    %cst_57 = arith.constant dense<0.000000e+00> : vector<32xf32>
    %145 = vector.multi_reduction <add>, %144, %cst_57 [1] : vector<32x32xf32> to vector<32xf32>
    %146 = vector.shape_cast %145 : vector<32xf32> to vector<32x1xf32>
    %cst_58 = arith.constant 3.200000e+01 : f32
    %147 = vector.broadcast %cst_58 : f32 to vector<32x1xf32>
    %148 = arith.divf %146, %147 : vector<32x1xf32>
    %149 = vector.broadcast %141 : vector<32x1xf32> to vector<32x32xf32>
    %150 = arith.subf %137, %149 : vector<32x32xf32>
    %cst_59 = arith.constant 9.99999974E-6 : f32
    %151 = vector.broadcast %cst_59 : f32 to vector<32x1xf32>
    %152 = arith.addf %148, %151 : vector<32x1xf32>
    %153 = math.rsqrt %152 : vector<32x1xf32>
    %154 = vector.broadcast %153 : vector<32x1xf32> to vector<32x32xf32>
    %155 = arith.mulf %150, %154 : vector<32x32xf32>
    %156 = vector.broadcast %27 : vector<1x32xf32> to vector<32x32xf32>
    %157 = arith.mulf %155, %156 : vector<32x32xf32>
    %158 = vector.broadcast %28 : vector<1x32xf32> to vector<32x32xf32>
    %159 = arith.addf %157, %158 : vector<32x32xf32>
    %cst_60 = arith.constant dense<0.000000e+00> : vector<32x128xf32>
    %160 = tpu.matmul %159, %16, %cst_60 {dimension_numbers = #tpu.dot_dimension_numbers<[1], [0], [0], [1], [0, 0, 1, 1], [], []>} : vector<32x32xf32>, vector<32x128xf32>, vector<32x128xf32> -> vector<32x128xf32>
    %161 = vector.broadcast %25 : vector<1x128xf32> to vector<32x128xf32>
    %162 = arith.addf %160, %161 : vector<32x128xf32>
    %cst_61 = arith.constant 0.000000e+00 : f32
    %163 = vector.broadcast %cst_61 : f32 to vector<32x128xf32>
    %164 = arith.maximumf %162, %163 : vector<32x128xf32>
    %cst_62 = arith.constant dense<0.000000e+00> : vector<32x32xf32>
    %165 = tpu.matmul %164, %18, %cst_62 {dimension_numbers = #tpu.dot_dimension_numbers<[1], [0], [0], [1], [0, 0, 1, 1], [], []>} : vector<32x128xf32>, vector<128x32xf32>, vector<32x32xf32> -> vector<32x32xf32>
    %166 = vector.broadcast %26 : vector<1x32xf32> to vector<32x32xf32>
    %167 = arith.addf %165, %166 : vector<32x32xf32>
    %168 = arith.addf %167, %159 : vector<32x32xf32>
    %cst_63 = arith.constant dense<0.000000e+00> : vector<32xf32>
    %169 = vector.multi_reduction <add>, %168, %cst_63 [1] : vector<32x32xf32> to vector<32xf32>
    %170 = vector.shape_cast %169 : vector<32xf32> to vector<32x1xf32>
    %cst_64 = arith.constant 3.200000e+01 : f32
    %171 = vector.broadcast %cst_64 : f32 to vector<32x1xf32>
    %172 = arith.divf %170, %171 : vector<32x1xf32>
    %173 = vector.broadcast %172 : vector<32x1xf32> to vector<32x32xf32>
    %174 = arith.subf %168, %173 : vector<32x32xf32>
    %175 = arith.mulf %174, %174 : vector<32x32xf32>
    %cst_65 = arith.constant dense<0.000000e+00> : vector<32xf32>
    %176 = vector.multi_reduction <add>, %175, %cst_65 [1] : vector<32x32xf32> to vector<32xf32>
    %177 = vector.shape_cast %176 : vector<32xf32> to vector<32x1xf32>
    %cst_66 = arith.constant 3.200000e+01 : f32
    %178 = vector.broadcast %cst_66 : f32 to vector<32x1xf32>
    %179 = arith.divf %177, %178 : vector<32x1xf32>
    %180 = vector.broadcast %172 : vector<32x1xf32> to vector<32x32xf32>
    %181 = arith.subf %168, %180 : vector<32x32xf32>
    %cst_67 = arith.constant 9.99999974E-6 : f32
    %182 = vector.broadcast %cst_67 : f32 to vector<32x1xf32>
    %183 = arith.addf %179, %182 : vector<32x1xf32>
    %184 = math.rsqrt %183 : vector<32x1xf32>
    %185 = vector.broadcast %184 : vector<32x1xf32> to vector<32x32xf32>
    %186 = arith.mulf %181, %185 : vector<32x32xf32>
    %187 = vector.broadcast %29 : vector<1x32xf32> to vector<32x32xf32>
    %188 = arith.mulf %186, %187 : vector<32x32xf32>
    %189 = vector.broadcast %30 : vector<1x32xf32> to vector<32x32xf32>
    %190 = arith.addf %188, %189 : vector<32x32xf32>
    %c0_68 = arith.constant 0 : index
    %c0_69 = arith.constant 0 : index
    %191 = memref.load %arg1[%c0_68, %c0_69] : memref<1x2xf32, #tpu.memory_space<smem>>
    %192 = vector.broadcast %191 : f32 to vector<32x32xf32>
    %193 = arith.mulf %192, %190 : vector<32x32xf32>
    %194 = arith.addf %10, %193 : vector<32x32xf32>
    %c1 = arith.constant 1 : index
    %c0_70 = arith.constant 0 : index
    %c0_71 = arith.constant 0 : index
    %195 = vector.load %arg5[%c1, %c0_70, %c0_71] : memref<2x32x96xf32, #tpu.memory_space<vmem>>, vector<1x32x96xf32>
    %196 = vector.shape_cast %195 : vector<1x32x96xf32> to vector<32x96xf32>
    %c1_72 = arith.constant 1 : index
    %c0_73 = arith.constant 0 : index
    %c0_74 = arith.constant 0 : index
    %197 = vector.load %arg6[%c1_72, %c0_73, %c0_74] : memref<2x32x32xf32, #tpu.memory_space<vmem>>, vector<1x32x32xf32>
    %198 = vector.shape_cast %197 : vector<1x32x32xf32> to vector<32x32xf32>
    %c1_75 = arith.constant 1 : index
    %c0_76 = arith.constant 0 : index
    %c0_77 = arith.constant 0 : index
    %199 = vector.load %arg7[%c1_75, %c0_76, %c0_77] : memref<2x32x128xf32, #tpu.memory_space<vmem>>, vector<1x32x128xf32>
    %200 = vector.shape_cast %199 : vector<1x32x128xf32> to vector<32x128xf32>
    %c1_78 = arith.constant 1 : index
    %c0_79 = arith.constant 0 : index
    %c0_80 = arith.constant 0 : index
    %201 = vector.load %arg8[%c1_78, %c0_79, %c0_80] : memref<2x128x32xf32, #tpu.memory_space<vmem>>, vector<1x128x32xf32>
    %202 = vector.shape_cast %201 : vector<1x128x32xf32> to vector<128x32xf32>
    %c1_81 = arith.constant 1 : index
    %c0_82 = arith.constant 0 : index
    %c0_83 = arith.constant 0 : index
    %203 = vector.load %arg9[%c1_81, %c0_82, %c0_83] : memref<2x2x128xf32, #tpu.memory_space<vmem>>, vector<1x2x128xf32>
    %204 = vector.shape_cast %203 : vector<1x2x128xf32> to vector<2x128xf32>
    %c1_84 = arith.constant 1 : index
    %c0_85 = arith.constant 0 : index
    %c0_86 = arith.constant 0 : index
    %205 = vector.load %arg10[%c1_84, %c0_85, %c0_86] : memref<2x5x32xf32, #tpu.memory_space<vmem>>, vector<1x5x32xf32>
    %206 = vector.shape_cast %205 : vector<1x5x32xf32> to vector<5x32xf32>
    %207 = vector.extract_strided_slice %204 {offsets = [0, 0], sizes = [1, 96], strides = [1, 1]} : vector<2x128xf32> to vector<1x96xf32>
    %208 = vector.extract_strided_slice %204 {offsets = [0, 96], sizes = [1, 32], strides = [1, 1]} : vector<2x128xf32> to vector<1x32xf32>
    %209 = vector.extract_strided_slice %204 {offsets = [1, 0], sizes = [1, 128], strides = [1, 1]} : vector<2x128xf32> to vector<1x128xf32>
    %210 = vector.extract_strided_slice %206 {offsets = [0, 0], sizes = [1, 32], strides = [1, 1]} : vector<5x32xf32> to vector<1x32xf32>
    %211 = vector.extract_strided_slice %206 {offsets = [1, 0], sizes = [1, 32], strides = [1, 1]} : vector<5x32xf32> to vector<1x32xf32>
    %212 = vector.extract_strided_slice %206 {offsets = [2, 0], sizes = [1, 32], strides = [1, 1]} : vector<5x32xf32> to vector<1x32xf32>
    %213 = vector.extract_strided_slice %206 {offsets = [3, 0], sizes = [1, 32], strides = [1, 1]} : vector<5x32xf32> to vector<1x32xf32>
    %214 = vector.extract_strided_slice %206 {offsets = [4, 0], sizes = [1, 32], strides = [1, 1]} : vector<5x32xf32> to vector<1x32xf32>
    %cst_87 = arith.constant dense<0.000000e+00> : vector<32x96xf32>
    %215 = tpu.matmul %190, %196, %cst_87 {dimension_numbers = #tpu.dot_dimension_numbers<[1], [0], [0], [1], [0, 0, 1, 1], [], []>} : vector<32x32xf32>, vector<32x96xf32>, vector<32x96xf32> -> vector<32x96xf32>
    %216 = vector.broadcast %207 : vector<1x96xf32> to vector<32x96xf32>
    %217 = arith.addf %215, %216 : vector<32x96xf32>
    %cst_88 = arith.constant 0.000000e+00 : f32
    %218 = vector.broadcast %cst_88 : f32 to vector<32x32xf32>
    %219 = vector.extract_strided_slice %217 {offsets = [0, 0], sizes = [32, 8], strides = [1, 1]} : vector<32x96xf32> to vector<32x8xf32>
    %220 = vector.shape_cast %219 : vector<32x8xf32> to vector<2x16x8xf32>
    %221 = vector.extract_strided_slice %217 {offsets = [0, 32], sizes = [32, 8], strides = [1, 1]} : vector<32x96xf32> to vector<32x8xf32>
    %222 = vector.shape_cast %221 : vector<32x8xf32> to vector<2x16x8xf32>
    %223 = vector.extract_strided_slice %217 {offsets = [0, 64], sizes = [32, 8], strides = [1, 1]} : vector<32x96xf32> to vector<32x8xf32>
    %224 = vector.shape_cast %223 : vector<32x8xf32> to vector<2x16x8xf32>
    "tpu.trace_start"() <{level = 10 : i32, message = "bnd,bmd->bnm"}> : () -> ()
    %cst_89 = arith.constant dense<0.000000e+00> : vector<2x16x16xf32>
    %225 = tpu.matmul %220, %222, %cst_89 {dimension_numbers = #tpu.dot_dimension_numbers<[2], [2], [1], [1], [0, 0, 0, 1, 1, 1], [0], [0]>} : vector<2x16x8xf32>, vector<2x16x8xf32>, vector<2x16x16xf32> -> vector<2x16x16xf32>
    "tpu.trace_stop"() : () -> ()
    %cst_90 = arith.constant 0.353553385 : f32
    %226 = vector.broadcast %cst_90 : f32 to vector<2x16x16xf32>
    %227 = arith.mulf %225, %226 : vector<2x16x16xf32>
    %228 = arith.addf %227, %7 : vector<2x16x16xf32>
    %cst_91 = arith.constant dense<0xFF800000> : vector<2x16xf32>
    %229 = vector.multi_reduction <maximumf>, %228, %cst_91 [2] : vector<2x16x16xf32> to vector<2x16xf32>
    %230 = vector.shape_cast %229 : vector<2x16xf32> to vector<2x16x1xf32>
    %231 = vector.broadcast %230 : vector<2x16x1xf32> to vector<2x16x16xf32>
    %232 = arith.subf %228, %231 : vector<2x16x16xf32>
    %233 = math.exp %232 : vector<2x16x16xf32>
    %cst_92 = arith.constant dense<0.000000e+00> : vector<2x16xf32>
    %234 = vector.multi_reduction <add>, %233, %cst_92 [2] : vector<2x16x16xf32> to vector<2x16xf32>
    %235 = vector.shape_cast %234 : vector<2x16xf32> to vector<2x16x1xf32>
    %236 = tpu.reciprocal %235 {approx = true} : vector<2x16x1xf32> -> vector<2x16x1xf32>
    %237 = vector.broadcast %236 : vector<2x16x1xf32> to vector<2x16x16xf32>
    %238 = arith.mulf %233, %237 : vector<2x16x16xf32>
    "tpu.trace_start"() <{level = 10 : i32, message = "bnm,bmd->bnd"}> : () -> ()
    %cst_93 = arith.constant dense<0.000000e+00> : vector<2x16x8xf32>
    %239 = tpu.matmul %238, %224, %cst_93 {dimension_numbers = #tpu.dot_dimension_numbers<[2], [1], [1], [2], [0, 0, 0, 1, 1, 2], [0], [0]>} : vector<2x16x16xf32>, vector<2x16x8xf32>, vector<2x16x8xf32> -> vector<2x16x8xf32>
    "tpu.trace_stop"() : () -> ()
    %240 = vector.shape_cast %239 : vector<2x16x8xf32> to vector<32x8xf32>
    %241 = vector.extract_strided_slice %198 {offsets = [0, 0], sizes = [8, 32], strides = [1, 1]} : vector<32x32xf32> to vector<8x32xf32>
    %cst_94 = arith.constant dense<0.000000e+00> : vector<32x32xf32>
    %242 = tpu.matmul %240, %241, %cst_94 {dimension_numbers = #tpu.dot_dimension_numbers<[1], [0], [0], [1], [0, 0, 1, 1], [], []>} : vector<32x8xf32>, vector<8x32xf32>, vector<32x32xf32> -> vector<32x32xf32>
    %243 = arith.addf %218, %242 : vector<32x32xf32>
    %244 = vector.extract_strided_slice %217 {offsets = [0, 8], sizes = [32, 8], strides = [1, 1]} : vector<32x96xf32> to vector<32x8xf32>
    %245 = vector.shape_cast %244 : vector<32x8xf32> to vector<2x16x8xf32>
    %246 = vector.extract_strided_slice %217 {offsets = [0, 40], sizes = [32, 8], strides = [1, 1]} : vector<32x96xf32> to vector<32x8xf32>
    %247 = vector.shape_cast %246 : vector<32x8xf32> to vector<2x16x8xf32>
    %248 = vector.extract_strided_slice %217 {offsets = [0, 72], sizes = [32, 8], strides = [1, 1]} : vector<32x96xf32> to vector<32x8xf32>
    %249 = vector.shape_cast %248 : vector<32x8xf32> to vector<2x16x8xf32>
    "tpu.trace_start"() <{level = 10 : i32, message = "bnd,bmd->bnm"}> : () -> ()
    %cst_95 = arith.constant dense<0.000000e+00> : vector<2x16x16xf32>
    %250 = tpu.matmul %245, %247, %cst_95 {dimension_numbers = #tpu.dot_dimension_numbers<[2], [2], [1], [1], [0, 0, 0, 1, 1, 1], [0], [0]>} : vector<2x16x8xf32>, vector<2x16x8xf32>, vector<2x16x16xf32> -> vector<2x16x16xf32>
    "tpu.trace_stop"() : () -> ()
    %cst_96 = arith.constant 0.353553385 : f32
    %251 = vector.broadcast %cst_96 : f32 to vector<2x16x16xf32>
    %252 = arith.mulf %250, %251 : vector<2x16x16xf32>
    %253 = arith.addf %252, %7 : vector<2x16x16xf32>
    %cst_97 = arith.constant dense<0xFF800000> : vector<2x16xf32>
    %254 = vector.multi_reduction <maximumf>, %253, %cst_97 [2] : vector<2x16x16xf32> to vector<2x16xf32>
    %255 = vector.shape_cast %254 : vector<2x16xf32> to vector<2x16x1xf32>
    %256 = vector.broadcast %255 : vector<2x16x1xf32> to vector<2x16x16xf32>
    %257 = arith.subf %253, %256 : vector<2x16x16xf32>
    %258 = math.exp %257 : vector<2x16x16xf32>
    %cst_98 = arith.constant dense<0.000000e+00> : vector<2x16xf32>
    %259 = vector.multi_reduction <add>, %258, %cst_98 [2] : vector<2x16x16xf32> to vector<2x16xf32>
    %260 = vector.shape_cast %259 : vector<2x16xf32> to vector<2x16x1xf32>
    %261 = tpu.reciprocal %260 {approx = true} : vector<2x16x1xf32> -> vector<2x16x1xf32>
    %262 = vector.broadcast %261 : vector<2x16x1xf32> to vector<2x16x16xf32>
    %263 = arith.mulf %258, %262 : vector<2x16x16xf32>
    "tpu.trace_start"() <{level = 10 : i32, message = "bnm,bmd->bnd"}> : () -> ()
    %cst_99 = arith.constant dense<0.000000e+00> : vector<2x16x8xf32>
    %264 = tpu.matmul %263, %249, %cst_99 {dimension_numbers = #tpu.dot_dimension_numbers<[2], [1], [1], [2], [0, 0, 0, 1, 1, 2], [0], [0]>} : vector<2x16x16xf32>, vector<2x16x8xf32>, vector<2x16x8xf32> -> vector<2x16x8xf32>
    "tpu.trace_stop"() : () -> ()
    %265 = vector.shape_cast %264 : vector<2x16x8xf32> to vector<32x8xf32>
    %266 = vector.extract_strided_slice %198 {offsets = [8, 0], sizes = [8, 32], strides = [1, 1]} : vector<32x32xf32> to vector<8x32xf32>
    %cst_100 = arith.constant dense<0.000000e+00> : vector<32x32xf32>
    %267 = tpu.matmul %265, %266, %cst_100 {dimension_numbers = #tpu.dot_dimension_numbers<[1], [0], [0], [1], [0, 0, 1, 1], [], []>} : vector<32x8xf32>, vector<8x32xf32>, vector<32x32xf32> -> vector<32x32xf32>
    %268 = arith.addf %243, %267 : vector<32x32xf32>
    %269 = vector.extract_strided_slice %217 {offsets = [0, 16], sizes = [32, 8], strides = [1, 1]} : vector<32x96xf32> to vector<32x8xf32>
    %270 = vector.shape_cast %269 : vector<32x8xf32> to vector<2x16x8xf32>
    %271 = vector.extract_strided_slice %217 {offsets = [0, 48], sizes = [32, 8], strides = [1, 1]} : vector<32x96xf32> to vector<32x8xf32>
    %272 = vector.shape_cast %271 : vector<32x8xf32> to vector<2x16x8xf32>
    %273 = vector.extract_strided_slice %217 {offsets = [0, 80], sizes = [32, 8], strides = [1, 1]} : vector<32x96xf32> to vector<32x8xf32>
    %274 = vector.shape_cast %273 : vector<32x8xf32> to vector<2x16x8xf32>
    "tpu.trace_start"() <{level = 10 : i32, message = "bnd,bmd->bnm"}> : () -> ()
    %cst_101 = arith.constant dense<0.000000e+00> : vector<2x16x16xf32>
    %275 = tpu.matmul %270, %272, %cst_101 {dimension_numbers = #tpu.dot_dimension_numbers<[2], [2], [1], [1], [0, 0, 0, 1, 1, 1], [0], [0]>} : vector<2x16x8xf32>, vector<2x16x8xf32>, vector<2x16x16xf32> -> vector<2x16x16xf32>
    "tpu.trace_stop"() : () -> ()
    %cst_102 = arith.constant 0.353553385 : f32
    %276 = vector.broadcast %cst_102 : f32 to vector<2x16x16xf32>
    %277 = arith.mulf %275, %276 : vector<2x16x16xf32>
    %278 = arith.addf %277, %7 : vector<2x16x16xf32>
    %cst_103 = arith.constant dense<0xFF800000> : vector<2x16xf32>
    %279 = vector.multi_reduction <maximumf>, %278, %cst_103 [2] : vector<2x16x16xf32> to vector<2x16xf32>
    %280 = vector.shape_cast %279 : vector<2x16xf32> to vector<2x16x1xf32>
    %281 = vector.broadcast %280 : vector<2x16x1xf32> to vector<2x16x16xf32>
    %282 = arith.subf %278, %281 : vector<2x16x16xf32>
    %283 = math.exp %282 : vector<2x16x16xf32>
    %cst_104 = arith.constant dense<0.000000e+00> : vector<2x16xf32>
    %284 = vector.multi_reduction <add>, %283, %cst_104 [2] : vector<2x16x16xf32> to vector<2x16xf32>
    %285 = vector.shape_cast %284 : vector<2x16xf32> to vector<2x16x1xf32>
    %286 = tpu.reciprocal %285 {approx = true} : vector<2x16x1xf32> -> vector<2x16x1xf32>
    %287 = vector.broadcast %286 : vector<2x16x1xf32> to vector<2x16x16xf32>
    %288 = arith.mulf %283, %287 : vector<2x16x16xf32>
    "tpu.trace_start"() <{level = 10 : i32, message = "bnm,bmd->bnd"}> : () -> ()
    %cst_105 = arith.constant dense<0.000000e+00> : vector<2x16x8xf32>
    %289 = tpu.matmul %288, %274, %cst_105 {dimension_numbers = #tpu.dot_dimension_numbers<[2], [1], [1], [2], [0, 0, 0, 1, 1, 2], [0], [0]>} : vector<2x16x16xf32>, vector<2x16x8xf32>, vector<2x16x8xf32> -> vector<2x16x8xf32>
    "tpu.trace_stop"() : () -> ()
    %290 = vector.shape_cast %289 : vector<2x16x8xf32> to vector<32x8xf32>
    %291 = vector.extract_strided_slice %198 {offsets = [16, 0], sizes = [8, 32], strides = [1, 1]} : vector<32x32xf32> to vector<8x32xf32>
    %cst_106 = arith.constant dense<0.000000e+00> : vector<32x32xf32>
    %292 = tpu.matmul %290, %291, %cst_106 {dimension_numbers = #tpu.dot_dimension_numbers<[1], [0], [0], [1], [0, 0, 1, 1], [], []>} : vector<32x8xf32>, vector<8x32xf32>, vector<32x32xf32> -> vector<32x32xf32>
    %293 = arith.addf %268, %292 : vector<32x32xf32>
    %294 = vector.extract_strided_slice %217 {offsets = [0, 24], sizes = [32, 8], strides = [1, 1]} : vector<32x96xf32> to vector<32x8xf32>
    %295 = vector.shape_cast %294 : vector<32x8xf32> to vector<2x16x8xf32>
    %296 = vector.extract_strided_slice %217 {offsets = [0, 56], sizes = [32, 8], strides = [1, 1]} : vector<32x96xf32> to vector<32x8xf32>
    %297 = vector.shape_cast %296 : vector<32x8xf32> to vector<2x16x8xf32>
    %298 = vector.extract_strided_slice %217 {offsets = [0, 88], sizes = [32, 8], strides = [1, 1]} : vector<32x96xf32> to vector<32x8xf32>
    %299 = vector.shape_cast %298 : vector<32x8xf32> to vector<2x16x8xf32>
    "tpu.trace_start"() <{level = 10 : i32, message = "bnd,bmd->bnm"}> : () -> ()
    %cst_107 = arith.constant dense<0.000000e+00> : vector<2x16x16xf32>
    %300 = tpu.matmul %295, %297, %cst_107 {dimension_numbers = #tpu.dot_dimension_numbers<[2], [2], [1], [1], [0, 0, 0, 1, 1, 1], [0], [0]>} : vector<2x16x8xf32>, vector<2x16x8xf32>, vector<2x16x16xf32> -> vector<2x16x16xf32>
    "tpu.trace_stop"() : () -> ()
    %cst_108 = arith.constant 0.353553385 : f32
    %301 = vector.broadcast %cst_108 : f32 to vector<2x16x16xf32>
    %302 = arith.mulf %300, %301 : vector<2x16x16xf32>
    %303 = arith.addf %302, %7 : vector<2x16x16xf32>
    %cst_109 = arith.constant dense<0xFF800000> : vector<2x16xf32>
    %304 = vector.multi_reduction <maximumf>, %303, %cst_109 [2] : vector<2x16x16xf32> to vector<2x16xf32>
    %305 = vector.shape_cast %304 : vector<2x16xf32> to vector<2x16x1xf32>
    %306 = vector.broadcast %305 : vector<2x16x1xf32> to vector<2x16x16xf32>
    %307 = arith.subf %303, %306 : vector<2x16x16xf32>
    %308 = math.exp %307 : vector<2x16x16xf32>
    %cst_110 = arith.constant dense<0.000000e+00> : vector<2x16xf32>
    %309 = vector.multi_reduction <add>, %308, %cst_110 [2] : vector<2x16x16xf32> to vector<2x16xf32>
    %310 = vector.shape_cast %309 : vector<2x16xf32> to vector<2x16x1xf32>
    %311 = tpu.reciprocal %310 {approx = true} : vector<2x16x1xf32> -> vector<2x16x1xf32>
    %312 = vector.broadcast %311 : vector<2x16x1xf32> to vector<2x16x16xf32>
    %313 = arith.mulf %308, %312 : vector<2x16x16xf32>
    "tpu.trace_start"() <{level = 10 : i32, message = "bnm,bmd->bnd"}> : () -> ()
    %cst_111 = arith.constant dense<0.000000e+00> : vector<2x16x8xf32>
    %314 = tpu.matmul %313, %299, %cst_111 {dimension_numbers = #tpu.dot_dimension_numbers<[2], [1], [1], [2], [0, 0, 0, 1, 1, 2], [0], [0]>} : vector<2x16x16xf32>, vector<2x16x8xf32>, vector<2x16x8xf32> -> vector<2x16x8xf32>
    "tpu.trace_stop"() : () -> ()
    %315 = vector.shape_cast %314 : vector<2x16x8xf32> to vector<32x8xf32>
    %316 = vector.extract_strided_slice %198 {offsets = [24, 0], sizes = [8, 32], strides = [1, 1]} : vector<32x32xf32> to vector<8x32xf32>
    %cst_112 = arith.constant dense<0.000000e+00> : vector<32x32xf32>
    %317 = tpu.matmul %315, %316, %cst_112 {dimension_numbers = #tpu.dot_dimension_numbers<[1], [0], [0], [1], [0, 0, 1, 1], [], []>} : vector<32x8xf32>, vector<8x32xf32>, vector<32x32xf32> -> vector<32x32xf32>
    %318 = arith.addf %293, %317 : vector<32x32xf32>
    %319 = vector.broadcast %208 : vector<1x32xf32> to vector<32x32xf32>
    %320 = arith.addf %318, %319 : vector<32x32xf32>
    %321 = arith.addf %320, %190 : vector<32x32xf32>
    %cst_113 = arith.constant dense<0.000000e+00> : vector<32xf32>
    %322 = vector.multi_reduction <add>, %321, %cst_113 [1] : vector<32x32xf32> to vector<32xf32>
    %323 = vector.shape_cast %322 : vector<32xf32> to vector<32x1xf32>
    %cst_114 = arith.constant 3.200000e+01 : f32
    %324 = vector.broadcast %cst_114 : f32 to vector<32x1xf32>
    %325 = arith.divf %323, %324 : vector<32x1xf32>
    %326 = vector.broadcast %325 : vector<32x1xf32> to vector<32x32xf32>
    %327 = arith.subf %321, %326 : vector<32x32xf32>
    %328 = arith.mulf %327, %327 : vector<32x32xf32>
    %cst_115 = arith.constant dense<0.000000e+00> : vector<32xf32>
    %329 = vector.multi_reduction <add>, %328, %cst_115 [1] : vector<32x32xf32> to vector<32xf32>
    %330 = vector.shape_cast %329 : vector<32xf32> to vector<32x1xf32>
    %cst_116 = arith.constant 3.200000e+01 : f32
    %331 = vector.broadcast %cst_116 : f32 to vector<32x1xf32>
    %332 = arith.divf %330, %331 : vector<32x1xf32>
    %333 = vector.broadcast %325 : vector<32x1xf32> to vector<32x32xf32>
    %334 = arith.subf %321, %333 : vector<32x32xf32>
    %cst_117 = arith.constant 9.99999974E-6 : f32
    %335 = vector.broadcast %cst_117 : f32 to vector<32x1xf32>
    %336 = arith.addf %332, %335 : vector<32x1xf32>
    %337 = math.rsqrt %336 : vector<32x1xf32>
    %338 = vector.broadcast %337 : vector<32x1xf32> to vector<32x32xf32>
    %339 = arith.mulf %334, %338 : vector<32x32xf32>
    %340 = vector.broadcast %211 : vector<1x32xf32> to vector<32x32xf32>
    %341 = arith.mulf %339, %340 : vector<32x32xf32>
    %342 = vector.broadcast %212 : vector<1x32xf32> to vector<32x32xf32>
    %343 = arith.addf %341, %342 : vector<32x32xf32>
    %cst_118 = arith.constant dense<0.000000e+00> : vector<32x128xf32>
    %344 = tpu.matmul %343, %200, %cst_118 {dimension_numbers = #tpu.dot_dimension_numbers<[1], [0], [0], [1], [0, 0, 1, 1], [], []>} : vector<32x32xf32>, vector<32x128xf32>, vector<32x128xf32> -> vector<32x128xf32>
    %345 = vector.broadcast %209 : vector<1x128xf32> to vector<32x128xf32>
    %346 = arith.addf %344, %345 : vector<32x128xf32>
    %cst_119 = arith.constant 0.000000e+00 : f32
    %347 = vector.broadcast %cst_119 : f32 to vector<32x128xf32>
    %348 = arith.maximumf %346, %347 : vector<32x128xf32>
    %cst_120 = arith.constant dense<0.000000e+00> : vector<32x32xf32>
    %349 = tpu.matmul %348, %202, %cst_120 {dimension_numbers = #tpu.dot_dimension_numbers<[1], [0], [0], [1], [0, 0, 1, 1], [], []>} : vector<32x128xf32>, vector<128x32xf32>, vector<32x32xf32> -> vector<32x32xf32>
    %350 = vector.broadcast %210 : vector<1x32xf32> to vector<32x32xf32>
    %351 = arith.addf %349, %350 : vector<32x32xf32>
    %352 = arith.addf %351, %343 : vector<32x32xf32>
    %cst_121 = arith.constant dense<0.000000e+00> : vector<32xf32>
    %353 = vector.multi_reduction <add>, %352, %cst_121 [1] : vector<32x32xf32> to vector<32xf32>
    %354 = vector.shape_cast %353 : vector<32xf32> to vector<32x1xf32>
    %cst_122 = arith.constant 3.200000e+01 : f32
    %355 = vector.broadcast %cst_122 : f32 to vector<32x1xf32>
    %356 = arith.divf %354, %355 : vector<32x1xf32>
    %357 = vector.broadcast %356 : vector<32x1xf32> to vector<32x32xf32>
    %358 = arith.subf %352, %357 : vector<32x32xf32>
    %359 = arith.mulf %358, %358 : vector<32x32xf32>
    %cst_123 = arith.constant dense<0.000000e+00> : vector<32xf32>
    %360 = vector.multi_reduction <add>, %359, %cst_123 [1] : vector<32x32xf32> to vector<32xf32>
    %361 = vector.shape_cast %360 : vector<32xf32> to vector<32x1xf32>
    %cst_124 = arith.constant 3.200000e+01 : f32
    %362 = vector.broadcast %cst_124 : f32 to vector<32x1xf32>
    %363 = arith.divf %361, %362 : vector<32x1xf32>
    %364 = vector.broadcast %356 : vector<32x1xf32> to vector<32x32xf32>
    %365 = arith.subf %352, %364 : vector<32x32xf32>
    %cst_125 = arith.constant 9.99999974E-6 : f32
    %366 = vector.broadcast %cst_125 : f32 to vector<32x1xf32>
    %367 = arith.addf %363, %366 : vector<32x1xf32>
    %368 = math.rsqrt %367 : vector<32x1xf32>
    %369 = vector.broadcast %368 : vector<32x1xf32> to vector<32x32xf32>
    %370 = arith.mulf %365, %369 : vector<32x32xf32>
    %371 = vector.broadcast %213 : vector<1x32xf32> to vector<32x32xf32>
    %372 = arith.mulf %370, %371 : vector<32x32xf32>
    %373 = vector.broadcast %214 : vector<1x32xf32> to vector<32x32xf32>
    %374 = arith.addf %372, %373 : vector<32x32xf32>
    %c0_126 = arith.constant 0 : index
    %c1_127 = arith.constant 1 : index
    %375 = memref.load %arg1[%c0_126, %c1_127] : memref<1x2xf32, #tpu.memory_space<smem>>
    %376 = vector.broadcast %375 : f32 to vector<32x32xf32>
    %377 = arith.mulf %376, %374 : vector<32x32xf32>
    %378 = arith.addf %194, %377 : vector<32x32xf32>
    %379 = vector.shape_cast %378 : vector<32x32xf32> to vector<2x16x32xf32>
    %c0_128 = arith.constant 0 : index
    %c0_129 = arith.constant 0 : index
    %c0_130 = arith.constant 0 : index
    %380 = vector.load %arg11[%c0_128, %c0_129, %c0_130] : memref<2x16x32xf32, #tpu.memory_space<vmem>>, vector<2x16x32xf32>
    tpu.vector_store %arg11[%c0_128, %c0_129, %c0_130], %379 {strides = array<i32>} : memref<2x16x32xf32, #tpu.memory_space<vmem>>, vector<2x16x32xf32>,
    return
  }
  func.func @transform_0(%arg0: i32) -> (i32, i32) {
    %c0_i32 = arith.constant 0 : i32
    %c0_i32_0 = arith.constant 0 : i32
    %c0_i32_1 = arith.constant 0 : i32
    return %c0_i32, %c0_i32_0 : i32, i32
  }
  func.func @transform_1(%arg0: i32) -> (i32, i32, i32) {
    %c0_i32 = arith.constant 0 : i32
    %c0_i32_0 = arith.constant 0 : i32
    %c0_i32_1 = arith.constant 0 : i32
    %c0_i32_2 = arith.constant 0 : i32
    return %c0_i32, %c0_i32_0, %c0_i32_1 : i32, i32, i32
  }
  func.func @transform_2(%arg0: i32) -> (i32, i32, i32) {
    %c0_i32 = arith.constant 0 : i32
    %c0_i32_0 = arith.constant 0 : i32
    %c0_i32_1 = arith.constant 0 : i32
    %c0_i32_2 = arith.constant 0 : i32
    return %c0_i32, %c0_i32_0, %c0_i32_1 : i32, i32, i32
  }
  func.func @transform_3(%arg0: i32) -> (i32, i32, i32) {
    %c0_i32 = arith.constant 0 : i32
    %c0_i32_0 = arith.constant 0 : i32
    %c0_i32_1 = arith.constant 0 : i32
    %c0_i32_2 = arith.constant 0 : i32
    return %c0_i32, %c0_i32_0, %c0_i32_1 : i32, i32, i32
  }
  func.func @transform_4(%arg0: i32) -> (i32, i32, i32) {
    %c0_i32 = arith.constant 0 : i32
    %c0_i32_0 = arith.constant 0 : i32
    %c0_i32_1 = arith.constant 0 : i32
    %c0_i32_2 = arith.constant 0 : i32
    return %c0_i32, %c0_i32_0, %c0_i32_1 : i32, i32, i32
  }
  func.func @transform_5(%arg0: i32) -> (i32, i32, i32) {
    %c0_i32 = arith.constant 0 : i32
    %c0_i32_0 = arith.constant 0 : i32
    %c0_i32_1 = arith.constant 0 : i32
    %c0_i32_2 = arith.constant 0 : i32
    return %c0_i32, %c0_i32_0, %c0_i32_1 : i32, i32, i32
  }
  func.func @transform_6(%arg0: i32) -> (i32, i32, i32) {
    %c0_i32 = arith.constant 0 : i32
    %c0_i32_0 = arith.constant 0 : i32
    %c0_i32_1 = arith.constant 0 : i32
    %c0_i32_2 = arith.constant 0 : i32
    return %c0_i32, %c0_i32_0, %c0_i32_1 : i32, i32, i32
  }
  func.func @transform_7(%arg0: i32) -> (i32, i32, i32) {
    %c0_i32 = arith.constant 0 : i32
    %c0_i32_0 = arith.constant 0 : i32
    %c0_i32_1 = arith.constant 0 : i32
    %c0_i32_2 = arith.constant 0 : i32
    return %c0_i32, %c0_i32_0, %c0_i32_1 : i32, i32, i32
  }
  func.func @transform_8(%arg0: i32) -> (i32, i32, i32) {
    %c0_i32 = arith.constant 0 : i32
    %c0_i32_0 = arith.constant 0 : i32
    %c0_i32_1 = arith.constant 0 : i32
    %c0_i32_2 = arith.constant 0 : i32
    return %c0_i32, %c0_i32_0, %c0_i32_1 : i32, i32, i32
  }
  func.func @transform_9(%arg0: i32) -> (i32, i32, i32) {
    %c0_i32 = arith.constant 0 : i32
    %c0_i32_0 = arith.constant 0 : i32
    %c0_i32_1 = arith.constant 0 : i32
    %c0_i32_2 = arith.constant 0 : i32
    return %c0_i32, %c0_i32_0, %c0_i32_1 : i32, i32, i32
  }
  func.func @transform_10(%arg0: i32) -> (i32, i32, i32) {
    %c0_i32 = arith.constant 0 : i32
    %c0_i32_0 = arith.constant 0 : i32
    %c0_i32_1 = arith.constant 0 : i32
    %c0_i32_2 = arith.constant 0 : i32
    return %c0_i32, %c0_i32_0, %c0_i32_1 : i32, i32, i32
  }
}

</mosaic_0001>

<llo_original>
// kernel: tpu_custom_call.1
$region0: #{tpu_custom_call.1}
  #allocation0 [shape = 'u32[]', space=smem, size = 0x4, offset = 0x4, fixed_abs, tag = 'smem constant byte address 0x4 - core index']
  #allocation1 [shape = 'u32[144,128]{1,0:T(1,128)}', space=vmem, size = 0x12000, scoped, tag = 'internal scratch']
  %s0 = inlined_call_operand.vmem [shape: f32[1,2], index: 0, kind: input, shape index: {}]
  %s1 = inlined_call_operand.vmem [shape: f32[2,16,16], index: 1, kind: input, shape index: {}]
  %s2 = inlined_call_operand.vmem [shape: f32[2,16,16], index: 2, kind: input, shape index: {}]
  %s3 = inlined_call_operand.vmem [shape: f32[2,16,32], index: 3, kind: input, shape index: {}]
  %s4 = inlined_call_operand.vmem [shape: f32[2,32,96], index: 4, kind: input, shape index: {}]
  %s5 = inlined_call_operand.vmem [shape: f32[2,32,32], index: 5, kind: input, shape index: {}]
  %s6 = inlined_call_operand.vmem [shape: f32[2,32,128], index: 6, kind: input, shape index: {}]
  %s7 = inlined_call_operand.vmem [shape: f32[2,128,32], index: 7, kind: input, shape index: {}]
  %s8 = inlined_call_operand.vmem [shape: f32[2,2,128], index: 8, kind: input, shape index: {}]
  %s9 = inlined_call_operand.vmem [shape: f32[2,5,32], index: 9, kind: input, shape index: {}]
  %s10 = inlined_call_operand.hbm [shape: f32[2,16,32], index: 10, kind: output, shape index: {}]
  %s11 = sld [smem:[#allocation0]]
  $region54: #{tpu_custom_call.1} parent=0
    _
  %s13 = ssub.s32 1, %s11
  %s14 = scalar_select 0, %s13, %s11
  $region1: #{tpu_custom_call.1} parent=0
    #allocation2 [shape = 'u8[512]{0}', space=smem, size = 0x200, scoped, tag = 'input window, operand 0, single buffered']
    #allocation3 [shape = 's32[1]{0}', space=sflag, size = 0x4, scoped, tag = 'scoped memory for tpu_custom_call.1']
    #allocation4 [shape = 's32[1]{0}', space=sflag, size = 0x4, scoped, tag = 'scoped memory for tpu_custom_call.1']
    #allocation5 [shape = 'u8[16384]{0}', space=vmem, size = 0x4000, scoped, tag = 'output window, operand 0, single buffered']
    %15 = vsyncpa [#allocation4], 0
    %16 = vsyncpa [#allocation3], 0
    // Predicated region
    $region2: #{tpu_custom_call.1} parent=1 // pred_check
      _
    $region3: #{tpu_custom_call.1} parent=1 // pred_check_branch
      %18 = sbr.rel (0) target = $region5
    $region4: #{tpu_custom_call.1} parent=1 // pred_region
      %s20 = ssub.s32 16, 16
      %21 = vsyncadd [#allocation4], %s20
      %s23 = sshll.u32 %s0, 4
      %s24 = int_to_ptr.vmem [resolvable:$true] %s23
      %26 = dma.vmem_to_smem %s24, 16, [#allocation2], [#allocation4]
    $region5: #{tpu_custom_call.1} parent=1 // pred_fallthru
      _
    // Predicated region
    $region6: #{tpu_custom_call.1} parent=1 // pred_check
      _
    $region7: #{tpu_custom_call.1} parent=1 // pred_check_branch
      %28 = sbr.rel (0) target = $region9
    $region8: #{tpu_custom_call.1} parent=1 // pred_region
      _
    $region9: #{tpu_custom_call.1} parent=1 // pred_fallthru
      _
    // Predicated region
    $region10: #{tpu_custom_call.1} parent=1 // pred_check
      _
    $region11: #{tpu_custom_call.1} parent=1 // pred_check_branch
      %30 = sbr.rel (0) target = $region13
    $region12: #{tpu_custom_call.1} parent=1 // pred_region
      _
    $region13: #{tpu_custom_call.1} parent=1 // pred_fallthru
      _
    // Predicated region
    $region14: #{tpu_custom_call.1} parent=1 // pred_check
      _
    $region15: #{tpu_custom_call.1} parent=1 // pred_check_branch
      %32 = sbr.rel (0) target = $region17
    $region16: #{tpu_custom_call.1} parent=1 // pred_region
      _
    $region17: #{tpu_custom_call.1} parent=1 // pred_fallthru
      _
    // Predicated region
    $region18: #{tpu_custom_call.1} parent=1 // pred_check
      _
    $region19: #{tpu_custom_call.1} parent=1 // pred_check_branch
      %34 = sbr.rel (0) target = $region21
    $region20: #{tpu_custom_call.1} parent=1 // pred_region
      _
    $region21: #{tpu_custom_call.1} parent=1 // pred_fallthru
      _
    // Predicated region
    $region22: #{tpu_custom_call.1} parent=1 // pred_check
      _
    $region23: #{tpu_custom_call.1} parent=1 // pred_check_branch
      %36 = sbr.rel (0) target = $region25
    $region24: #{tpu_custom_call.1} parent=1 // pred_region
      _
    $region25: #{tpu_custom_call.1} parent=1 // pred_fallthru
      _
    // Predicated region
    $region26: #{tpu_custom_call.1} parent=1 // pred_check
      _
    $region27: #{tpu_custom_call.1} parent=1 // pred_check_branch
      %38 = sbr.rel (0) target = $region29
    $region28: #{tpu_custom_call.1} parent=1 // pred_region
      _
    $region29: #{tpu_custom_call.1} parent=1 // pred_fallthru
      _
    // Predicated region
    $region30: #{tpu_custom_call.1} parent=1 // pred_check
      _
    $region31: #{tpu_custom_call.1} parent=1 // pred_check_branch
      %40 = sbr.rel (0) target = $region33
    $region32: #{tpu_custom_call.1} parent=1 // pred_region
      _
    $region33: #{tpu_custom_call.1} parent=1 // pred_fallthru
      _
    // Predicated region
    $region34: #{tpu_custom_call.1} parent=1 // pred_check
      _
    $region35: #{tpu_custom_call.1} parent=1 // pred_check_branch
      %42 = sbr.rel (0) target = $region37
    $region36: #{tpu_custom_call.1} parent=1 // pred_region
      _
    $region37: #{tpu_custom_call.1} parent=1 // pred_fallthru
      _
    // Predicated region
    $region38: #{tpu_custom_call.1} parent=1 // pred_check
      _
    $region39: #{tpu_custom_call.1} parent=1 // pred_check_branch
      %44 = sbr.rel (0) target = $region41
    $region40: #{tpu_custom_call.1} parent=1 // pred_region
      _
    $region41: #{tpu_custom_call.1} parent=1 // pred_fallthru
      _
    // Predicated region
    $region42: #{tpu_custom_call.1} parent=1 // pred_check
      _
    $region43: #{tpu_custom_call.1} parent=1 // pred_check_branch
      %46 = sbr.rel (0) target = $region45
    $region44: #{tpu_custom_call.1} parent=1 // pred_region
      %47 = dma.done [#allocation4], 16
    $region45: #{tpu_custom_call.1} parent=1 // pred_fallthru
      _
    %48 = sfence
    %v49 = vld [vmem:[%s1] sm:$0xff]
    %v50 = vld [vmem:[%s1 + $0x8] sm:$0xff]
    %v51 = vld [vmem:[%s1 + $0x10] sm:$0xff]
    %v52 = vld [vmem:[%s1 + $0x18] sm:$0xff]
    %v53 = vld [vmem:[%s2] sm:$0xff]
    %v54 = vld [vmem:[%s2 + $0x8] sm:$0xff]
    %v55 = vld [vmem:[%s2 + $0x10] sm:$0xff]
    %v56 = vld [vmem:[%s2 + $0x18] sm:$0xff]
    %vm57 = vcmp.gt.f32.partialorder %v49, 0.0
    %vm58 = vcmp.gt.f32.partialorder %v50, 0.0
    %vm59 = vcmp.gt.f32.partialorder %v51, 0.0
    %vm60 = vcmp.gt.f32.partialorder %v52, 0.0
    %v61 = vsel %vm57, 0.0, -1e+09
    %v62 = vsel %vm58, 0.0, -1e+09
    %v63 = vsel %vm59, 0.0, -1e+09
    %v64 = vsel %vm60, 0.0, -1e+09
    %v65 = vadd.f32 %v61, %v53
    %v66 = vadd.f32 %v62, %v54
    %v67 = vadd.f32 %v63, %v55
    %v68 = vadd.f32 %v64, %v56
    %v69 = vld [vmem:[%s3] sm:$0xff]
    %v70 = vld [vmem:[%s3 + $0x8] sm:$0xff]
    %v71 = vld [vmem:[%s3 + $0x10] sm:$0xff]
    %v72 = vld [vmem:[%s3 + $0x18] sm:$0xff]
    %v73 = vld [vmem:[%s4] sm:$0xff]
    %v74 = vld [vmem:[%s4 + $0x8] sm:$0xff]
    %v75 = vld [vmem:[%s4 + $0x10] sm:$0xff]
    %v76 = vld [vmem:[%s4 + $0x18] sm:$0xff]
    %v77 = vld [vmem:[%s5] sm:$0xff]
    %v78 = vld [vmem:[%s5 + $0x8] sm:$0xff]
    %v79 = vld [vmem:[%s5 + $0x10] sm:$0xff]
    %v80 = vld [vmem:[%s5 + $0x18] sm:$0xff]
    %v81 = vld [vmem:[%s6] sm:$0xff]
    %v82 = vld [vmem:[%s6 + $0x8] sm:$0xff]
    %v83 = vld [vmem:[%s6 + $0x10] sm:$0xff]
    %v84 = vld [vmem:[%s6 + $0x18] sm:$0xff]
    %v85 = vld [vmem:[%s7] sm:$0xff]
    %v86 = vld [vmem:[%s7 + $0x8] sm:$0xff]
    %v87 = vld [vmem:[%s7 + $0x10] sm:$0xff]
    %v88 = vld [vmem:[%s7 + $0x18] sm:$0xff]
    %v89 = vld [vmem:[%s7 + $0x20] sm:$0xff]
    %v90 = vld [vmem:[%s7 + $0x28] sm:$0xff]
    %v91 = vld [vmem:[%s7 + $0x30] sm:$0xff]
    %v92 = vld [vmem:[%s7 + $0x38] sm:$0xff]
    %v93 = vld [vmem:[%s7 + $0x40] sm:$0xff]
    %v94 = vld [vmem:[%s7 + $0x48] sm:$0xff]
    %v95 = vld [vmem:[%s7 + $0x50] sm:$0xff]
    %v96 = vld [vmem:[%s7 + $0x58] sm:$0xff]
    %v97 = vld [vmem:[%s7 + $0x60] sm:$0xff]
    %v98 = vld [vmem:[%s7 + $0x68] sm:$0xff]
    %v99 = vld [vmem:[%s7 + $0x70] sm:$0xff]
    %v100 = vld [vmem:[%s7 + $0x78] sm:$0xff]
    %v101 = vld [vmem:[%s8] sm:$0x3]
    %v102 = vld [vmem:[%s9] sm:$0x1f]
    %v103 = vlaneseq
    %v104 = vshrl.u32 %v103, 7
    %v105 = vsub.s32 0, %v104
    %v106 = vrot.slane %v101, %v105
    %vm107 = vcmask 261120
    %v109 = vsel %vm107, %v69, 0
    %v112 = vsel %vm107, %v70, 0
    %v115 = vsel %vm107, %v71, 0
    %v118 = vsel %vm107, %v72, 0
    %120 = vmatprep.subr.mxu0 0.0
    %121 = vmatpush1.msra.mxu0 %v73
    %122 = vmatprep.subr.mxu0 0.0
    %123 = vmatpush1.msra.mxu0 %v74
    %124 = vmatprep.subr.mxu0 0.0
    %125 = vmatpush1.msra.mxu0 %v75
    %126 = vmatprep.subr.mxu0 0.0
    %127 = vmatpush1.msra.mxu0 %v76
    %128 = vmatprep.subr.mxu0 0.0
    %129 = vmatpush1.msra.mxu0 0.0
    %130 = vmatprep.subr.mxu0 0.0
    %131 = vmatpush1.msra.mxu0 0.0
    %132 = vmatprep.subr.mxu0 0.0
    %133 = vmatpush1.msra.mxu0 0.0
    %134 = vmatprep.subr.mxu0 0.0
    %135 = vmatpush1.msra.mxu0 0.0
    %136 = vmatprep.subr.mxu0 0.0
    %137 = vmatpush1.msra.mxu0 0.0
    %138 = vmatprep.subr.mxu0 0.0
    %139 = vmatpush1.msra.mxu0 0.0
    %140 = vmatprep.subr.mxu0 0.0
    %141 = vmatpush1.msra.mxu0 0.0
    %142 = vmatprep.subr.mxu0 0.0
    %143 = vmatpush1.msra.mxu0 0.0
    %144 = vmatprep.subr.mxu0 0.0
    %145 = vmatpush1.msra.mxu0 0.0
    %146 = vmatprep.subr.mxu0 0.0
    %147 = vmatpush1.msra.mxu0 0.0
    %148 = vmatprep.subr.mxu0 0.0
    %149 = vmatpush1.msra.mxu0 0.0
    %150 = vmatprep.subr.mxu0 0.0
    %151 = vmatpush1.msra.mxu0 0.0
    %152 = vmatprep.subr.mxu0 0.0
    %153 = vmatpush1.msra.mxu0 0.0
    %154 = vmatprep.subr.mxu0 0.0
    %155 = vmatpush1.msra.mxu0 0.0
    %156 = vmatprep.subr.mxu0 0.0
    %157 = vmatpush1.msra.mxu0 0.0
    %158 = vmatprep.subr.mxu0 0.0
    %159 = vmatpush1.msra.mxu0 0.0
    %160 = vmatprep.subr.mxu0 0.0
    %161 = vmatpush1.msra.mxu0 0.0
    %162 = vmatprep.subr.mxu0 0.0
    %163 = vmatpush1.msra.mxu0 0.0
    %164 = vmatprep.subr.mxu0 0.0
    %165 = vmatpush1.msra.mxu0 0.0
    %166 = vmatprep.subr.mxu0 0.0
    %167 = vmatpush1.msra.mxu0 0.0
    %168 = vmatprep.subr.mxu0 0.0
    %169 = vmatpush1.msra.mxu0 0.0
    %170 = vmatprep.subr.mxu0 0.0
    %171 = vmatpush1.msra.mxu0 0.0
    %172 = vmatprep.subr.mxu0 0.0
    %173 = vmatpush1.msra.mxu0 0.0
    %174 = vmatprep.subr.mxu0 0.0
    %175 = vmatpush1.msra.mxu0 0.0
    %176 = vmatprep.subr.mxu0 0.0
    %177 = vmatpush1.msra.mxu0 0.0
    %178 = vmatprep.subr.mxu0 0.0
    %179 = vmatpush1.msra.mxu0 0.0
    %180 = vmatprep.subr.mxu0 0.0
    %181 = vmatpush1.msra.mxu0 0.0
    %182 = vmatprep.subr.mxu0 0.0
    %183 = vmatpush1.msra.mxu0 0.0
    %184 = vmatprep.mubr.f32.mxu0 0.0
    %185 = vmatmul.mubr.f32.gmra.mrb[0].mxu0 %v109
    %v186 = vpop.f32.mrb[0].mxu0
    %v187 = vadd.f32 %v106, %v186
    %v188 = vpop.f32.mrb[0].mxu0
    %189 = vmatprep.mubr.f32.mxu0 0.0
    %190 = vmatmul.mubr.f32.gmra.mrb[0].mxu0 %v112
    %v191 = vpop.f32.mrb[0].mxu0
    %v192 = vadd.f32 %v106, %v191
    %v193 = vpop.f32.mrb[0].mxu0
    %194 = vmatprep.mubr.f32.mxu0 0.0
    %195 = vmatmul.mubr.f32.gmra.mrb[0].mxu0 %v115
    %v196 = vpop.f32.mrb[0].mxu0
    %v197 = vadd.f32 %v106, %v196
    %v198 = vpop.f32.mrb[0].mxu0
    %199 = vmatprep.mubr.f32.mxu0 0.0
    %200 = vmatmul.mubr.f32.gmra.mrb[0].mxu0 %v118
    %v201 = vpop.f32.mrb[0].mxu0
    %v202 = vadd.f32 %v106, %v201
    %v203 = vpop.f32.mrb[0].mxu0
    %204 = vdwg.mxu0
    %207 = vrot.lane.b32.xlu0 %v187, 96
    %v208 = vpop.permute.xlu0 %207
    %209 = vrot.lane.b32.xlu0 %v192, 96
    %v210 = vpop.permute.xlu0 %209
    %vm211 = vcmask 64512
    %v212 = vsel %vm211, %v187, 0
    %v214 = vsel %vm211, %v192, 0
    %v216 = vsel %vm211, %v208, 0
    %v218 = vsel %vm211, %v210, 0
    %220 = vmatprep.subr.mxu0 0.0
    %221 = vmatpush1.xpose.msra.mxu0 %v216
    %222 = vmatprep.subr.mxu0 0.0
    %223 = vmatpush1.xpose.msra.mxu0 %v218
    %224 = vmatprep.subr.mxu0 0.0
    %225 = vmatpush1.xpose.msra.mxu0 0.0
    %226 = vmatprep.subr.mxu0 0.0
    %227 = vmatpush1.xpose.msra.mxu0 0.0
    %228 = vmatprep.subr.mxu0 0.0
    %229 = vmatpush1.xpose.msra.mxu0 0.0
    %230 = vmatprep.subr.mxu0 0.0
    %231 = vmatpush1.xpose.msra.mxu0 0.0
    %232 = vmatprep.subr.mxu0 0.0
    %233 = vmatpush1.xpose.msra.mxu0 0.0
    %234 = vmatprep.subr.mxu0 0.0
    %235 = vmatpush1.xpose.msra.mxu0 0.0
    %236 = vmatprep.subr.mxu0 0.0
    %237 = vmatpush1.xpose.msra.mxu0 0.0
    %238 = vmatprep.subr.mxu0 0.0
    %239 = vmatpush1.xpose.msra.mxu0 0.0
    %240 = vmatprep.subr.mxu0 0.0
    %241 = vmatpush1.xpose.msra.mxu0 0.0
    %242 = vmatprep.subr.mxu0 0.0
    %243 = vmatpush1.xpose.msra.mxu0 0.0
    %244 = vmatprep.subr.mxu0 0.0
    %245 = vmatpush1.xpose.msra.mxu0 0.0
    %246 = vmatprep.subr.mxu0 0.0
    %247 = vmatpush1.xpose.msra.mxu0 0.0
    %248 = vmatprep.subr.mxu0 0.0
    %249 = vmatpush1.xpose.msra.mxu0 0.0
    %250 = vmatprep.subr.mxu0 0.0
    %251 = vmatpush1.xpose.msra.mxu0 0.0
    %252 = vmatprep.subr.mxu0 0.0
    %253 = vmatpush1.xpose.msra.mxu0 0.0
    %254 = vmatprep.subr.mxu0 0.0
    %255 = vmatpush1.xpose.msra.mxu0 0.0
    %256 = vmatprep.subr.mxu0 0.0
    %257 = vmatpush1.xpose.msra.mxu0 0.0
    %258 = vmatprep.subr.mxu0 0.0
    %259 = vmatpush1.xpose.msra.mxu0 0.0
    %260 = vmatprep.subr.mxu0 0.0
    %261 = vmatpush1.xpose.msra.mxu0 0.0
    %262 = vmatprep.subr.mxu0 0.0
    %263 = vmatpush1.xpose.msra.mxu0 0.0
    %264 = vmatprep.subr.mxu0 0.0
    %265 = vmatpush1.xpose.msra.mxu0 0.0
    %266 = vmatprep.subr.mxu0 0.0
    %267 = vmatpush1.xpose.msra.mxu0 0.0
    %268 = vmatprep.subr.mxu0 0.0
    %269 = vmatpush1.xpose.msra.mxu0 0.0
    %270 = vmatprep.subr.mxu0 0.0
    %271 = vmatpush1.xpose.msra.mxu0 0.0
    %272 = vmatprep.subr.mxu0 0.0
    %273 = vmatpush1.xpose.msra.mxu0 0.0
    %274 = vmatprep.subr.mxu0 0.0
    %275 = vmatpush1.xpose.msra.mxu0 0.0
    %276 = vmatprep.subr.mxu0 0.0
    %277 = vmatpush1.xpose.msra.mxu0 0.0
    %278 = vmatprep.subr.mxu0 0.0
    %279 = vmatpush1.xpose.msra.mxu0 0.0
    %280 = vmatprep.subr.mxu0 0.0
    %281 = vmatpush1.xpose.msra.mxu0 0.0
    %282 = vmatprep.subr.mxu0 0.0
    %283 = vmatpush1.xpose.msra.mxu0 0.0
    %284 = vmatprep.mubr.f32.mxu0 0.0
    %285 = vmatmul.mubr.f32.gmra.mrb[0].mxu0 %v212
    %v286 = vpop.f32.mrb[0].mxu0
    %v287 = vadd.f32 0.0, %v286
    %v288 = vpop.f32.mrb[0].mxu0
    %289 = vmatprep.mubr.f32.mxu0 0.0
    %290 = vmatmul.mubr.f32.gmra.mrb[0].mxu0 %v214
    %v291 = vpop.f32.mrb[0].mxu0
    %v292 = vadd.f32 0.0, %v291
    %v293 = vpop.f32.mrb[0].mxu0
    %294 = vdwg.mxu0
    %297 = vrot.lane.b32.xlu0 %v197, 96
    %v298 = vpop.permute.xlu0 %297
    %299 = vrot.lane.b32.xlu0 %v202, 96
    %v300 = vpop.permute.xlu0 %299
    %v301 = vsel %vm211, %v197, 0
    %v303 = vsel %vm211, %v202, 0
    %v305 = vsel %vm211, %v298, 0
    %v307 = vsel %vm211, %v300, 0
    %309 = vmatprep.subr.mxu0 0.0
    %310 = vmatpush1.xpose.msra.mxu0 %v305
    %311 = vmatprep.subr.mxu0 0.0
    %312 = vmatpush1.xpose.msra.mxu0 %v307
    %313 = vmatprep.subr.mxu0 0.0
    %314 = vmatpush1.xpose.msra.mxu0 0.0
    %315 = vmatprep.subr.mxu0 0.0
    %316 = vmatpush1.xpose.msra.mxu0 0.0
    %317 = vmatprep.subr.mxu0 0.0
    %318 = vmatpush1.xpose.msra.mxu0 0.0
    %319 = vmatprep.subr.mxu0 0.0
    %320 = vmatpush1.xpose.msra.mxu0 0.0
    %321 = vmatprep.subr.mxu0 0.0
    %322 = vmatpush1.xpose.msra.mxu0 0.0
    %323 = vmatprep.subr.mxu0 0.0
    %324 = vmatpush1.xpose.msra.mxu0 0.0
    %325 = vmatprep.subr.mxu0 0.0
    %326 = vmatpush1.xpose.msra.mxu0 0.0
    %327 = vmatprep.subr.mxu0 0.0
    %328 = vmatpush1.xpose.msra.mxu0 0.0
    %329 = vmatprep.subr.mxu0 0.0
    %330 = vmatpush1.xpose.msra.mxu0 0.0
    %331 = vmatprep.subr.mxu0 0.0
    %332 = vmatpush1.xpose.msra.mxu0 0.0
    %333 = vmatprep.subr.mxu0 0.0
    %334 = vmatpush1.xpose.msra.mxu0 0.0
    %335 = vmatprep.subr.mxu0 0.0
    %336 = vmatpush1.xpose.msra.mxu0 0.0
    %337 = vmatprep.subr.mxu0 0.0
    %338 = vmatpush1.xpose.msra.mxu0 0.0
    %339 = vmatprep.subr.mxu0 0.0
    %340 = vmatpush1.xpose.msra.mxu0 0.0
    %341 = vmatprep.subr.mxu0 0.0
    %342 = vmatpush1.xpose.msra.mxu0 0.0
    %343 = vmatprep.subr.mxu0 0.0
    %344 = vmatpush1.xpose.msra.mxu0 0.0
    %345 = vmatprep.subr.mxu0 0.0
    %346 = vmatpush1.xpose.msra.mxu0 0.0
    %347 = vmatprep.subr.mxu0 0.0
    %348 = vmatpush1.xpose.msra.mxu0 0.0
    %349 = vmatprep.subr.mxu0 0.0
    %350 = vmatpush1.xpose.msra.mxu0 0.0
    %351 = vmatprep.subr.mxu0 0.0
    %352 = vmatpush1.xpose.msra.mxu0 0.0
    %353 = vmatprep.subr.mxu0 0.0
    %354 = vmatpush1.xpose.msra.mxu0 0.0
    %355 = vmatprep.subr.mxu0 0.0
    %356 = vmatpush1.xpose.msra.mxu0 0.0
    %357 = vmatprep.subr.mxu0 0.0
    %358 = vmatpush1.xpose.msra.mxu0 0.0
    %359 = vmatprep.subr.mxu0 0.0
    %360 = vmatpush1.xpose.msra.mxu0 0.0
    %361 = vmatprep.subr.mxu0 0.0
    %362 = vmatpush1.xpose.msra.mxu0 0.0
    %363 = vmatprep.subr.mxu0 0.0
    %364 = vmatpush1.xpose.msra.mxu0 0.0
    %365 = vmatprep.subr.mxu0 0.0
    %366 = vmatpush1.xpose.msra.mxu0 0.0
    %367 = vmatprep.subr.mxu0 0.0
    %368 = vmatpush1.xpose.msra.mxu0 0.0
    %369 = vmatprep.subr.mxu0 0.0
    %370 = vmatpush1.xpose.msra.mxu0 0.0
    %371 = vmatprep.subr.mxu0 0.0
    %372 = vmatpush1.xpose.msra.mxu0 0.0
    %373 = vmatprep.mubr.f32.mxu0 0.0
    %374 = vmatmul.mubr.f32.gmra.mrb[0].mxu0 %v301
    %v375 = vpop.f32.mrb[0].mxu0
    %v376 = vadd.f32 0.0, %v375
    %v377 = vpop.f32.mrb[0].mxu0
    %378 = vmatprep.mubr.f32.mxu0 0.0
    %379 = vmatmul.mubr.f32.gmra.mrb[0].mxu0 %v303
    %v380 = vpop.f32.mrb[0].mxu0
    %v381 = vadd.f32 0.0, %v380
    %v382 = vpop.f32.mrb[0].mxu0
    %383 = vdwg.mxu0
    %v384 = vmul.f32 %v287, 0.35355338
    %v385 = vmul.f32 %v292, 0.35355338
    %v386 = vmul.f32 %v376, 0.35355338
    %v387 = vmul.f32 %v381, 0.35355338
    %v388 = vadd.f32 %v384, %v65
    %v389 = vadd.f32 %v385, %v66
    %v390 = vadd.f32 %v386, %v67
    %v391 = vadd.f32 %v387, %v68
    %vm392 = vcmask 130048
    %v393 = vsel %vm392, %v388, -inf
    %394 = vmax.xlane.f32.xlu0 %v393
    %v395 = vpop.xlane.xlu0 %394
    %v396 = vsel %vm392, %v389, -inf
    %397 = vmax.xlane.f32.xlu0 %v396
    %v398 = vpop.xlane.xlu0 %397
    %v399 = vsel %vm392, %v390, -inf
    %400 = vmax.xlane.f32.xlu0 %v399
    %v401 = vpop.xlane.xlu0 %400
    %v402 = vsel %vm392, %v391, -inf
    %403 = vmax.xlane.f32.xlu0 %v402
    %v404 = vpop.xlane.xlu0 %403
    %v405 = vsub.f32 %v388, %v395
    %v406 = vsub.f32 %v389, %v398
    %v407 = vsub.f32 %v390, %v401
    %v408 = vsub.f32 %v391, %v404
    %v409 = vmul.f32 %v405, 1.442695
    %v410 = vpow.pop %v409
    %v411 = vmul.f32 %v406, 1.442695
    %v412 = vpow.pop %v411
    %v413 = vmul.f32 %v407, 1.442695
    %v414 = vpow.pop %v413
    %v415 = vmul.f32 %v408, 1.442695
    %v416 = vpow.pop %v415
    %v417 = vsel %vm392, %v410, 0.0
    %418 = vadd.xlane.f32.xlu0 %v417
    %v419 = vpop.xlane.xlu0 %418
    %v420 = vsel %vm392, %v412, 0.0
    %421 = vadd.xlane.f32.xlu0 %v420
    %v422 = vpop.xlane.xlu0 %421
    %v423 = vsel %vm392, %v414, 0.0
    %424 = vadd.xlane.f32.xlu0 %v423
    %v425 = vpop.xlane.xlu0 %424
    %v426 = vsel %vm392, %v416, 0.0
    %427 = vadd.xlane.f32.xlu0 %v426
    %v428 = vpop.xlane.xlu0 %427
    %v429 = vrcp.pop %v419
    %v430 = vrcp.pop %v422
    %v431 = vrcp.pop %v425
    %v432 = vrcp.pop %v428
    %v433 = vmul.f32 %v410, %v429
    %v434 = vmul.f32 %v412, %v430
    %v435 = vmul.f32 %v414, %v431
    %v436 = vmul.f32 %v416, %v432
    %437 = vrot.lane.b32.xlu0 %v187, 64
    %v438 = vpop.permute.xlu0 %437
    %439 = vrot.lane.b32.xlu0 %v192, 64
    %v440 = vpop.permute.xlu0 %439
    %v444 = vsel %vm392, %v433, 0
    %v447 = vsel %vm392, %v434, 0
    %449 = vmatprep.subr.mxu0 0.0
    %450 = vmatpush1.msra.mxu0 %v438
    %451 = vmatprep.subr.mxu0 0.0
    %452 = vmatpush1.msra.mxu0 %v440
    %453 = vmatprep.subr.mxu0 0.0
    %454 = vmatpush1.msra.mxu0 0.0
    %455 = vmatprep.subr.mxu0 0.0
    %456 = vmatpush1.msra.mxu0 0.0
    %457 = vmatprep.subr.mxu0 0.0
    %458 = vmatpush1.msra.mxu0 0.0
    %459 = vmatprep.subr.mxu0 0.0
    %460 = vmatpush1.msra.mxu0 0.0
    %461 = vmatprep.subr.mxu0 0.0
    %462 = vmatpush1.msra.mxu0 0.0
    %463 = vmatprep.subr.mxu0 0.0
    %464 = vmatpush1.msra.mxu0 0.0
    %465 = vmatprep.subr.mxu0 0.0
    %466 = vmatpush1.msra.mxu0 0.0
    %467 = vmatprep.subr.mxu0 0.0
    %468 = vmatpush1.msra.mxu0 0.0
    %469 = vmatprep.subr.mxu0 0.0
    %470 = vmatpush1.msra.mxu0 0.0
    %471 = vmatprep.subr.mxu0 0.0
    %472 = vmatpush1.msra.mxu0 0.0
    %473 = vmatprep.subr.mxu0 0.0
    %474 = vmatpush1.msra.mxu0 0.0
    %475 = vmatprep.subr.mxu0 0.0
    %476 = vmatpush1.msra.mxu0 0.0
    %477 = vmatprep.subr.mxu0 0.0
    %478 = vmatpush1.msra.mxu0 0.0
    %479 = vmatprep.subr.mxu0 0.0
    %480 = vmatpush1.msra.mxu0 0.0
    %481 = vmatprep.subr.mxu0 0.0
    %482 = vmatpush1.msra.mxu0 0.0
    %483 = vmatprep.subr.mxu0 0.0
    %484 = vmatpush1.msra.mxu0 0.0
    %485 = vmatprep.subr.mxu0 0.0
    %486 = vmatpush1.msra.mxu0 0.0
    %487 = vmatprep.subr.mxu0 0.0
    %488 = vmatpush1.msra.mxu0 0.0
    %489 = vmatprep.subr.mxu0 0.0
    %490 = vmatpush1.msra.mxu0 0.0
    %491 = vmatprep.subr.mxu0 0.0
    %492 = vmatpush1.msra.mxu0 0.0
    %493 = vmatprep.subr.mxu0 0.0
    %494 = vmatpush1.msra.mxu0 0.0
    %495 = vmatprep.subr.mxu0 0.0
    %496 = vmatpush1.msra.mxu0 0.0
    %497 = vmatprep.subr.mxu0 0.0
    %498 = vmatpush1.msra.mxu0 0.0
    %499 = vmatprep.subr.mxu0 0.0
    %500 = vmatpush1.msra.mxu0 0.0
    %501 = vmatprep.subr.mxu0 0.0
    %502 = vmatpush1.msra.mxu0 0.0
    %503 = vmatprep.subr.mxu0 0.0
    %504 = vmatpush1.msra.mxu0 0.0
    %505 = vmatprep.subr.mxu0 0.0
    %506 = vmatpush1.msra.mxu0 0.0
    %507 = vmatprep.subr.mxu0 0.0
    %508 = vmatpush1.msra.mxu0 0.0
    %509 = vmatprep.subr.mxu0 0.0
    %510 = vmatpush1.msra.mxu0 0.0
    %511 = vmatprep.subr.mxu0 0.0
    %512 = vmatpush1.msra.mxu0 0.0
    %513 = vmatprep.mubr.f32.mxu0 0.0
    %514 = vmatmul.mubr.f32.gmra.mrb[0].mxu0 %v444
    %v515 = vpop.f32.mrb[0].mxu0
    %v516 = vadd.f32 0.0, %v515
    %v517 = vpop.f32.mrb[0].mxu0
    %518 = vmatprep.mubr.f32.mxu0 0.0
    %519 = vmatmul.mubr.f32.gmra.mrb[0].mxu0 %v447
    %v520 = vpop.f32.mrb[0].mxu0
    %v521 = vadd.f32 0.0, %v520
    %v522 = vpop.f32.mrb[0].mxu0
    %523 = vdwg.mxu0
    %524 = vrot.lane.b32.xlu0 %v197, 64
    %v525 = vpop.permute.xlu0 %524
    %526 = vrot.lane.b32.xlu0 %v202, 64
    %v527 = vpop.permute.xlu0 %526
    %v531 = vsel %vm392, %v435, 0
    %v534 = vsel %vm392, %v436, 0
    %536 = vmatprep.subr.mxu0 0.0
    %537 = vmatpush1.msra.mxu0 %v525
    %538 = vmatprep.subr.mxu0 0.0
    %539 = vmatpush1.msra.mxu0 %v527
    %540 = vmatprep.subr.mxu0 0.0
    %541 = vmatpush1.msra.mxu0 0.0
    %542 = vmatprep.subr.mxu0 0.0
    %543 = vmatpush1.msra.mxu0 0.0
    %544 = vmatprep.subr.mxu0 0.0
    %545 = vmatpush1.msra.mxu0 0.0
    %546 = vmatprep.subr.mxu0 0.0
    %547 = vmatpush1.msra.mxu0 0.0
    %548 = vmatprep.subr.mxu0 0.0
    %549 = vmatpush1.msra.mxu0 0.0
    %550 = vmatprep.subr.mxu0 0.0
    %551 = vmatpush1.msra.mxu0 0.0
    %552 = vmatprep.subr.mxu0 0.0
    %553 = vmatpush1.msra.mxu0 0.0
    %554 = vmatprep.subr.mxu0 0.0
    %555 = vmatpush1.msra.mxu0 0.0
    %556 = vmatprep.subr.mxu0 0.0
    %557 = vmatpush1.msra.mxu0 0.0
    %558 = vmatprep.subr.mxu0 0.0
    %559 = vmatpush1.msra.mxu0 0.0
    %560 = vmatprep.subr.mxu0 0.0
    %561 = vmatpush1.msra.mxu0 0.0
    %562 = vmatprep.subr.mxu0 0.0
    %563 = vmatpush1.msra.mxu0 0.0
    %564 = vmatprep.subr.mxu0 0.0
    %565 = vmatpush1.msra.mxu0 0.0
    %566 = vmatprep.subr.mxu0 0.0
    %567 = vmatpush1.msra.mxu0 0.0
    %568 = vmatprep.subr.mxu0 0.0
    %569 = vmatpush1.msra.mxu0 0.0
    %570 = vmatprep.subr.mxu0 0.0
    %571 = vmatpush1.msra.mxu0 0.0
    %572 = vmatprep.subr.mxu0 0.0
    %573 = vmatpush1.msra.mxu0 0.0
    %574 = vmatprep.subr.mxu0 0.0
    %575 = vmatpush1.msra.mxu0 0.0
    %576 = vmatprep.subr.mxu0 0.0
    %577 = vmatpush1.msra.mxu0 0.0
    %578 = vmatprep.subr.mxu0 0.0
    %579 = vmatpush1.msra.mxu0 0.0
    %580 = vmatprep.subr.mxu0 0.0
    %581 = vmatpush1.msra.mxu0 0.0
    %582 = vmatprep.subr.mxu0 0.0
    %583 = vmatpush1.msra.mxu0 0.0
    %584 = vmatprep.subr.mxu0 0.0
    %585 = vmatpush1.msra.mxu0 0.0
    %586 = vmatprep.subr.mxu0 0.0
    %587 = vmatpush1.msra.mxu0 0.0
    %588 = vmatprep.subr.mxu0 0.0
    %589 = vmatpush1.msra.mxu0 0.0
    %590 = vmatprep.subr.mxu0 0.0
    %591 = vmatpush1.msra.mxu0 0.0
    %592 = vmatprep.subr.mxu0 0.0
    %593 = vmatpush1.msra.mxu0 0.0
    %594 = vmatprep.subr.mxu0 0.0
    %595 = vmatpush1.msra.mxu0 0.0
    %596 = vmatprep.subr.mxu0 0.0
    %597 = vmatpush1.msra.mxu0 0.0
    %598 = vmatprep.subr.mxu0 0.0
    %599 = vmatpush1.msra.mxu0 0.0
    %600 = vmatprep.mubr.f32.mxu0 0.0
    %601 = vmatmul.mubr.f32.gmra.mrb[0].mxu0 %v531
    %v602 = vpop.f32.mrb[0].mxu0
    %v603 = vadd.f32 0.0, %v602
    %v604 = vpop.f32.mrb[0].mxu0
    %605 = vmatprep.mubr.f32.mxu0 0.0
    %606 = vmatmul.mubr.f32.gmra.mrb[0].mxu0 %v534
    %v607 = vpop.f32.mrb[0].mxu0
    %v608 = vadd.f32 0.0, %v607
    %v609 = vpop.f32.mrb[0].mxu0
    %610 = vdwg.mxu0
    %611 = vrot.lane.b32.xlu0 %v187, 120
    %v612 = vpop.permute.xlu0 %611
    %613 = vrot.lane.b32.xlu0 %v192, 120
    %v614 = vpop.permute.xlu0 %613
    %615 = vrot.lane.b32.xlu0 %v187, 88
    %v616 = vpop.permute.xlu0 %615
    %617 = vrot.lane.b32.xlu0 %v192, 88
    %v618 = vpop.permute.xlu0 %617
    %v619 = vsel %vm211, %v612, 0
    %v621 = vsel %vm211, %v614, 0
    %v623 = vsel %vm211, %v616, 0
    %v625 = vsel %vm211, %v618, 0
    %627 = vmatprep.subr.mxu0 0.0
    %628 = vmatpush1.xpose.msra.mxu0 %v623
    %629 = vmatprep.subr.mxu0 0.0
    %630 = vmatpush1.xpose.msra.mxu0 %v625
    %631 = vmatprep.subr.mxu0 0.0
    %632 = vmatpush1.xpose.msra.mxu0 0.0
    %633 = vmatprep.subr.mxu0 0.0
    %634 = vmatpush1.xpose.msra.mxu0 0.0
    %635 = vmatprep.subr.mxu0 0.0
    %636 = vmatpush1.xpose.msra.mxu0 0.0
    %637 = vmatprep.subr.mxu0 0.0
    %638 = vmatpush1.xpose.msra.mxu0 0.0
    %639 = vmatprep.subr.mxu0 0.0
    %640 = vmatpush1.xpose.msra.mxu0 0.0
    %641 = vmatprep.subr.mxu0 0.0
    %642 = vmatpush1.xpose.msra.mxu0 0.0
    %643 = vmatprep.subr.mxu0 0.0
    %644 = vmatpush1.xpose.msra.mxu0 0.0
    %645 = vmatprep.subr.mxu0 0.0
    %646 = vmatpush1.xpose.msra.mxu0 0.0
    %647 = vmatprep.subr.mxu0 0.0
    %648 = vmatpush1.xpose.msra.mxu0 0.0
    %649 = vmatprep.subr.mxu0 0.0
    %650 = vmatpush1.xpose.msra.mxu0 0.0
    %651 = vmatprep.subr.mxu0 0.0
    %652 = vmatpush1.xpose.msra.mxu0 0.0
    %653 = vmatprep.subr.mxu0 0.0
    %654 = vmatpush1.xpose.msra.mxu0 0.0
    %655 = vmatprep.subr.mxu0 0.0
    %656 = vmatpush1.xpose.msra.mxu0 0.0
    %657 = vmatprep.subr.mxu0 0.0
    %658 = vmatpush1.xpose.msra.mxu0 0.0
    %659 = vmatprep.subr.mxu0 0.0
    %660 = vmatpush1.xpose.msra.mxu0 0.0
    %661 = vmatprep.subr.mxu0 0.0
    %662 = vmatpush1.xpose.msra.mxu0 0.0
    %663 = vmatprep.subr.mxu0 0.0
    %664 = vmatpush1.xpose.msra.mxu0 0.0
    %665 = vmatprep.subr.mxu0 0.0
    %666 = vmatpush1.xpose.msra.mxu0 0.0
    %667 = vmatprep.subr.mxu0 0.0
    %668 = vmatpush1.xpose.msra.mxu0 0.0
    %669 = vmatprep.subr.mxu0 0.0
    %670 = vmatpush1.xpose.msra.mxu0 0.0
    %671 = vmatprep.subr.mxu0 0.0
    %672 = vmatpush1.xpose.msra.mxu0 0.0
    %673 = vmatprep.subr.mxu0 0.0
    %674 = vmatpush1.xpose.msra.mxu0 0.0
    %675 = vmatprep.subr.mxu0 0.0
    %676 = vmatpush1.xpose.msra.mxu0 0.0
    %677 = vmatprep.subr.mxu0 0.0
    %678 = vmatpush1.xpose.msra.mxu0 0.0
    %679 = vmatprep.subr.mxu0 0.0
    %680 = vmatpush1.xpose.msra.mxu0 0.0
    %681 = vmatprep.subr.mxu0 0.0
    %682 = vmatpush1.xpose.msra.mxu0 0.0
    %683 = vmatprep.subr.mxu0 0.0
    %684 = vmatpush1.xpose.msra.mxu0 0.0
    %685 = vmatprep.subr.mxu0 0.0
    %686 = vmatpush1.xpose.msra.mxu0 0.0
    %687 = vmatprep.subr.mxu0 0.0
    %688 = vmatpush1.xpose.msra.mxu0 0.0
    %689 = vmatprep.subr.mxu0 0.0
    %690 = vmatpush1.xpose.msra.mxu0 0.0
    %691 = vmatprep.mubr.f32.mxu0 0.0
    %692 = vmatmul.mubr.f32.gmra.mrb[0].mxu0 %v619
    %v693 = vpop.f32.mrb[0].mxu0
    %v694 = vadd.f32 0.0, %v693
    %v695 = vpop.f32.mrb[0].mxu0
    %696 = vmatprep.mubr.f32.mxu0 0.0
    %697 = vmatmul.mubr.f32.gmra.mrb[0].mxu0 %v621
    %v698 = vpop.f32.mrb[0].mxu0
    %v699 = vadd.f32 0.0, %v698
    %v700 = vpop.f32.mrb[0].mxu0
    %701 = vdwg.mxu0
    %702 = vrot.lane.b32.xlu0 %v197, 120
    %v703 = vpop.permute.xlu0 %702
    %704 = vrot.lane.b32.xlu0 %v202, 120
    %v705 = vpop.permute.xlu0 %704
    %706 = vrot.lane.b32.xlu0 %v197, 88
    %v707 = vpop.permute.xlu0 %706
    %708 = vrot.lane.b32.xlu0 %v202, 88
    %v709 = vpop.permute.xlu0 %708
    %v710 = vsel %vm211, %v703, 0
    %v712 = vsel %vm211, %v705, 0
    %v714 = vsel %vm211, %v707, 0
    %v716 = vsel %vm211, %v709, 0
    %718 = vmatprep.subr.mxu0 0.0
    %719 = vmatpush1.xpose.msra.mxu0 %v714
    %720 = vmatprep.subr.mxu0 0.0
    %721 = vmatpush1.xpose.msra.mxu0 %v716
    %722 = vmatprep.subr.mxu0 0.0
    %723 = vmatpush1.xpose.msra.mxu0 0.0
    %724 = vmatprep.subr.mxu0 0.0
    %725 = vmatpush1.xpose.msra.mxu0 0.0
    %726 = vmatprep.subr.mxu0 0.0
    %727 = vmatpush1.xpose.msra.mxu0 0.0
    %728 = vmatprep.subr.mxu0 0.0
    %729 = vmatpush1.xpose.msra.mxu0 0.0
    %730 = vmatprep.subr.mxu0 0.0
    %731 = vmatpush1.xpose.msra.mxu0 0.0
    %732 = vmatprep.subr.mxu0 0.0
    %733 = vmatpush1.xpose.msra.mxu0 0.0
    %734 = vmatprep.subr.mxu0 0.0
    %735 = vmatpush1.xpose.msra.mxu0 0.0
    %736 = vmatprep.subr.mxu0 0.0
    %737 = vmatpush1.xpose.msra.mxu0 0.0
    %738 = vmatprep.subr.mxu0 0.0
    %739 = vmatpush1.xpose.msra.mxu0 0.0
    %740 = vmatprep.subr.mxu0 0.0
    %741 = vmatpush1.xpose.msra.mxu0 0.0
    %742 = vmatprep.subr.mxu0 0.0
    %743 = vmatpush1.xpose.msra.mxu0 0.0
    %744 = vmatprep.subr.mxu0 0.0
    %745 = vmatpush1.xpose.msra.mxu0 0.0
    %746 = vmatprep.subr.mxu0 0.0
    %747 = vmatpush1.xpose.msra.mxu0 0.0
    %748 = vmatprep.subr.mxu0 0.0
    %749 = vmatpush1.xpose.msra.mxu0 0.0
    %750 = vmatprep.subr.mxu0 0.0
    %751 = vmatpush1.xpose.msra.mxu0 0.0
    %752 = vmatprep.subr.mxu0 0.0
    %753 = vmatpush1.xpose.msra.mxu0 0.0
    %754 = vmatprep.subr.mxu0 0.0
    %755 = vmatpush1.xpose.msra.mxu0 0.0
    %756 = vmatprep.subr.mxu0 0.0
    %757 = vmatpush1.xpose.msra.mxu0 0.0
    %758 = vmatprep.subr.mxu0 0.0
    %759 = vmatpush1.xpose.msra.mxu0 0.0
    %760 = vmatprep.subr.mxu0 0.0
    %761 = vmatpush1.xpose.msra.mxu0 0.0
    %762 = vmatprep.subr.mxu0 0.0
    %763 = vmatpush1.xpose.msra.mxu0 0.0
    %764 = vmatprep.subr.mxu0 0.0
    %765 = vmatpush1.xpose.msra.mxu0 0.0
    %766 = vmatprep.subr.mxu0 0.0
    %767 = vmatpush1.xpose.msra.mxu0 0.0
    %768 = vmatprep.subr.mxu0 0.0
    %769 = vmatpush1.xpose.msra.mxu0 0.0
    %770 = vmatprep.subr.mxu0 0.0
    %771 = vmatpush1.xpose.msra.mxu0 0.0
    %772 = vmatprep.subr.mxu0 0.0
    %773 = vmatpush1.xpose.msra.mxu0 0.0
    %774 = vmatprep.subr.mxu0 0.0
    %775 = vmatpush1.xpose.msra.mxu0 0.0
    %776 = vmatprep.subr.mxu0 0.0
    %777 = vmatpush1.xpose.msra.mxu0 0.0
    %778 = vmatprep.subr.mxu0 0.0
    %779 = vmatpush1.xpose.msra.mxu0 0.0
    %780 = vmatprep.subr.mxu0 0.0
    %781 = vmatpush1.xpose.msra.mxu0 0.0
    %782 = vmatprep.mubr.f32.mxu0 0.0
    %783 = vmatmul.mubr.f32.gmra.mrb[0].mxu0 %v710
    %v784 = vpop.f32.mrb[0].mxu0
    %v785 = vadd.f32 0.0, %v784
    %v786 = vpop.f32.mrb[0].mxu0
    %787 = vmatprep.mubr.f32.mxu0 0.0
    %788 = vmatmul.mubr.f32.gmra.mrb[0].mxu0 %v712
    %v789 = vpop.f32.mrb[0].mxu0
    %v790 = vadd.f32 0.0, %v789
    %v791 = vpop.f32.mrb[0].mxu0
    %792 = vdwg.mxu0
    %v793 = vmul.f32 %v694, 0.35355338
    %v794 = vmul.f32 %v699, 0.35355338
    %v795 = vmul.f32 %v785, 0.35355338
    %v796 = vmul.f32 %v790, 0.35355338
    %v797 = vadd.f32 %v793, %v65
    %v798 = vadd.f32 %v794, %v66
    %v799 = vadd.f32 %v795, %v67
    %v800 = vadd.f32 %v796, %v68
    %v801 = vsel %vm392, %v797, -inf
    %802 = vmax.xlane.f32.xlu0 %v801
    %v803 = vpop.xlane.xlu0 %802
    %v804 = vsel %vm392, %v798, -inf
    %805 = vmax.xlane.f32.xlu0 %v804
    %v806 = vpop.xlane.xlu0 %805
    %v807 = vsel %vm392, %v799, -inf
    %808 = vmax.xlane.f32.xlu0 %v807
    %v809 = vpop.xlane.xlu0 %808
    %v810 = vsel %vm392, %v800, -inf
    %811 = vmax.xlane.f32.xlu0 %v810
    %v812 = vpop.xlane.xlu0 %811
    %v813 = vsub.f32 %v797, %v803
    %v814 = vsub.f32 %v798, %v806
    %v815 = vsub.f32 %v799, %v809
    %v816 = vsub.f32 %v800, %v812
    %v817 = vmul.f32 %v813, 1.442695
    %v818 = vpow.pop %v817
    %v819 = vmul.f32 %v814, 1.442695
    %v820 = vpow.pop %v819
    %v821 = vmul.f32 %v815, 1.442695
    %v822 = vpow.pop %v821
    %v823 = vmul.f32 %v816, 1.442695
    %v824 = vpow.pop %v823
    %v825 = vsel %vm392, %v818, 0.0
    %826 = vadd.xlane.f32.xlu0 %v825
    %v827 = vpop.xlane.xlu0 %826
    %v828 = vsel %vm392, %v820, 0.0
    %829 = vadd.xlane.f32.xlu0 %v828
    %v830 = vpop.xlane.xlu0 %829
    %v831 = vsel %vm392, %v822, 0.0
    %832 = vadd.xlane.f32.xlu0 %v831
    %v833 = vpop.xlane.xlu0 %832
    %v834 = vsel %vm392, %v824, 0.0
    %835 = vadd.xlane.f32.xlu0 %v834
    %v836 = vpop.xlane.xlu0 %835
    %v837 = vrcp.pop %v827
    %v838 = vrcp.pop %v830
    %v839 = vrcp.pop %v833
    %v840 = vrcp.pop %v836
    %v841 = vmul.f32 %v818, %v837
    %v842 = vmul.f32 %v820, %v838
    %v843 = vmul.f32 %v822, %v839
    %v844 = vmul.f32 %v824, %v840
    %845 = vrot.lane.b32.xlu0 %v187, 56
    %v846 = vpop.permute.xlu0 %845
    %847 = vrot.lane.b32.xlu0 %v192, 56
    %v848 = vpop.permute.xlu0 %847
    %v852 = vsel %vm392, %v841, 0
    %v855 = vsel %vm392, %v842, 0
    %857 = vmatprep.subr.mxu0 0.0
    %858 = vmatpush1.msra.mxu0 %v846
    %859 = vmatprep.subr.mxu0 0.0
    %860 = vmatpush1.msra.mxu0 %v848
    %861 = vmatprep.subr.mxu0 0.0
    %862 = vmatpush1.msra.mxu0 0.0
    %863 = vmatprep.subr.mxu0 0.0
    %864 = vmatpush1.msra.mxu0 0.0
    %865 = vmatprep.subr.mxu0 0.0
    %866 = vmatpush1.msra.mxu0 0.0
    %867 = vmatprep.subr.mxu0 0.0
    %868 = vmatpush1.msra.mxu0 0.0
    %869 = vmatprep.subr.mxu0 0.0
    %870 = vmatpush1.msra.mxu0 0.0
    %871 = vmatprep.subr.mxu0 0.0
    %872 = vmatpush1.msra.mxu0 0.0
    %873 = vmatprep.subr.mxu0 0.0
    %874 = vmatpush1.msra.mxu0 0.0
    %875 = vmatprep.subr.mxu0 0.0
    %876 = vmatpush1.msra.mxu0 0.0
    %877 = vmatprep.subr.mxu0 0.0
    %878 = vmatpush1.msra.mxu0 0.0
    %879 = vmatprep.subr.mxu0 0.0
    %880 = vmatpush1.msra.mxu0 0.0
    %881 = vmatprep.subr.mxu0 0.0
    %882 = vmatpush1.msra.mxu0 0.0
    %883 = vmatprep.subr.mxu0 0.0
    %884 = vmatpush1.msra.mxu0 0.0
    %885 = vmatprep.subr.mxu0 0.0
    %886 = vmatpush1.msra.mxu0 0.0
    %887 = vmatprep.subr.mxu0 0.0
    %888 = vmatpush1.msra.mxu0 0.0
    %889 = vmatprep.subr.mxu0 0.0
    %890 = vmatpush1.msra.mxu0 0.0
    %891 = vmatprep.subr.mxu0 0.0
    %892 = vmatpush1.msra.mxu0 0.0
    %893 = vmatprep.subr.mxu0 0.0
    %894 = vmatpush1.msra.mxu0 0.0
    %895 = vmatprep.subr.mxu0 0.0
    %896 = vmatpush1.msra.mxu0 0.0
    %897 = vmatprep.subr.mxu0 0.0
    %898 = vmatpush1.msra.mxu0 0.0
    %899 = vmatprep.subr.mxu0 0.0
    %900 = vmatpush1.msra.mxu0 0.0
    %901 = vmatprep.subr.mxu0 0.0
    %902 = vmatpush1.msra.mxu0 0.0
    %903 = vmatprep.subr.mxu0 0.0
    %904 = vmatpush1.msra.mxu0 0.0
    %905 = vmatprep.subr.mxu0 0.0
    %906 = vmatpush1.msra.mxu0 0.0
    %907 = vmatprep.subr.mxu0 0.0
    %908 = vmatpush1.msra.mxu0 0.0
    %909 = vmatprep.subr.mxu0 0.0
    %910 = vmatpush1.msra.mxu0 0.0
    %911 = vmatprep.subr.mxu0 0.0
    %912 = vmatpush1.msra.mxu0 0.0
    %913 = vmatprep.subr.mxu0 0.0
    %914 = vmatpush1.msra.mxu0 0.0
    %915 = vmatprep.subr.mxu0 0.0
    %916 = vmatpush1.msra.mxu0 0.0
    %917 = vmatprep.subr.mxu0 0.0
    %918 = vmatpush1.msra.mxu0 0.0
    %919 = vmatprep.subr.mxu0 0.0
    %920 = vmatpush1.msra.mxu0 0.0
    %921 = vmatprep.mubr.f32.mxu0 0.0
    %922 = vmatmul.mubr.f32.gmra.mrb[0].mxu0 %v852
    %v923 = vpop.f32.mrb[0].mxu0
    %v924 = vadd.f32 0.0, %v923
    %v925 = vpop.f32.mrb[0].mxu0
    %926 = vmatprep.mubr.f32.mxu0 0.0
    %927 = vmatmul.mubr.f32.gmra.mrb[0].mxu0 %v855
    %v928 = vpop.f32.mrb[0].mxu0
    %v929 = vadd.f32 0.0, %v928
    %v930 = vpop.f32.mrb[0].mxu0
    %931 = vdwg.mxu0
    %932 = vrot.lane.b32.xlu0 %v197, 56
    %v933 = vpop.permute.xlu0 %932
    %934 = vrot.lane.b32.xlu0 %v202, 56
    %v935 = vpop.permute.xlu0 %934
    %v939 = vsel %vm392, %v843, 0
    %v942 = vsel %vm392, %v844, 0
    %944 = vmatprep.subr.mxu0 0.0
    %945 = vmatpush1.msra.mxu0 %v933
    %946 = vmatprep.subr.mxu0 0.0
    %947 = vmatpush1.msra.mxu0 %v935
    %948 = vmatprep.subr.mxu0 0.0
    %949 = vmatpush1.msra.mxu0 0.0
    %950 = vmatprep.subr.mxu0 0.0
    %951 = vmatpush1.msra.mxu0 0.0
    %952 = vmatprep.subr.mxu0 0.0
    %953 = vmatpush1.msra.mxu0 0.0
    %954 = vmatprep.subr.mxu0 0.0
    %955 = vmatpush1.msra.mxu0 0.0
    %956 = vmatprep.subr.mxu0 0.0
    %957 = vmatpush1.msra.mxu0 0.0
    %958 = vmatprep.subr.mxu0 0.0
    %959 = vmatpush1.msra.mxu0 0.0
    %960 = vmatprep.subr.mxu0 0.0
    %961 = vmatpush1.msra.mxu0 0.0
    %962 = vmatprep.subr.mxu0 0.0
    %963 = vmatpush1.msra.mxu0 0.0
    %964 = vmatprep.subr.mxu0 0.0
    %965 = vmatpush1.msra.mxu0 0.0
    %966 = vmatprep.subr.mxu0 0.0
    %967 = vmatpush1.msra.mxu0 0.0
    %968 = vmatprep.subr.mxu0 0.0
    %969 = vmatpush1.msra.mxu0 0.0
    %970 = vmatprep.subr.mxu0 0.0
    %971 = vmatpush1.msra.mxu0 0.0
    %972 = vmatprep.subr.mxu0 0.0
    %973 = vmatpush1.msra.mxu0 0.0
    %974 = vmatprep.subr.mxu0 0.0
    %975 = vmatpush1.msra.mxu0 0.0
    %976 = vmatprep.subr.mxu0 0.0
    %977 = vmatpush1.msra.mxu0 0.0
    %978 = vmatprep.subr.mxu0 0.0
    %979 = vmatpush1.msra.mxu0 0.0
    %980 = vmatprep.subr.mxu0 0.0
    %981 = vmatpush1.msra.mxu0 0.0
    %982 = vmatprep.subr.mxu0 0.0
    %983 = vmatpush1.msra.mxu0 0.0
    %984 = vmatprep.subr.mxu0 0.0
    %985 = vmatpush1.msra.mxu0 0.0
    %986 = vmatprep.subr.mxu0 0.0
    %987 = vmatpush1.msra.mxu0 0.0
    %988 = vmatprep.subr.mxu0 0.0
    %989 = vmatpush1.msra.mxu0 0.0
    %990 = vmatprep.subr.mxu0 0.0
    %991 = vmatpush1.msra.mxu0 0.0
    %992 = vmatprep.subr.mxu0 0.0
    %993 = vmatpush1.msra.mxu0 0.0
    %994 = vmatprep.subr.mxu0 0.0
    %995 = vmatpush1.msra.mxu0 0.0
    %996 = vmatprep.subr.mxu0 0.0
    %997 = vmatpush1.msra.mxu0 0.0
    %998 = vmatprep.subr.mxu0 0.0
    %999 = vmatpush1.msra.mxu0 0.0
    %1000 = vmatprep.subr.mxu0 0.0
    %1001 = vmatpush1.msra.mxu0 0.0
    %1002 = vmatprep.subr.mxu0 0.0
    %1003 = vmatpush1.msra.mxu0 0.0
    %1004 = vmatprep.subr.mxu0 0.0
    %1005 = vmatpush1.msra.mxu0 0.0
    %1006 = vmatprep.subr.mxu0 0.0
    %1007 = vmatpush1.msra.mxu0 0.0
    %1008 = vmatprep.mubr.f32.mxu0 0.0
    %1009 = vmatmul.mubr.f32.gmra.mrb[0].mxu0 %v939
    %v1010 = vpop.f32.mrb[0].mxu0
    %v1011 = vadd.f32 0.0, %v1010
    %v1012 = vpop.f32.mrb[0].mxu0
    %1013 = vmatprep.mubr.f32.mxu0 0.0
    %1014 = vmatmul.mubr.f32.gmra.mrb[0].mxu0 %v942
    %v1015 = vpop.f32.mrb[0].mxu0
    %v1016 = vadd.f32 0.0, %v1015
    %v1017 = vpop.f32.mrb[0].mxu0
    %1018 = vdwg.mxu0
    %v1020 = vsel %vm211, %v924, 0
    %v1023 = vsel %vm211, %v929, 0
    %v1026 = vsel %vm211, %v1011, 0
    %v1029 = vsel %vm211, %v1016, 0
    %1031 = vmatprep.subr.mxu0 0.0
    %1032 = vmatpush1.msra.mxu0 %v78
    %1033 = vmatprep.subr.mxu0 0.0
    %1034 = vmatpush1.msra.mxu0 0.0
    %1035 = vmatprep.subr.mxu0 0.0
    %1036 = vmatpush1.msra.mxu0 0.0
    %1037 = vmatprep.subr.mxu0 0.0
    %1038 = vmatpush1.msra.mxu0 0.0
    %1039 = vmatprep.subr.mxu0 0.0
    %1040 = vmatpush1.msra.mxu0 0.0
    %1041 = vmatprep.subr.mxu0 0.0
    %1042 = vmatpush1.msra.mxu0 0.0
    %1043 = vmatprep.subr.mxu0 0.0
    %1044 = vmatpush1.msra.mxu0 0.0
    %1045 = vmatprep.subr.mxu0 0.0
    %1046 = vmatpush1.msra.mxu0 0.0
    %1047 = vmatprep.subr.mxu0 0.0
    %1048 = vmatpush1.msra.mxu0 0.0
    %1049 = vmatprep.subr.mxu0 0.0
    %1050 = vmatpush1.msra.mxu0 0.0
    %1051 = vmatprep.subr.mxu0 0.0
    %1052 = vmatpush1.msra.mxu0 0.0
    %1053 = vmatprep.subr.mxu0 0.0
    %1054 = vmatpush1.msra.mxu0 0.0
    %1055 = vmatprep.subr.mxu0 0.0
    %1056 = vmatpush1.msra.mxu0 0.0
    %1057 = vmatprep.subr.mxu0 0.0
    %1058 = vmatpush1.msra.mxu0 0.0
    %1059 = vmatprep.subr.mxu0 0.0
    %1060 = vmatpush1.msra.mxu0 0.0
    %1061 = vmatprep.subr.mxu0 0.0
    %1062 = vmatpush1.msra.mxu0 0.0
    %1063 = vmatprep.subr.mxu0 0.0
    %1064 = vmatpush1.msra.mxu0 0.0
    %1065 = vmatprep.subr.mxu0 0.0
    %1066 = vmatpush1.msra.mxu0 0.0
    %1067 = vmatprep.subr.mxu0 0.0
    %1068 = vmatpush1.msra.mxu0 0.0
    %1069 = vmatprep.subr.mxu0 0.0
    %1070 = vmatpush1.msra.mxu0 0.0
    %1071 = vmatprep.subr.mxu0 0.0
    %1072 = vmatpush1.msra.mxu0 0.0
    %1073 = vmatprep.subr.mxu0 0.0
    %1074 = vmatpush1.msra.mxu0 0.0
    %1075 = vmatprep.subr.mxu0 0.0
    %1076 = vmatpush1.msra.mxu0 0.0
    %1077 = vmatprep.subr.mxu0 0.0
    %1078 = vmatpush1.msra.mxu0 0.0
    %1079 = vmatprep.subr.mxu0 0.0
    %1080 = vmatpush1.msra.mxu0 0.0
    %1081 = vmatprep.subr.mxu0 0.0
    %1082 = vmatpush1.msra.mxu0 0.0
    %1083 = vmatprep.subr.mxu0 0.0
    %1084 = vmatpush1.msra.mxu0 0.0
    %1085 = vmatprep.subr.mxu0 0.0
    %1086 = vmatpush1.msra.mxu0 0.0
    %1087 = vmatprep.subr.mxu0 0.0
    %1088 = vmatpush1.msra.mxu0 0.0
    %1089 = vmatprep.subr.mxu0 0.0
    %1090 = vmatpush1.msra.mxu0 0.0
    %1091 = vmatprep.subr.mxu0 0.0
    %1092 = vmatpush1.msra.mxu0 0.0
    %1093 = vmatprep.subr.mxu0 0.0
    %1094 = vmatpush1.msra.mxu0 0.0
    %1095 = vmatprep.mubr.f32.mxu0 0.0
    %1096 = vmatmul.mubr.f32.gmra.mrb[0].mxu0 %v1020
    %v1097 = vpop.f32.mrb[0].mxu0
    %v1098 = vadd.f32 0.0, %v1097
    %v1099 = vpop.f32.mrb[0].mxu0
    %1100 = vmatprep.mubr.f32.mxu0 0.0
    %1101 = vmatmul.mubr.f32.gmra.mrb[0].mxu0 %v1023
    %v1102 = vpop.f32.mrb[0].mxu0
    %v1103 = vadd.f32 0.0, %v1102
    %v1104 = vpop.f32.mrb[0].mxu0
    %1105 = vmatprep.mubr.f32.mxu0 0.0
    %1106 = vmatmul.mubr.f32.gmra.mrb[0].mxu0 %v1026
    %v1107 = vpop.f32.mrb[0].mxu0
    %v1108 = vadd.f32 0.0, %v1107
    %v1109 = vpop.f32.mrb[0].mxu0
    %1110 = vmatprep.mubr.f32.mxu0 0.0
    %1111 = vmatmul.mubr.f32.gmra.mrb[0].mxu0 %v1029
    %v1112 = vpop.f32.mrb[0].mxu0
    %v1113 = vadd.f32 0.0, %v1112
    %v1114 = vpop.f32.mrb[0].mxu0
    %1115 = vdwg.mxu0
    %v1117 = vsel %vm211, %v516, 0
    %v1120 = vsel %vm211, %v521, 0
    %v1123 = vsel %vm211, %v603, 0
    %v1126 = vsel %vm211, %v608, 0
    %1128 = vmatprep.subr.mxu0 0.0
    %1129 = vmatpush1.msra.mxu0 %v77
    %1130 = vmatprep.subr.mxu0 0.0
    %1131 = vmatpush1.msra.mxu0 0.0
    %1132 = vmatprep.subr.mxu0 0.0
    %1133 = vmatpush1.msra.mxu0 0.0
    %1134 = vmatprep.subr.mxu0 0.0
    %1135 = vmatpush1.msra.mxu0 0.0
    %1136 = vmatprep.subr.mxu0 0.0
    %1137 = vmatpush1.msra.mxu0 0.0
    %1138 = vmatprep.subr.mxu0 0.0
    %1139 = vmatpush1.msra.mxu0 0.0
    %1140 = vmatprep.subr.mxu0 0.0
    %1141 = vmatpush1.msra.mxu0 0.0
    %1142 = vmatprep.subr.mxu0 0.0
    %1143 = vmatpush1.msra.mxu0 0.0
    %1144 = vmatprep.subr.mxu0 0.0
    %1145 = vmatpush1.msra.mxu0 0.0
    %1146 = vmatprep.subr.mxu0 0.0
    %1147 = vmatpush1.msra.mxu0 0.0
    %1148 = vmatprep.subr.mxu0 0.0
    %1149 = vmatpush1.msra.mxu0 0.0
    %1150 = vmatprep.subr.mxu0 0.0
    %1151 = vmatpush1.msra.mxu0 0.0
    %1152 = vmatprep.subr.mxu0 0.0
    %1153 = vmatpush1.msra.mxu0 0.0
    %1154 = vmatprep.subr.mxu0 0.0
    %1155 = vmatpush1.msra.mxu0 0.0
    %1156 = vmatprep.subr.mxu0 0.0
    %1157 = vmatpush1.msra.mxu0 0.0
    %1158 = vmatprep.subr.mxu0 0.0
    %1159 = vmatpush1.msra.mxu0 0.0
    %1160 = vmatprep.subr.mxu0 0.0
    %1161 = vmatpush1.msra.mxu0 0.0
    %1162 = vmatprep.subr.mxu0 0.0
    %1163 = vmatpush1.msra.mxu0 0.0
    %1164 = vmatprep.subr.mxu0 0.0
    %1165 = vmatpush1.msra.mxu0 0.0
    %1166 = vmatprep.subr.mxu0 0.0
    %1167 = vmatpush1.msra.mxu0 0.0
    %1168 = vmatprep.subr.mxu0 0.0
    %1169 = vmatpush1.msra.mxu0 0.0
    %1170 = vmatprep.subr.mxu0 0.0
    %1171 = vmatpush1.msra.mxu0 0.0
    %1172 = vmatprep.subr.mxu0 0.0
    %1173 = vmatpush1.msra.mxu0 0.0
    %1174 = vmatprep.subr.mxu0 0.0
    %1175 = vmatpush1.msra.mxu0 0.0
    %1176 = vmatprep.subr.mxu0 0.0
    %1177 = vmatpush1.msra.mxu0 0.0
    %1178 = vmatprep.subr.mxu0 0.0
    %1179 = vmatpush1.msra.mxu0 0.0
    %1180 = vmatprep.subr.mxu0 0.0
    %1181 = vmatpush1.msra.mxu0 0.0
    %1182 = vmatprep.subr.mxu0 0.0
    %1183 = vmatpush1.msra.mxu0 0.0
    %1184 = vmatprep.subr.mxu0 0.0
    %1185 = vmatpush1.msra.mxu0 0.0
    %1186 = vmatprep.subr.mxu0 0.0
    %1187 = vmatpush1.msra.mxu0 0.0
    %1188 = vmatprep.subr.mxu0 0.0
    %1189 = vmatpush1.msra.mxu0 0.0
    %1190 = vmatprep.subr.mxu0 0.0
    %1191 = vmatpush1.msra.mxu0 0.0
    %1192 = vmatprep.mubr.f32.mxu0 0.0
    %1193 = vmatmul.mubr.f32.gmra.mrb[0].mxu0 %v1117
    %v1194 = vpop.f32.mrb[0].mxu0
    %v1195 = vadd.f32 %v1098, %v1194
    %v1196 = vpop.f32.mrb[0].mxu0
    %1197 = vmatprep.mubr.f32.mxu0 0.0
    %1198 = vmatmul.mubr.f32.gmra.mrb[0].mxu0 %v1120
    %v1199 = vpop.f32.mrb[0].mxu0
    %v1200 = vadd.f32 %v1103, %v1199
    %v1201 = vpop.f32.mrb[0].mxu0
    %1202 = vmatprep.mubr.f32.mxu0 0.0
    %1203 = vmatmul.mubr.f32.gmra.mrb[0].mxu0 %v1123
    %v1204 = vpop.f32.mrb[0].mxu0
    %v1205 = vadd.f32 %v1108, %v1204
    %v1206 = vpop.f32.mrb[0].mxu0
    %1207 = vmatprep.mubr.f32.mxu0 0.0
    %1208 = vmatmul.mubr.f32.gmra.mrb[0].mxu0 %v1126
    %v1209 = vpop.f32.mrb[0].mxu0
    %v1210 = vadd.f32 %v1113, %v1209
    %v1211 = vpop.f32.mrb[0].mxu0
    %1212 = vdwg.mxu0
    %1213 = vrot.lane.b32.xlu0 %v187, 112
    %v1214 = vpop.permute.xlu0 %1213
    %1215 = vrot.lane.b32.xlu0 %v192, 112
    %v1216 = vpop.permute.xlu0 %1215
    %1217 = vrot.lane.b32.xlu0 %v187, 80
    %v1218 = vpop.permute.xlu0 %1217
    %1219 = vrot.lane.b32.xlu0 %v192, 80
    %v1220 = vpop.permute.xlu0 %1219
    %v1221 = vsel %vm211, %v1214, 0
    %v1223 = vsel %vm211, %v1216, 0
    %v1225 = vsel %vm211, %v1218, 0
    %v1227 = vsel %vm211, %v1220, 0
    %1229 = vmatprep.subr.mxu0 0.0
    %1230 = vmatpush1.xpose.msra.mxu0 %v1225
    %1231 = vmatprep.subr.mxu0 0.0
    %1232 = vmatpush1.xpose.msra.mxu0 %v1227
    %1233 = vmatprep.subr.mxu0 0.0
    %1234 = vmatpush1.xpose.msra.mxu0 0.0
    %1235 = vmatprep.subr.mxu0 0.0
    %1236 = vmatpush1.xpose.msra.mxu0 0.0
    %1237 = vmatprep.subr.mxu0 0.0
    %1238 = vmatpush1.xpose.msra.mxu0 0.0
    %1239 = vmatprep.subr.mxu0 0.0
    %1240 = vmatpush1.xpose.msra.mxu0 0.0
    %1241 = vmatprep.subr.mxu0 0.0
    %1242 = vmatpush1.xpose.msra.mxu0 0.0
    %1243 = vmatprep.subr.mxu0 0.0
    %1244 = vmatpush1.xpose.msra.mxu0 0.0
    %1245 = vmatprep.subr.mxu0 0.0
    %1246 = vmatpush1.xpose.msra.mxu0 0.0
    %1247 = vmatprep.subr.mxu0 0.0
    %1248 = vmatpush1.xpose.msra.mxu0 0.0
    %1249 = vmatprep.subr.mxu0 0.0
    %1250 = vmatpush1.xpose.msra.mxu0 0.0
    %1251 = vmatprep.subr.mxu0 0.0
    %1252 = vmatpush1.xpose.msra.mxu0 0.0
    %1253 = vmatprep.subr.mxu0 0.0
    %1254 = vmatpush1.xpose.msra.mxu0 0.0
    %1255 = vmatprep.subr.mxu0 0.0
    %1256 = vmatpush1.xpose.msra.mxu0 0.0
    %1257 = vmatprep.subr.mxu0 0.0
    %1258 = vmatpush1.xpose.msra.mxu0 0.0
    %1259 = vmatprep.subr.mxu0 0.0
    %1260 = vmatpush1.xpose.msra.mxu0 0.0
    %1261 = vmatprep.subr.mxu0 0.0
    %1262 = vmatpush1.xpose.msra.mxu0 0.0
    %1263 = vmatprep.subr.mxu0 0.0
    %1264 = vmatpush1.xpose.msra.mxu0 0.0
    %1265 = vmatprep.subr.mxu0 0.0
    %1266 = vmatpush1.xpose.msra.mxu0 0.0
    %1267 = vmatprep.subr.mxu0 0.0
    %1268 = vmatpush1.xpose.msra.mxu0 0.0
    %1269 = vmatprep.subr.mxu0 0.0
    %1270 = vmatpush1.xpose.msra.mxu0 0.0
    %1271 = vmatprep.subr.mxu0 0.0
    %1272 = vmatpush1.xpose.msra.mxu0 0.0
    %1273 = vmatprep.subr.mxu0 0.0
    %1274 = vmatpush1.xpose.msra.mxu0 0.0
    %1275 = vmatprep.subr.mxu0 0.0
    %1276 = vmatpush1.xpose.msra.mxu0 0.0
    %1277 = vmatprep.subr.mxu0 0.0
    %1278 = vmatpush1.xpose.msra.mxu0 0.0
    %1279 = vmatprep.subr.mxu0 0.0
    %1280 = vmatpush1.xpose.msra.mxu0 0.0
    %1281 = vmatprep.subr.mxu0 0.0
    %1282 = vmatpush1.xpose.msra.mxu0 0.0
    %1283 = vmatprep.subr.mxu0 0.0
    %1284 = vmatpush1.xpose.msra.mxu0 0.0
    %1285 = vmatprep.subr.mxu0 0.0
    %1286 = vmatpush1.xpose.msra.mxu0 0.0
    %1287 = vmatprep.subr.mxu0 0.0
    %1288 = vmatpush1.xpose.msra.mxu0 0.0
    %1289 = vmatprep.subr.mxu0 0.0
    %1290 = vmatpush1.xpose.msra.mxu0 0.0
    %1291 = vmatprep.subr.mxu0 0.0
    %1292 = vmatpush1.xpose.msra.mxu0 0.0
    %1293 = vmatprep.mubr.f32.mxu0 0.0
    %1294 = vmatmul.mubr.f32.gmra.mrb[0].mxu0 %v1221
    %v1295 = vpop.f32.mrb[0].mxu0
    %v1296 = vadd.f32 0.0, %v1295
    %v1297 = vpop.f32.mrb[0].mxu0
    %1298 = vmatprep.mubr.f32.mxu0 0.0
    %1299 = vmatmul.mubr.f32.gmra.mrb[0].mxu0 %v1223
    %v1300 = vpop.f32.mrb[0].mxu0
    %v1301 = vadd.f32 0.0, %v1300
    %v1302 = vpop.f32.mrb[0].mxu0
    %1303 = vdwg.mxu0
    %1304 = vrot.lane.b32.xlu0 %v197, 112
    %v1305 = vpop.permute.xlu0 %1304
    %1306 = vrot.lane.b32.xlu0 %v202, 112
    %v1307 = vpop.permute.xlu0 %1306
    %1308 = vrot.lane.b32.xlu0 %v197, 80
    %v1309 = vpop.permute.xlu0 %1308
    %1310 = vrot.lane.b32.xlu0 %v202, 80
    %v1311 = vpop.permute.xlu0 %1310
    %v1312 = vsel %vm211, %v1305, 0
    %v1314 = vsel %vm211, %v1307, 0
    %v1316 = vsel %vm211, %v1309, 0
    %v1318 = vsel %vm211, %v1311, 0
    %1320 = vmatprep.subr.mxu0 0.0
    %1321 = vmatpush1.xpose.msra.mxu0 %v1316
    %1322 = vmatprep.subr.mxu0 0.0
    %1323 = vmatpush1.xpose.msra.mxu0 %v1318
    %1324 = vmatprep.subr.mxu0 0.0
    %1325 = vmatpush1.xpose.msra.mxu0 0.0
    %1326 = vmatprep.subr.mxu0 0.0
    %1327 = vmatpush1.xpose.msra.mxu0 0.0
    %1328 = vmatprep.subr.mxu0 0.0
    %1329 = vmatpush1.xpose.msra.mxu0 0.0
    %1330 = vmatprep.subr.mxu0 0.0
    %1331 = vmatpush1.xpose.msra.mxu0 0.0
    %1332 = vmatprep.subr.mxu0 0.0
    %1333 = vmatpush1.xpose.msra.mxu0 0.0
    %1334 = vmatprep.subr.mxu0 0.0
    %1335 = vmatpush1.xpose.msra.mxu0 0.0
    %1336 = vmatprep.subr.mxu0 0.0
    %1337 = vmatpush1.xpose.msra.mxu0 0.0
    %1338 = vmatprep.subr.mxu0 0.0
    %1339 = vmatpush1.xpose.msra.mxu0 0.0
    %1340 = vmatprep.subr.mxu0 0.0
    %1341 = vmatpush1.xpose.msra.mxu0 0.0
    %1342 = vmatprep.subr.mxu0 0.0
    %1343 = vmatpush1.xpose.msra.mxu0 0.0
    %1344 = vmatprep.subr.mxu0 0.0
    %1345 = vmatpush1.xpose.msra.mxu0 0.0
    %1346 = vmatprep.subr.mxu0 0.0
    %1347 = vmatpush1.xpose.msra.mxu0 0.0
    %1348 = vmatprep.subr.mxu0 0.0
    %1349 = vmatpush1.xpose.msra.mxu0 0.0
    %1350 = vmatprep.subr.mxu0 0.0
    %1351 = vmatpush1.xpose.msra.mxu0 0.0
    %1352 = vmatprep.subr.mxu0 0.0
    %1353 = vmatpush1.xpose.msra.mxu0 0.0
    %1354 = vmatprep.subr.mxu0 0.0
    %1355 = vmatpush1.xpose.msra.mxu0 0.0
    %1356 = vmatprep.subr.mxu0 0.0
    %1357 = vmatpush1.xpose.msra.mxu0 0.0
    %1358 = vmatprep.subr.mxu0 0.0
    %1359 = vmatpush1.xpose.msra.mxu0 0.0
    %1360 = vmatprep.subr.mxu0 0.0
    %1361 = vmatpush1.xpose.msra.mxu0 0.0
    %1362 = vmatprep.subr.mxu0 0.0
    %1363 = vmatpush1.xpose.msra.mxu0 0.0
    %1364 = vmatprep.subr.mxu0 0.0
    %1365 = vmatpush1.xpose.msra.mxu0 0.0
    %1366 = vmatprep.subr.mxu0 0.0
    %1367 = vmatpush1.xpose.msra.mxu0 0.0
    %1368 = vmatprep.subr.mxu0 0.0
    %1369 = vmatpush1.xpose.msra.mxu0 0.0
    %1370 = vmatprep.subr.mxu0 0.0
    %1371 = vmatpush1.xpose.msra.mxu0 0.0
    %1372 = vmatprep.subr.mxu0 0.0
    %1373 = vmatpush1.xpose.msra.mxu0 0.0
    %1374 = vmatprep.subr.mxu0 0.0
    %1375 = vmatpush1.xpose.msra.mxu0 0.0
    %1376 = vmatprep.subr.mxu0 0.0
    %1377 = vmatpush1.xpose.msra.mxu0 0.0
    %1378 = vmatprep.subr.mxu0 0.0
    %1379 = vmatpush1.xpose.msra.mxu0 0.0
    %1380 = vmatprep.subr.mxu0 0.0
    %1381 = vmatpush1.xpose.msra.mxu0 0.0
    %1382 = vmatprep.subr.mxu0 0.0
    %1383 = vmatpush1.xpose.msra.mxu0 0.0
    %1384 = vmatprep.mubr.f32.mxu0 0.0
    %1385 = vmatmul.mubr.f32.gmra.mrb[0].mxu0 %v1312
    %v1386 = vpop.f32.mrb[0].mxu0
    %v1387 = vadd.f32 0.0, %v1386
    %v1388 = vpop.f32.mrb[0].mxu0
    %1389 = vmatprep.mubr.f32.mxu0 0.0
    %1390 = vmatmul.mubr.f32.gmra.mrb[0].mxu0 %v1314
    %v1391 = vpop.f32.mrb[0].mxu0
    %v1392 = vadd.f32 0.0, %v1391
    %v1393 = vpop.f32.mrb[0].mxu0
    %1394 = vdwg.mxu0
    %v1395 = vmul.f32 %v1296, 0.35355338
    %v1396 = vmul.f32 %v1301, 0.35355338
    %v1397 = vmul.f32 %v1387, 0.35355338
    %v1398 = vmul.f32 %v1392, 0.35355338
    %v1399 = vadd.f32 %v1395, %v65
    %v1400 = vadd.f32 %v1396, %v66
    %v1401 = vadd.f32 %v1397, %v67
    %v1402 = vadd.f32 %v1398, %v68
    %v1403 = vsel %vm392, %v1399, -inf
    %1404 = vmax.xlane.f32.xlu0 %v1403
    %v1405 = vpop.xlane.xlu0 %1404
    %v1406 = vsel %vm392, %v1400, -inf
    %1407 = vmax.xlane.f32.xlu0 %v1406
    %v1408 = vpop.xlane.xlu0 %1407
    %v1409 = vsel %vm392, %v1401, -inf
    %1410 = vmax.xlane.f32.xlu0 %v1409
    %v1411 = vpop.xlane.xlu0 %1410
    %v1412 = vsel %vm392, %v1402, -inf
    %1413 = vmax.xlane.f32.xlu0 %v1412
    %v1414 = vpop.xlane.xlu0 %1413
    %v1415 = vsub.f32 %v1399, %v1405
    %v1416 = vsub.f32 %v1400, %v1408
    %v1417 = vsub.f32 %v1401, %v1411
    %v1418 = vsub.f32 %v1402, %v1414
    %v1419 = vmul.f32 %v1415, 1.442695
    %v1420 = vpow.pop %v1419
    %v1421 = vmul.f32 %v1416, 1.442695
    %v1422 = vpow.pop %v1421
    %v1423 = vmul.f32 %v1417, 1.442695
    %v1424 = vpow.pop %v1423
    %v1425 = vmul.f32 %v1418, 1.442695
    %v1426 = vpow.pop %v1425
    %v1427 = vsel %vm392, %v1420, 0.0
    %1428 = vadd.xlane.f32.xlu0 %v1427
    %v1429 = vpop.xlane.xlu0 %1428
    %v1430 = vsel %vm392, %v1422, 0.0
    %1431 = vadd.xlane.f32.xlu0 %v1430
    %v1432 = vpop.xlane.xlu0 %1431
    %v1433 = vsel %vm392, %v1424, 0.0
    %1434 = vadd.xlane.f32.xlu0 %v1433
    %v1435 = vpop.xlane.xlu0 %1434
    %v1436 = vsel %vm392, %v1426, 0.0
    %1437 = vadd.xlane.f32.xlu0 %v1436
    %v1438 = vpop.xlane.xlu0 %1437
    %v1439 = vrcp.pop %v1429
    %v1440 = vrcp.pop %v1432
    %v1441 = vrcp.pop %v1435
    %v1442 = vrcp.pop %v1438
    %v1443 = vmul.f32 %v1420, %v1439
    %v1444 = vmul.f32 %v1422, %v1440
    %v1445 = vmul.f32 %v1424, %v1441
    %v1446 = vmul.f32 %v1426, %v1442
    %1447 = vrot.lane.b32.xlu0 %v187, 48
    %v1448 = vpop.permute.xlu0 %1447
    %1449 = vrot.lane.b32.xlu0 %v192, 48
    %v1450 = vpop.permute.xlu0 %1449
    %v1454 = vsel %vm392, %v1443, 0
    %v1457 = vsel %vm392, %v1444, 0
    %1459 = vmatprep.subr.mxu0 0.0
    %1460 = vmatpush1.msra.mxu0 %v1448
    %1461 = vmatprep.subr.mxu0 0.0
    %1462 = vmatpush1.msra.mxu0 %v1450
    %1463 = vmatprep.subr.mxu0 0.0
    %1464 = vmatpush1.msra.mxu0 0.0
    %1465 = vmatprep.subr.mxu0 0.0
    %1466 = vmatpush1.msra.mxu0 0.0
    %1467 = vmatprep.subr.mxu0 0.0
    %1468 = vmatpush1.msra.mxu0 0.0
    %1469 = vmatprep.subr.mxu0 0.0
    %1470 = vmatpush1.msra.mxu0 0.0
    %1471 = vmatprep.subr.mxu0 0.0
    %1472 = vmatpush1.msra.mxu0 0.0
    %1473 = vmatprep.subr.mxu0 0.0
    %1474 = vmatpush1.msra.mxu0 0.0
    %1475 = vmatprep.subr.mxu0 0.0
    %1476 = vmatpush1.msra.mxu0 0.0
    %1477 = vmatprep.subr.mxu0 0.0
    %1478 = vmatpush1.msra.mxu0 0.0
    %1479 = vmatprep.subr.mxu0 0.0
    %1480 = vmatpush1.msra.mxu0 0.0
    %1481 = vmatprep.subr.mxu0 0.0
    %1482 = vmatpush1.msra.mxu0 0.0
    %1483 = vmatprep.subr.mxu0 0.0
    %1484 = vmatpush1.msra.mxu0 0.0
    %1485 = vmatprep.subr.mxu0 0.0
    %1486 = vmatpush1.msra.mxu0 0.0
    %1487 = vmatprep.subr.mxu0 0.0
    %1488 = vmatpush1.msra.mxu0 0.0
    %1489 = vmatprep.subr.mxu0 0.0
    %1490 = vmatpush1.msra.mxu0 0.0
    %1491 = vmatprep.subr.mxu0 0.0
    %1492 = vmatpush1.msra.mxu0 0.0
    %1493 = vmatprep.subr.mxu0 0.0
    %1494 = vmatpush1.msra.mxu0 0.0
    %1495 = vmatprep.subr.mxu0 0.0
    %1496 = vmatpush1.msra.mxu0 0.0
    %1497 = vmatprep.subr.mxu0 0.0
    %1498 = vmatpush1.msra.mxu0 0.0
    %1499 = vmatprep.subr.mxu0 0.0
    %1500 = vmatpush1.msra.mxu0 0.0
    %1501 = vmatprep.subr.mxu0 0.0
    %1502 = vmatpush1.msra.mxu0 0.0
    %1503 = vmatprep.subr.mxu0 0.0
    %1504 = vmatpush1.msra.mxu0 0.0
    %1505 = vmatprep.subr.mxu0 0.0
    %1506 = vmatpush1.msra.mxu0 0.0
    %1507 = vmatprep.subr.mxu0 0.0
    %1508 = vmatpush1.msra.mxu0 0.0
    %1509 = vmatprep.subr.mxu0 0.0
    %1510 = vmatpush1.msra.mxu0 0.0
    %1511 = vmatprep.subr.mxu0 0.0
    %1512 = vmatpush1.msra.mxu0 0.0
    %1513 = vmatprep.subr.mxu0 0.0
    %1514 = vmatpush1.msra.mxu0 0.0
    %1515 = vmatprep.subr.mxu0 0.0
    %1516 = vmatpush1.msra.mxu0 0.0
    %1517 = vmatprep.subr.mxu0 0.0
    %1518 = vmatpush1.msra.mxu0 0.0
    %1519 = vmatprep.subr.mxu0 0.0
    %1520 = vmatpush1.msra.mxu0 0.0
    %1521 = vmatprep.subr.mxu0 0.0
    %1522 = vmatpush1.msra.mxu0 0.0
    %1523 = vmatprep.mubr.f32.mxu0 0.0
    %1524 = vmatmul.mubr.f32.gmra.mrb[0].mxu0 %v1454
    %v1525 = vpop.f32.mrb[0].mxu0
    %v1526 = vadd.f32 0.0, %v1525
    %v1527 = vpop.f32.mrb[0].mxu0
    %1528 = vmatprep.mubr.f32.mxu0 0.0
    %1529 = vmatmul.mubr.f32.gmra.mrb[0].mxu0 %v1457
    %v1530 = vpop.f32.mrb[0].mxu0
    %v1531 = vadd.f32 0.0, %v1530
    %v1532 = vpop.f32.mrb[0].mxu0
    %1533 = vdwg.mxu0
    %1534 = vrot.lane.b32.xlu0 %v197, 48
    %v1535 = vpop.permute.xlu0 %1534
    %1536 = vrot.lane.b32.xlu0 %v202, 48
    %v1537 = vpop.permute.xlu0 %1536
    %v1541 = vsel %vm392, %v1445, 0
    %v1544 = vsel %vm392, %v1446, 0
    %1546 = vmatprep.subr.mxu0 0.0
    %1547 = vmatpush1.msra.mxu0 %v1535
    %1548 = vmatprep.subr.mxu0 0.0
    %1549 = vmatpush1.msra.mxu0 %v1537
    %1550 = vmatprep.subr.mxu0 0.0
    %1551 = vmatpush1.msra.mxu0 0.0
    %1552 = vmatprep.subr.mxu0 0.0
    %1553 = vmatpush1.msra.mxu0 0.0
    %1554 = vmatprep.subr.mxu0 0.0
    %1555 = vmatpush1.msra.mxu0 0.0
    %1556 = vmatprep.subr.mxu0 0.0
    %1557 = vmatpush1.msra.mxu0 0.0
    %1558 = vmatprep.subr.mxu0 0.0
    %1559 = vmatpush1.msra.mxu0 0.0
    %1560 = vmatprep.subr.mxu0 0.0
    %1561 = vmatpush1.msra.mxu0 0.0
    %1562 = vmatprep.subr.mxu0 0.0
    %1563 = vmatpush1.msra.mxu0 0.0
    %1564 = vmatprep.subr.mxu0 0.0
    %1565 = vmatpush1.msra.mxu0 0.0
    %1566 = vmatprep.subr.mxu0 0.0
    %1567 = vmatpush1.msra.mxu0 0.0
    %1568 = vmatprep.subr.mxu0 0.0
    %1569 = vmatpush1.msra.mxu0 0.0
    %1570 = vmatprep.subr.mxu0 0.0
    %1571 = vmatpush1.msra.mxu0 0.0
    %1572 = vmatprep.subr.mxu0 0.0
    %1573 = vmatpush1.msra.mxu0 0.0
    %1574 = vmatprep.subr.mxu0 0.0
    %1575 = vmatpush1.msra.mxu0 0.0
    %1576 = vmatprep.subr.mxu0 0.0
    %1577 = vmatpush1.msra.mxu0 0.0
    %1578 = vmatprep.subr.mxu0 0.0
    %1579 = vmatpush1.msra.mxu0 0.0
    %1580 = vmatprep.subr.mxu0 0.0
    %1581 = vmatpush1.msra.mxu0 0.0
    %1582 = vmatprep.subr.mxu0 0.0
    %1583 = vmatpush1.msra.mxu0 0.0
    %1584 = vmatprep.subr.mxu0 0.0
    %1585 = vmatpush1.msra.mxu0 0.0
    %1586 = vmatprep.subr.mxu0 0.0
    %1587 = vmatpush1.msra.mxu0 0.0
    %1588 = vmatprep.subr.mxu0 0.0
    %1589 = vmatpush1.msra.mxu0 0.0
    %1590 = vmatprep.subr.mxu0 0.0
    %1591 = vmatpush1.msra.mxu0 0.0
    %1592 = vmatprep.subr.mxu0 0.0
    %1593 = vmatpush1.msra.mxu0 0.0
    %1594 = vmatprep.subr.mxu0 0.0
    %1595 = vmatpush1.msra.mxu0 0.0
    %1596 = vmatprep.subr.mxu0 0.0
    %1597 = vmatpush1.msra.mxu0 0.0
    %1598 = vmatprep.subr.mxu0 0.0
    %1599 = vmatpush1.msra.mxu0 0.0
    %1600 = vmatprep.subr.mxu0 0.0
    %1601 = vmatpush1.msra.mxu0 0.0
    %1602 = vmatprep.subr.mxu0 0.0
    %1603 = vmatpush1.msra.mxu0 0.0
    %1604 = vmatprep.subr.mxu0 0.0
    %1605 = vmatpush1.msra.mxu0 0.0
    %1606 = vmatprep.subr.mxu0 0.0
    %1607 = vmatpush1.msra.mxu0 0.0
    %1608 = vmatprep.subr.mxu0 0.0
    %1609 = vmatpush1.msra.mxu0 0.0
    %1610 = vmatprep.mubr.f32.mxu0 0.0
    %1611 = vmatmul.mubr.f32.gmra.mrb[0].mxu0 %v1541
    %v1612 = vpop.f32.mrb[0].mxu0
    %v1613 = vadd.f32 0.0, %v1612
    %v1614 = vpop.f32.mrb[0].mxu0
    %1615 = vmatprep.mubr.f32.mxu0 0.0
    %1616 = vmatmul.mubr.f32.gmra.mrb[0].mxu0 %v1544
    %v1617 = vpop.f32.mrb[0].mxu0
    %v1618 = vadd.f32 0.0, %v1617
    %v1619 = vpop.f32.mrb[0].mxu0
    %1620 = vdwg.mxu0
    %v1622 = vsel %vm211, %v1526, 0
    %v1625 = vsel %vm211, %v1531, 0
    %v1628 = vsel %vm211, %v1613, 0
    %v1631 = vsel %vm211, %v1618, 0
    %1633 = vmatprep.subr.mxu0 0.0
    %1634 = vmatpush1.msra.mxu0 %v79
    %1635 = vmatprep.subr.mxu0 0.0
    %1636 = vmatpush1.msra.mxu0 0.0
    %1637 = vmatprep.subr.mxu0 0.0
    %1638 = vmatpush1.msra.mxu0 0.0
    %1639 = vmatprep.subr.mxu0 0.0
    %1640 = vmatpush1.msra.mxu0 0.0
    %1641 = vmatprep.subr.mxu0 0.0
    %1642 = vmatpush1.msra.mxu0 0.0
    %1643 = vmatprep.subr.mxu0 0.0
    %1644 = vmatpush1.msra.mxu0 0.0
    %1645 = vmatprep.subr.mxu0 0.0
    %1646 = vmatpush1.msra.mxu0 0.0
    %1647 = vmatprep.subr.mxu0 0.0
    %1648 = vmatpush1.msra.mxu0 0.0
    %1649 = vmatprep.subr.mxu0 0.0
    %1650 = vmatpush1.msra.mxu0 0.0
    %1651 = vmatprep.subr.mxu0 0.0
    %1652 = vmatpush1.msra.mxu0 0.0
    %1653 = vmatprep.subr.mxu0 0.0
    %1654 = vmatpush1.msra.mxu0 0.0
    %1655 = vmatprep.subr.mxu0 0.0
    %1656 = vmatpush1.msra.mxu0 0.0
    %1657 = vmatprep.subr.mxu0 0.0
    %1658 = vmatpush1.msra.mxu0 0.0
    %1659 = vmatprep.subr.mxu0 0.0
    %1660 = vmatpush1.msra.mxu0 0.0
    %1661 = vmatprep.subr.mxu0 0.0
    %1662 = vmatpush1.msra.mxu0 0.0
    %1663 = vmatprep.subr.mxu0 0.0
    %1664 = vmatpush1.msra.mxu0 0.0
    %1665 = vmatprep.subr.mxu0 0.0
    %1666 = vmatpush1.msra.mxu0 0.0
    %1667 = vmatprep.subr.mxu0 0.0
    %1668 = vmatpush1.msra.mxu0 0.0
    %1669 = vmatprep.subr.mxu0 0.0
    %1670 = vmatpush1.msra.mxu0 0.0
    %1671 = vmatprep.subr.mxu0 0.0
    %1672 = vmatpush1.msra.mxu0 0.0
    %1673 = vmatprep.subr.mxu0 0.0
    %1674 = vmatpush1.msra.mxu0 0.0
    %1675 = vmatprep.subr.mxu0 0.0
    %1676 = vmatpush1.msra.mxu0 0.0
    %1677 = vmatprep.subr.mxu0 0.0
    %1678 = vmatpush1.msra.mxu0 0.0
    %1679 = vmatprep.subr.mxu0 0.0
    %1680 = vmatpush1.msra.mxu0 0.0
    %1681 = vmatprep.subr.mxu0 0.0
    %1682 = vmatpush1.msra.mxu0 0.0
    %1683 = vmatprep.subr.mxu0 0.0
    %1684 = vmatpush1.msra.mxu0 0.0
    %1685 = vmatprep.subr.mxu0 0.0
    %1686 = vmatpush1.msra.mxu0 0.0
    %1687 = vmatprep.subr.mxu0 0.0
    %1688 = vmatpush1.msra.mxu0 0.0
    %1689 = vmatprep.subr.mxu0 0.0
    %1690 = vmatpush1.msra.mxu0 0.0
    %1691 = vmatprep.subr.mxu0 0.0
    %1692 = vmatpush1.msra.mxu0 0.0
    %1693 = vmatprep.subr.mxu0 0.0
    %1694 = vmatpush1.msra.mxu0 0.0
    %1695 = vmatprep.subr.mxu0 0.0
    %1696 = vmatpush1.msra.mxu0 0.0
    %1697 = vmatprep.mubr.f32.mxu0 0.0
    %1698 = vmatmul.mubr.f32.gmra.mrb[0].mxu0 %v1622
    %v1699 = vpop.f32.mrb[0].mxu0
    %v1700 = vadd.f32 0.0, %v1699
    %v1701 = vpop.f32.mrb[0].mxu0
    %1702 = vmatprep.mubr.f32.mxu0 0.0
    %1703 = vmatmul.mubr.f32.gmra.mrb[0].mxu0 %v1625
    %v1704 = vpop.f32.mrb[0].mxu0
    %v1705 = vadd.f32 0.0, %v1704
    %v1706 = vpop.f32.mrb[0].mxu0
    %1707 = vmatprep.mubr.f32.mxu0 0.0
    %1708 = vmatmul.mubr.f32.gmra.mrb[0].mxu0 %v1628
    %v1709 = vpop.f32.mrb[0].mxu0
    %v1710 = vadd.f32 0.0, %v1709
    %v1711 = vpop.f32.mrb[0].mxu0
    %1712 = vmatprep.mubr.f32.mxu0 0.0
    %1713 = vmatmul.mubr.f32.gmra.mrb[0].mxu0 %v1631
    %v1714 = vpop.f32.mrb[0].mxu0
    %v1715 = vadd.f32 0.0, %v1714
    %v1716 = vpop.f32.mrb[0].mxu0
    %1717 = vdwg.mxu0
    %v1718 = vadd.f32 %v1195, %v1700
    %v1719 = vadd.f32 %v1200, %v1705
    %v1720 = vadd.f32 %v1205, %v1710
    %v1721 = vadd.f32 %v1210, %v1715
    %1722 = vrot.lane.b32.xlu0 %v187, 104
    %v1723 = vpop.permute.xlu0 %1722
    %1724 = vrot.lane.b32.xlu0 %v192, 104
    %v1725 = vpop.permute.xlu0 %1724
    %1726 = vrot.lane.b32.xlu0 %v187, 72
    %v1727 = vpop.permute.xlu0 %1726
    %1728 = vrot.lane.b32.xlu0 %v192, 72
    %v1729 = vpop.permute.xlu0 %1728
    %v1730 = vsel %vm211, %v1723, 0
    %v1732 = vsel %vm211, %v1725, 0
    %v1734 = vsel %vm211, %v1727, 0
    %v1736 = vsel %vm211, %v1729, 0
    %1738 = vmatprep.subr.mxu0 0.0
    %1739 = vmatpush1.xpose.msra.mxu0 %v1734
    %1740 = vmatprep.subr.mxu0 0.0
    %1741 = vmatpush1.xpose.msra.mxu0 %v1736
    %1742 = vmatprep.subr.mxu0 0.0
    %1743 = vmatpush1.xpose.msra.mxu0 0.0
    %1744 = vmatprep.subr.mxu0 0.0
    %1745 = vmatpush1.xpose.msra.mxu0 0.0
    %1746 = vmatprep.subr.mxu0 0.0
    %1747 = vmatpush1.xpose.msra.mxu0 0.0
    %1748 = vmatprep.subr.mxu0 0.0
    %1749 = vmatpush1.xpose.msra.mxu0 0.0
    %1750 = vmatprep.subr.mxu0 0.0
    %1751 = vmatpush1.xpose.msra.mxu0 0.0
    %1752 = vmatprep.subr.mxu0 0.0
    %1753 = vmatpush1.xpose.msra.mxu0 0.0
    %1754 = vmatprep.subr.mxu0 0.0
    %1755 = vmatpush1.xpose.msra.mxu0 0.0
    %1756 = vmatprep.subr.mxu0 0.0
    %1757 = vmatpush1.xpose.msra.mxu0 0.0
    %1758 = vmatprep.subr.mxu0 0.0
    %1759 = vmatpush1.xpose.msra.mxu0 0.0
    %1760 = vmatprep.subr.mxu0 0.0
    %1761 = vmatpush1.xpose.msra.mxu0 0.0
    %1762 = vmatprep.subr.mxu0 0.0
    %1763 = vmatpush1.xpose.msra.mxu0 0.0
    %1764 = vmatprep.subr.mxu0 0.0
    %1765 = vmatpush1.xpose.msra.mxu0 0.0
    %1766 = vmatprep.subr.mxu0 0.0
    %1767 = vmatpush1.xpose.msra.mxu0 0.0
    %1768 = vmatprep.subr.mxu0 0.0
    %1769 = vmatpush1.xpose.msra.mxu0 0.0
    %1770 = vmatprep.subr.mxu0 0.0
    %1771 = vmatpush1.xpose.msra.mxu0 0.0
    %1772 = vmatprep.subr.mxu0 0.0
    %1773 = vmatpush1.xpose.msra.mxu0 0.0
    %1774 = vmatprep.subr.mxu0 0.0
    %1775 = vmatpush1.xpose.msra.mxu0 0.0
    %1776 = vmatprep.subr.mxu0 0.0
    %1777 = vmatpush1.xpose.msra.mxu0 0.0
    %1778 = vmatprep.subr.mxu0 0.0
    %1779 = vmatpush1.xpose.msra.mxu0 0.0
    %1780 = vmatprep.subr.mxu0 0.0
    %1781 = vmatpush1.xpose.msra.mxu0 0.0
    %1782 = vmatprep.subr.mxu0 0.0
    %1783 = vmatpush1.xpose.msra.mxu0 0.0
    %1784 = vmatprep.subr.mxu0 0.0
    %1785 = vmatpush1.xpose.msra.mxu0 0.0
    %1786 = vmatprep.subr.mxu0 0.0
    %1787 = vmatpush1.xpose.msra.mxu0 0.0
    %1788 = vmatprep.subr.mxu0 0.0
    %1789 = vmatpush1.xpose.msra.mxu0 0.0
    %1790 = vmatprep.subr.mxu0 0.0
    %1791 = vmatpush1.xpose.msra.mxu0 0.0
    %1792 = vmatprep.subr.mxu0 0.0
    %1793 = vmatpush1.xpose.msra.mxu0 0.0
    %1794 = vmatprep.subr.mxu0 0.0
    %1795 = vmatpush1.xpose.msra.mxu0 0.0
    %1796 = vmatprep.subr.mxu0 0.0
    %1797 = vmatpush1.xpose.msra.mxu0 0.0
    %1798 = vmatprep.subr.mxu0 0.0
    %1799 = vmatpush1.xpose.msra.mxu0 0.0
    %1800 = vmatprep.subr.mxu0 0.0
    %1801 = vmatpush1.xpose.msra.mxu0 0.0
    %1802 = vmatprep.mubr.f32.mxu0 0.0
    %1803 = vmatmul.mubr.f32.gmra.mrb[0].mxu0 %v1730
    %v1804 = vpop.f32.mrb[0].mxu0
    %v1805 = vadd.f32 0.0, %v1804
    %v1806 = vpop.f32.mrb[0].mxu0
    %1807 = vmatprep.mubr.f32.mxu0 0.0
    %1808 = vmatmul.mubr.f32.gmra.mrb[0].mxu0 %v1732
    %v1809 = vpop.f32.mrb[0].mxu0
    %v1810 = vadd.f32 0.0, %v1809
    %v1811 = vpop.f32.mrb[0].mxu0
    %1812 = vdwg.mxu0
    %1813 = vrot.lane.b32.xlu0 %v197, 104
    %v1814 = vpop.permute.xlu0 %1813
    %1815 = vrot.lane.b32.xlu0 %v202, 104
    %v1816 = vpop.permute.xlu0 %1815
    %1817 = vrot.lane.b32.xlu0 %v197, 72
    %v1818 = vpop.permute.xlu0 %1817
    %1819 = vrot.lane.b32.xlu0 %v202, 72
    %v1820 = vpop.permute.xlu0 %1819
    %v1821 = vsel %vm211, %v1814, 0
    %v1823 = vsel %vm211, %v1816, 0
    %v1825 = vsel %vm211, %v1818, 0
    %v1827 = vsel %vm211, %v1820, 0
    %1829 = vmatprep.subr.mxu0 0.0
    %1830 = vmatpush1.xpose.msra.mxu0 %v1825
    %1831 = vmatprep.subr.mxu0 0.0
    %1832 = vmatpush1.xpose.msra.mxu0 %v1827
    %1833 = vmatprep.subr.mxu0 0.0
    %1834 = vmatpush1.xpose.msra.mxu0 0.0
    %1835 = vmatprep.subr.mxu0 0.0
    %1836 = vmatpush1.xpose.msra.mxu0 0.0
    %1837 = vmatprep.subr.mxu0 0.0
    %1838 = vmatpush1.xpose.msra.mxu0 0.0
    %1839 = vmatprep.subr.mxu0 0.0
    %1840 = vmatpush1.xpose.msra.mxu0 0.0
    %1841 = vmatprep.subr.mxu0 0.0
    %1842 = vmatpush1.xpose.msra.mxu0 0.0
    %1843 = vmatprep.subr.mxu0 0.0
    %1844 = vmatpush1.xpose.msra.mxu0 0.0
    %1845 = vmatprep.subr.mxu0 0.0
    %1846 = vmatpush1.xpose.msra.mxu0 0.0
    %1847 = vmatprep.subr.mxu0 0.0
    %1848 = vmatpush1.xpose.msra.mxu0 0.0
    %1849 = vmatprep.subr.mxu0 0.0
    %1850 = vmatpush1.xpose.msra.mxu0 0.0
    %1851 = vmatprep.subr.mxu0 0.0
    %1852 = vmatpush1.xpose.msra.mxu0 0.0
    %1853 = vmatprep.subr.mxu0 0.0
    %1854 = vmatpush1.xpose.msra.mxu0 0.0
    %1855 = vmatprep.subr.mxu0 0.0
    %1856 = vmatpush1.xpose.msra.mxu0 0.0
    %1857 = vmatprep.subr.mxu0 0.0
    %1858 = vmatpush1.xpose.msra.mxu0 0.0
    %1859 = vmatprep.subr.mxu0 0.0
    %1860 = vmatpush1.xpose.msra.mxu0 0.0
    %1861 = vmatprep.subr.mxu0 0.0
    %1862 = vmatpush1.xpose.msra.mxu0 0.0
    %1863 = vmatprep.subr.mxu0 0.0
    %1864 = vmatpush1.xpose.msra.mxu0 0.0
    %1865 = vmatprep.subr.mxu0 0.0
    %1866 = vmatpush1.xpose.msra.mxu0 0.0
    %1867 = vmatprep.subr.mxu0 0.0
    %1868 = vmatpush1.xpose.msra.mxu0 0.0
    %1869 = vmatprep.subr.mxu0 0.0
    %1870 = vmatpush1.xpose.msra.mxu0 0.0
    %1871 = vmatprep.subr.mxu0 0.0
    %1872 = vmatpush1.xpose.msra.mxu0 0.0
    %1873 = vmatprep.subr.mxu0 0.0
    %1874 = vmatpush1.xpose.msra.mxu0 0.0
    %1875 = vmatprep.subr.mxu0 0.0
    %1876 = vmatpush1.xpose.msra.mxu0 0.0
    %1877 = vmatprep.subr.mxu0 0.0
    %1878 = vmatpush1.xpose.msra.mxu0 0.0
    %1879 = vmatprep.subr.mxu0 0.0
    %1880 = vmatpush1.xpose.msra.mxu0 0.0
    %1881 = vmatprep.subr.mxu0 0.0
    %1882 = vmatpush1.xpose.msra.mxu0 0.0
    %1883 = vmatprep.subr.mxu0 0.0
    %1884 = vmatpush1.xpose.msra.mxu0 0.0
    %1885 = vmatprep.subr.mxu0 0.0
    %1886 = vmatpush1.xpose.msra.mxu0 0.0
    %1887 = vmatprep.subr.mxu0 0.0
    %1888 = vmatpush1.xpose.msra.mxu0 0.0
    %1889 = vmatprep.subr.mxu0 0.0
    %1890 = vmatpush1.xpose.msra.mxu0 0.0
    %1891 = vmatprep.subr.mxu0 0.0
    %1892 = vmatpush1.xpose.msra.mxu0 0.0
    %1893 = vmatprep.mubr.f32.mxu0 0.0
    %1894 = vmatmul.mubr.f32.gmra.mrb[0].mxu0 %v1821
    %v1895 = vpop.f32.mrb[0].mxu0
    %v1896 = vadd.f32 0.0, %v1895
    %v1897 = vpop.f32.mrb[0].mxu0
    %1898 = vmatprep.mubr.f32.mxu0 0.0
    %1899 = vmatmul.mubr.f32.gmra.mrb[0].mxu0 %v1823
    %v1900 = vpop.f32.mrb[0].mxu0
    %v1901 = vadd.f32 0.0, %v1900
    %v1902 = vpop.f32.mrb[0].mxu0
    %1903 = vdwg.mxu0
    %v1904 = vmul.f32 %v1805, 0.35355338
    %v1905 = vmul.f32 %v1810, 0.35355338
    %v1906 = vmul.f32 %v1896, 0.35355338
    %v1907 = vmul.f32 %v1901, 0.35355338
    %v1908 = vadd.f32 %v1904, %v65
    %v1909 = vadd.f32 %v1905, %v66
    %v1910 = vadd.f32 %v1906, %v67
    %v1911 = vadd.f32 %v1907, %v68
    %v1912 = vsel %vm392, %v1908, -inf
    %1913 = vmax.xlane.f32.xlu0 %v1912
    %v1914 = vpop.xlane.xlu0 %1913
    %v1915 = vsel %vm392, %v1909, -inf
    %1916 = vmax.xlane.f32.xlu0 %v1915
    %v1917 = vpop.xlane.xlu0 %1916
    %v1918 = vsel %vm392, %v1910, -inf
    %1919 = vmax.xlane.f32.xlu0 %v1918
    %v1920 = vpop.xlane.xlu0 %1919
    %v1921 = vsel %vm392, %v1911, -inf
    %1922 = vmax.xlane.f32.xlu0 %v1921
    %v1923 = vpop.xlane.xlu0 %1922
    %v1924 = vsub.f32 %v1908, %v1914
    %v1925 = vsub.f32 %v1909, %v1917
    %v1926 = vsub.f32 %v1910, %v1920
    %v1927 = vsub.f32 %v1911, %v1923
    %v1928 = vmul.f32 %v1924, 1.442695
    %v1929 = vpow.pop %v1928
    %v1930 = vmul.f32 %v1925, 1.442695
    %v1931 = vpow.pop %v1930
    %v1932 = vmul.f32 %v1926, 1.442695
    %v1933 = vpow.pop %v1932
    %v1934 = vmul.f32 %v1927, 1.442695
    %v1935 = vpow.pop %v1934
    %v1936 = vsel %vm392, %v1929, 0.0
    %1937 = vadd.xlane.f32.xlu0 %v1936
    %v1938 = vpop.xlane.xlu0 %1937
    %v1939 = vsel %vm392, %v1931, 0.0
    %1940 = vadd.xlane.f32.xlu0 %v1939
    %v1941 = vpop.xlane.xlu0 %1940
    %v1942 = vsel %vm392, %v1933, 0.0
    %1943 = vadd.xlane.f32.xlu0 %v1942
    %v1944 = vpop.xlane.xlu0 %1943
    %v1945 = vsel %vm392, %v1935, 0.0
    %1946 = vadd.xlane.f32.xlu0 %v1945
    %v1947 = vpop.xlane.xlu0 %1946
    %v1948 = vrcp.pop %v1938
    %v1949 = vrcp.pop %v1941
    %v1950 = vrcp.pop %v1944
    %v1951 = vrcp.pop %v1947
    %v1952 = vmul.f32 %v1929, %v1948
    %v1953 = vmul.f32 %v1931, %v1949
    %v1954 = vmul.f32 %v1933, %v1950
    %v1955 = vmul.f32 %v1935, %v1951
    %1956 = vrot.lane.b32.xlu0 %v187, 40
    %v1957 = vpop.permute.xlu0 %1956
    %1958 = vrot.lane.b32.xlu0 %v192, 40
    %v1959 = vpop.permute.xlu0 %1958
    %v1963 = vsel %vm392, %v1952, 0
    %v1966 = vsel %vm392, %v1953, 0
    %1968 = vmatprep.subr.mxu0 0.0
    %1969 = vmatpush1.msra.mxu0 %v1957
    %1970 = vmatprep.subr.mxu0 0.0
    %1971 = vmatpush1.msra.mxu0 %v1959
    %1972 = vmatprep.subr.mxu0 0.0
    %1973 = vmatpush1.msra.mxu0 0.0
    %1974 = vmatprep.subr.mxu0 0.0
    %1975 = vmatpush1.msra.mxu0 0.0
    %1976 = vmatprep.subr.mxu0 0.0
    %1977 = vmatpush1.msra.mxu0 0.0
    %1978 = vmatprep.subr.mxu0 0.0
    %1979 = vmatpush1.msra.mxu0 0.0
    %1980 = vmatprep.subr.mxu0 0.0
    %1981 = vmatpush1.msra.mxu0 0.0
    %1982 = vmatprep.subr.mxu0 0.0
    %1983 = vmatpush1.msra.mxu0 0.0
    %1984 = vmatprep.subr.mxu0 0.0
    %1985 = vmatpush1.msra.mxu0 0.0
    %1986 = vmatprep.subr.mxu0 0.0
    %1987 = vmatpush1.msra.mxu0 0.0
    %1988 = vmatprep.subr.mxu0 0.0
    %1989 = vmatpush1.msra.mxu0 0.0
    %1990 = vmatprep.subr.mxu0 0.0
    %1991 = vmatpush1.msra.mxu0 0.0
    %1992 = vmatprep.subr.mxu0 0.0
    %1993 = vmatpush1.msra.mxu0 0.0
    %1994 = vmatprep.subr.mxu0 0.0
    %1995 = vmatpush1.msra.mxu0 0.0
    %1996 = vmatprep.subr.mxu0 0.0
    %1997 = vmatpush1.msra.mxu0 0.0
    %1998 = vmatprep.subr.mxu0 0.0
    %1999 = vmatpush1.msra.mxu0 0.0
    %2000 = vmatprep.subr.mxu0 0.0
    %2001 = vmatpush1.msra.mxu0 0.0
    %2002 = vmatprep.subr.mxu0 0.0
    %2003 = vmatpush1.msra.mxu0 0.0
    %2004 = vmatprep.subr.mxu0 0.0
    %2005 = vmatpush1.msra.mxu0 0.0
    %2006 = vmatprep.subr.mxu0 0.0
    %2007 = vmatpush1.msra.mxu0 0.0
    %2008 = vmatprep.subr.mxu0 0.0
    %2009 = vmatpush1.msra.mxu0 0.0
    %2010 = vmatprep.subr.mxu0 0.0
    %2011 = vmatpush1.msra.mxu0 0.0
    %2012 = vmatprep.subr.mxu0 0.0
    %2013 = vmatpush1.msra.mxu0 0.0
    %2014 = vmatprep.subr.mxu0 0.0
    %2015 = vmatpush1.msra.mxu0 0.0
    %2016 = vmatprep.subr.mxu0 0.0
    %2017 = vmatpush1.msra.mxu0 0.0
    %2018 = vmatprep.subr.mxu0 0.0
    %2019 = vmatpush1.msra.mxu0 0.0
    %2020 = vmatprep.subr.mxu0 0.0
    %2021 = vmatpush1.msra.mxu0 0.0
    %2022 = vmatprep.subr.mxu0 0.0
    %2023 = vmatpush1.msra.mxu0 0.0
    %2024 = vmatprep.subr.mxu0 0.0
    %2025 = vmatpush1.msra.mxu0 0.0
    %2026 = vmatprep.subr.mxu0 0.0
    %2027 = vmatpush1.msra.mxu0 0.0
    %2028 = vmatprep.subr.mxu0 0.0
    %2029 = vmatpush1.msra.mxu0 0.0
    %2030 = vmatprep.subr.mxu0 0.0
    %2031 = vmatpush1.msra.mxu0 0.0
    %2032 = vmatprep.mubr.f32.mxu0 0.0
    %2033 = vmatmul.mubr.f32.gmra.mrb[0].mxu0 %v1963
    %v2034 = vpop.f32.mrb[0].mxu0
    %v2035 = vadd.f32 0.0, %v2034
    %v2036 = vpop.f32.mrb[0].mxu0
    %2037 = vmatprep.mubr.f32.mxu0 0.0
    %2038 = vmatmul.mubr.f32.gmra.mrb[0].mxu0 %v1966
    %v2039 = vpop.f32.mrb[0].mxu0
    %v2040 = vadd.f32 0.0, %v2039
    %v2041 = vpop.f32.mrb[0].mxu0
    %2042 = vdwg.mxu0
    %2043 = vrot.lane.b32.xlu0 %v197, 40
    %v2044 = vpop.permute.xlu0 %2043
    %2045 = vrot.lane.b32.xlu0 %v202, 40
    %v2046 = vpop.permute.xlu0 %2045
    %v2050 = vsel %vm392, %v1954, 0
    %v2053 = vsel %vm392, %v1955, 0
    %2055 = vmatprep.subr.mxu0 0.0
    %2056 = vmatpush1.msra.mxu0 %v2044
    %2057 = vmatprep.subr.mxu0 0.0
    %2058 = vmatpush1.msra.mxu0 %v2046
    %2059 = vmatprep.subr.mxu0 0.0
    %2060 = vmatpush1.msra.mxu0 0.0
    %2061 = vmatprep.subr.mxu0 0.0
    %2062 = vmatpush1.msra.mxu0 0.0
    %2063 = vmatprep.subr.mxu0 0.0
    %2064 = vmatpush1.msra.mxu0 0.0
    %2065 = vmatprep.subr.mxu0 0.0
    %2066 = vmatpush1.msra.mxu0 0.0
    %2067 = vmatprep.subr.mxu0 0.0
    %2068 = vmatpush1.msra.mxu0 0.0
    %2069 = vmatprep.subr.mxu0 0.0
    %2070 = vmatpush1.msra.mxu0 0.0
    %2071 = vmatprep.subr.mxu0 0.0
    %2072 = vmatpush1.msra.mxu0 0.0
    %2073 = vmatprep.subr.mxu0 0.0
    %2074 = vmatpush1.msra.mxu0 0.0
    %2075 = vmatprep.subr.mxu0 0.0
    %2076 = vmatpush1.msra.mxu0 0.0
    %2077 = vmatprep.subr.mxu0 0.0
    %2078 = vmatpush1.msra.mxu0 0.0
    %2079 = vmatprep.subr.mxu0 0.0
    %2080 = vmatpush1.msra.mxu0 0.0
    %2081 = vmatprep.subr.mxu0 0.0
    %2082 = vmatpush1.msra.mxu0 0.0
    %2083 = vmatprep.subr.mxu0 0.0
    %2084 = vmatpush1.msra.mxu0 0.0
    %2085 = vmatprep.subr.mxu0 0.0
    %2086 = vmatpush1.msra.mxu0 0.0
    %2087 = vmatprep.subr.mxu0 0.0
    %2088 = vmatpush1.msra.mxu0 0.0
    %2089 = vmatprep.subr.mxu0 0.0
    %2090 = vmatpush1.msra.mxu0 0.0
    %2091 = vmatprep.subr.mxu0 0.0
    %2092 = vmatpush1.msra.mxu0 0.0
    %2093 = vmatprep.subr.mxu0 0.0
    %2094 = vmatpush1.msra.mxu0 0.0
    %2095 = vmatprep.subr.mxu0 0.0
    %2096 = vmatpush1.msra.mxu0 0.0
    %2097 = vmatprep.subr.mxu0 0.0
    %2098 = vmatpush1.msra.mxu0 0.0
    %2099 = vmatprep.subr.mxu0 0.0
    %2100 = vmatpush1.msra.mxu0 0.0
    %2101 = vmatprep.subr.mxu0 0.0
    %2102 = vmatpush1.msra.mxu0 0.0
    %2103 = vmatprep.subr.mxu0 0.0
    %2104 = vmatpush1.msra.mxu0 0.0
    %2105 = vmatprep.subr.mxu0 0.0
    %2106 = vmatpush1.msra.mxu0 0.0
    %2107 = vmatprep.subr.mxu0 0.0
    %2108 = vmatpush1.msra.mxu0 0.0
    %2109 = vmatprep.subr.mxu0 0.0
    %2110 = vmatpush1.msra.mxu0 0.0
    %2111 = vmatprep.subr.mxu0 0.0
    %2112 = vmatpush1.msra.mxu0 0.0
    %2113 = vmatprep.subr.mxu0 0.0
    %2114 = vmatpush1.msra.mxu0 0.0
    %2115 = vmatprep.subr.mxu0 0.0
    %2116 = vmatpush1.msra.mxu0 0.0
    %2117 = vmatprep.subr.mxu0 0.0
    %2118 = vmatpush1.msra.mxu0 0.0
    %2119 = vmatprep.mubr.f32.mxu0 0.0
    %2120 = vmatmul.mubr.f32.gmra.mrb[0].mxu0 %v2050
    %v2121 = vpop.f32.mrb[0].mxu0
    %v2122 = vadd.f32 0.0, %v2121
    %v2123 = vpop.f32.mrb[0].mxu0
    %2124 = vmatprep.mubr.f32.mxu0 0.0
    %2125 = vmatmul.mubr.f32.gmra.mrb[0].mxu0 %v2053
    %v2126 = vpop.f32.mrb[0].mxu0
    %v2127 = vadd.f32 0.0, %v2126
    %v2128 = vpop.f32.mrb[0].mxu0
    %2129 = vdwg.mxu0
    %v2131 = vsel %vm211, %v2035, 0
    %v2134 = vsel %vm211, %v2040, 0
    %v2137 = vsel %vm211, %v2122, 0
    %v2140 = vsel %vm211, %v2127, 0
    %2142 = vmatprep.subr.mxu0 0.0
    %2143 = vmatpush1.msra.mxu0 %v80
    %2144 = vmatprep.subr.mxu0 0.0
    %2145 = vmatpush1.msra.mxu0 0.0
    %2146 = vmatprep.subr.mxu0 0.0
    %2147 = vmatpush1.msra.mxu0 0.0
    %2148 = vmatprep.subr.mxu0 0.0
    %2149 = vmatpush1.msra.mxu0 0.0
    %2150 = vmatprep.subr.mxu0 0.0
    %2151 = vmatpush1.msra.mxu0 0.0
    %2152 = vmatprep.subr.mxu0 0.0
    %2153 = vmatpush1.msra.mxu0 0.0
    %2154 = vmatprep.subr.mxu0 0.0
    %2155 = vmatpush1.msra.mxu0 0.0
    %2156 = vmatprep.subr.mxu0 0.0
    %2157 = vmatpush1.msra.mxu0 0.0
    %2158 = vmatprep.subr.mxu0 0.0
    %2159 = vmatpush1.msra.mxu0 0.0
    %2160 = vmatprep.subr.mxu0 0.0
    %2161 = vmatpush1.msra.mxu0 0.0
    %2162 = vmatprep.subr.mxu0 0.0
    %2163 = vmatpush1.msra.mxu0 0.0
    %2164 = vmatprep.subr.mxu0 0.0
    %2165 = vmatpush1.msra.mxu0 0.0
    %2166 = vmatprep.subr.mxu0 0.0
    %2167 = vmatpush1.msra.mxu0 0.0
    %2168 = vmatprep.subr.mxu0 0.0
    %2169 = vmatpush1.msra.mxu0 0.0
    %2170 = vmatprep.subr.mxu0 0.0
    %2171 = vmatpush1.msra.mxu0 0.0
    %2172 = vmatprep.subr.mxu0 0.0
    %2173 = vmatpush1.msra.mxu0 0.0
    %2174 = vmatprep.subr.mxu0 0.0
    %2175 = vmatpush1.msra.mxu0 0.0
    %2176 = vmatprep.subr.mxu0 0.0
    %2177 = vmatpush1.msra.mxu0 0.0
    %2178 = vmatprep.subr.mxu0 0.0
    %2179 = vmatpush1.msra.mxu0 0.0
    %2180 = vmatprep.subr.mxu0 0.0
    %2181 = vmatpush1.msra.mxu0 0.0
    %2182 = vmatprep.subr.mxu0 0.0
    %2183 = vmatpush1.msra.mxu0 0.0
    %2184 = vmatprep.subr.mxu0 0.0
    %2185 = vmatpush1.msra.mxu0 0.0
    %2186 = vmatprep.subr.mxu0 0.0
    %2187 = vmatpush1.msra.mxu0 0.0
    %2188 = vmatprep.subr.mxu0 0.0
    %2189 = vmatpush1.msra.mxu0 0.0
    %2190 = vmatprep.subr.mxu0 0.0
    %2191 = vmatpush1.msra.mxu0 0.0
    %2192 = vmatprep.subr.mxu0 0.0
    %2193 = vmatpush1.msra.mxu0 0.0
    %2194 = vmatprep.subr.mxu0 0.0
    %2195 = vmatpush1.msra.mxu0 0.0
    %2196 = vmatprep.subr.mxu0 0.0
    %2197 = vmatpush1.msra.mxu0 0.0
    %2198 = vmatprep.subr.mxu0 0.0
    %2199 = vmatpush1.msra.mxu0 0.0
    %2200 = vmatprep.subr.mxu0 0.0
    %2201 = vmatpush1.msra.mxu0 0.0
    %2202 = vmatprep.subr.mxu0 0.0
    %2203 = vmatpush1.msra.mxu0 0.0
    %2204 = vmatprep.subr.mxu0 0.0
    %2205 = vmatpush1.msra.mxu0 0.0
    %2206 = vmatprep.mubr.f32.mxu0 0.0
    %2207 = vmatmul.mubr.f32.gmra.mrb[0].mxu0 %v2131
    %v2208 = vpop.f32.mrb[0].mxu0
    %v2209 = vadd.f32 0.0, %v2208
    %v2210 = vpop.f32.mrb[0].mxu0
    %2211 = vmatprep.mubr.f32.mxu0 0.0
    %2212 = vmatmul.mubr.f32.gmra.mrb[0].mxu0 %v2134
    %v2213 = vpop.f32.mrb[0].mxu0
    %v2214 = vadd.f32 0.0, %v2213
    %v2215 = vpop.f32.mrb[0].mxu0
    %2216 = vmatprep.mubr.f32.mxu0 0.0
    %2217 = vmatmul.mubr.f32.gmra.mrb[0].mxu0 %v2137
    %v2218 = vpop.f32.mrb[0].mxu0
    %v2219 = vadd.f32 0.0, %v2218
    %v2220 = vpop.f32.mrb[0].mxu0
    %2221 = vmatprep.mubr.f32.mxu0 0.0
    %2222 = vmatmul.mubr.f32.gmra.mrb[0].mxu0 %v2140
    %v2223 = vpop.f32.mrb[0].mxu0
    %v2224 = vadd.f32 0.0, %v2223
    %v2225 = vpop.f32.mrb[0].mxu0
    %2226 = vdwg.mxu0
    %v2227 = vadd.f32 %v1718, %v2209
    %v2228 = vadd.f32 %v1719, %v2214
    %v2229 = vadd.f32 %v1720, %v2219
    %v2230 = vadd.f32 %v1721, %v2224
    %2232 = vrot.lane.b32.xlu0 %v106, 32
    %v2233 = vpop.permute.xlu0 %2232
    %v2235 = vadd.f32 %v2227, %v2233
    %v2236 = vadd.f32 %v2228, %v2233
    %v2237 = vadd.f32 %v2229, %v2233
    %v2238 = vadd.f32 %v2230, %v2233
    %v2239 = vadd.f32 %v2235, %v69
    %v2240 = vadd.f32 %v2236, %v70
    %v2241 = vadd.f32 %v2237, %v71
    %v2242 = vadd.f32 %v2238, %v72
    %v2243 = vsel %vm107, %v2239, 0.0
    %2244 = vadd.xlane.f32.xlu0 %v2243
    %v2245 = vpop.xlane.xlu0 %2244
    %v2246 = vsel %vm107, %v2240, 0.0
    %2247 = vadd.xlane.f32.xlu0 %v2246
    %v2248 = vpop.xlane.xlu0 %2247
    %v2249 = vsel %vm107, %v2241, 0.0
    %2250 = vadd.xlane.f32.xlu0 %v2249
    %v2251 = vpop.xlane.xlu0 %2250
    %v2252 = vsel %vm107, %v2242, 0.0
    %2253 = vadd.xlane.f32.xlu0 %v2252
    %v2254 = vpop.xlane.xlu0 %2253
    %v2255 = vrcp.pop 32.0
    %v2256 = vmul.f32 %v2245, %v2255
    %v2257 = vmul.f32 %v2248, %v2255
    %v2258 = vmul.f32 %v2251, %v2255
    %v2259 = vmul.f32 %v2254, %v2255
    %v2260 = vsub.f32 %v2239, %v2256
    %v2261 = vsub.f32 %v2240, %v2257
    %v2262 = vsub.f32 %v2241, %v2258
    %v2263 = vsub.f32 %v2242, %v2259
    %v2264 = vmul.f32 %v2260, %v2260
    %v2265 = vmul.f32 %v2261, %v2261
    %v2266 = vmul.f32 %v2262, %v2262
    %v2267 = vmul.f32 %v2263, %v2263
    %v2268 = vsel %vm107, %v2264, 0.0
    %2269 = vadd.xlane.f32.xlu0 %v2268
    %v2270 = vpop.xlane.xlu0 %2269
    %v2271 = vsel %vm107, %v2265, 0.0
    %2272 = vadd.xlane.f32.xlu0 %v2271
    %v2273 = vpop.xlane.xlu0 %2272
    %v2274 = vsel %vm107, %v2266, 0.0
    %2275 = vadd.xlane.f32.xlu0 %v2274
    %v2276 = vpop.xlane.xlu0 %2275
    %v2277 = vsel %vm107, %v2267, 0.0
    %2278 = vadd.xlane.f32.xlu0 %v2277
    %v2279 = vpop.xlane.xlu0 %2278
    %v2280 = vmul.f32 %v2270, %v2255
    %v2281 = vmul.f32 %v2273, %v2255
    %v2282 = vmul.f32 %v2276, %v2255
    %v2283 = vmul.f32 %v2279, %v2255
    %v2284 = vadd.f32 %v2280, 1e-05
    %v2285 = vadd.f32 %v2281, 1e-05
    %v2286 = vadd.f32 %v2282, 1e-05
    %v2287 = vadd.f32 %v2283, 1e-05
    %v2288 = vrsqrt.pop %v2284
    %v2289 = vrsqrt.pop %v2285
    %v2290 = vrsqrt.pop %v2286
    %v2291 = vrsqrt.pop %v2287
    %v2292 = vmul.f32 %v2260, %v2288
    %v2293 = vmul.f32 %v2261, %v2289
    %v2294 = vmul.f32 %v2262, %v2290
    %v2295 = vmul.f32 %v2263, %v2291
    %v2296 = vlaneseq
    %v2297 = vshrl.u32 %v2296, 7
    %v2298 = vsub.s32 1, %v2297
    %v2299 = vrot.slane %v102, %v2298
    %v2300 = vmul.f32 %v2292, %v2299
    %v2301 = vmul.f32 %v2293, %v2299
    %v2302 = vmul.f32 %v2294, %v2299
    %v2303 = vmul.f32 %v2295, %v2299
    %v2304 = vlaneseq
    %v2305 = vshrl.u32 %v2304, 7
    %v2306 = vsub.s32 2, %v2305
    %v2307 = vrot.slane %v102, %v2306
    %v2308 = vadd.f32 %v2300, %v2307
    %v2309 = vadd.f32 %v2301, %v2307
    %v2310 = vadd.f32 %v2302, %v2307
    %v2311 = vadd.f32 %v2303, %v2307
    %v2312 = vlaneseq
    %v2313 = vshrl.u32 %v2312, 7
    %v2314 = vsub.s32 1, %v2313
    %v2315 = vrot.slane %v101, %v2314
    %v2317 = vsel %vm107, %v2308, 0
    %v2320 = vsel %vm107, %v2309, 0
    %v2323 = vsel %vm107, %v2310, 0
    %v2326 = vsel %vm107, %v2311, 0
    %2328 = vmatprep.subr.mxu0 0.0
    %2329 = vmatpush1.msra.mxu0 %v81
    %2330 = vmatprep.subr.mxu0 0.0
    %2331 = vmatpush1.msra.mxu0 %v82
    %2332 = vmatprep.subr.mxu0 0.0
    %2333 = vmatpush1.msra.mxu0 %v83
    %2334 = vmatprep.subr.mxu0 0.0
    %2335 = vmatpush1.msra.mxu0 %v84
    %2336 = vmatprep.subr.mxu0 0.0
    %2337 = vmatpush1.msra.mxu0 0.0
    %2338 = vmatprep.subr.mxu0 0.0
    %2339 = vmatpush1.msra.mxu0 0.0
    %2340 = vmatprep.subr.mxu0 0.0
    %2341 = vmatpush1.msra.mxu0 0.0
    %2342 = vmatprep.subr.mxu0 0.0
    %2343 = vmatpush1.msra.mxu0 0.0
    %2344 = vmatprep.subr.mxu0 0.0
    %2345 = vmatpush1.msra.mxu0 0.0
    %2346 = vmatprep.subr.mxu0 0.0
    %2347 = vmatpush1.msra.mxu0 0.0
    %2348 = vmatprep.subr.mxu0 0.0
    %2349 = vmatpush1.msra.mxu0 0.0
    %2350 = vmatprep.subr.mxu0 0.0
    %2351 = vmatpush1.msra.mxu0 0.0
    %2352 = vmatprep.subr.mxu0 0.0
    %2353 = vmatpush1.msra.mxu0 0.0
    %2354 = vmatprep.subr.mxu0 0.0
    %2355 = vmatpush1.msra.mxu0 0.0
    %2356 = vmatprep.subr.mxu0 0.0
    %2357 = vmatpush1.msra.mxu0 0.0
    %2358 = vmatprep.subr.mxu0 0.0
    %2359 = vmatpush1.msra.mxu0 0.0
    %2360 = vmatprep.subr.mxu0 0.0
    %2361 = vmatpush1.msra.mxu0 0.0
    %2362 = vmatprep.subr.mxu0 0.0
    %2363 = vmatpush1.msra.mxu0 0.0
    %2364 = vmatprep.subr.mxu0 0.0
    %2365 = vmatpush1.msra.mxu0 0.0
    %2366 = vmatprep.subr.mxu0 0.0
    %2367 = vmatpush1.msra.mxu0 0.0
    %2368 = vmatprep.subr.mxu0 0.0
    %2369 = vmatpush1.msra.mxu0 0.0
    %2370 = vmatprep.subr.mxu0 0.0
    %2371 = vmatpush1.msra.mxu0 0.0
    %2372 = vmatprep.subr.mxu0 0.0
    %2373 = vmatpush1.msra.mxu0 0.0
    %2374 = vmatprep.subr.mxu0 0.0
    %2375 = vmatpush1.msra.mxu0 0.0
    %2376 = vmatprep.subr.mxu0 0.0
    %2377 = vmatpush1.msra.mxu0 0.0
    %2378 = vmatprep.subr.mxu0 0.0
    %2379 = vmatpush1.msra.mxu0 0.0
    %2380 = vmatprep.subr.mxu0 0.0
    %2381 = vmatpush1.msra.mxu0 0.0
    %2382 = vmatprep.subr.mxu0 0.0
    %2383 = vmatpush1.msra.mxu0 0.0
    %2384 = vmatprep.subr.mxu0 0.0
    %2385 = vmatpush1.msra.mxu0 0.0
    %2386 = vmatprep.subr.mxu0 0.0
    %2387 = vmatpush1.msra.mxu0 0.0
    %2388 = vmatprep.subr.mxu0 0.0
    %2389 = vmatpush1.msra.mxu0 0.0
    %2390 = vmatprep.subr.mxu0 0.0
    %2391 = vmatpush1.msra.mxu0 0.0
    %2392 = vmatprep.mubr.f32.mxu0 0.0
    %2393 = vmatmul.mubr.f32.gmra.mrb[0].mxu0 %v2317
    %v2394 = vpop.f32.mrb[0].mxu0
    %v2395 = vadd.f32 %v2315, %v2394
    %v2396 = vpop.f32.mrb[0].mxu0
    %2397 = vmatprep.mubr.f32.mxu0 0.0
    %2398 = vmatmul.mubr.f32.gmra.mrb[0].mxu0 %v2320
    %v2399 = vpop.f32.mrb[0].mxu0
    %v2400 = vadd.f32 %v2315, %v2399
    %v2401 = vpop.f32.mrb[0].mxu0
    %2402 = vmatprep.mubr.f32.mxu0 0.0
    %2403 = vmatmul.mubr.f32.gmra.mrb[0].mxu0 %v2323
    %v2404 = vpop.f32.mrb[0].mxu0
    %v2405 = vadd.f32 %v2315, %v2404
    %v2406 = vpop.f32.mrb[0].mxu0
    %2407 = vmatprep.mubr.f32.mxu0 0.0
    %2408 = vmatmul.mubr.f32.gmra.mrb[0].mxu0 %v2326
    %v2409 = vpop.f32.mrb[0].mxu0
    %v2410 = vadd.f32 %v2315, %v2409
    %v2411 = vpop.f32.mrb[0].mxu0
    %2412 = vdwg.mxu0
    %v2413 = vmax.f32 %v2395, 0.0
    %v2414 = vmax.f32 %v2400, 0.0
    %v2415 = vmax.f32 %v2405, 0.0
    %v2416 = vmax.f32 %v2410, 0.0
    %v2417 = vlaneseq
    %v2418 = vshrl.u32 %v2417, 7
    %v2419 = vsub.s32 0, %v2418
    %v2420 = vrot.slane %v102, %v2419
    %2421 = vmatprep.subr.mxu0 0.0
    %2422 = vmatpush1.msra.mxu0 %v85
    %2423 = vmatprep.subr.mxu0 0.0
    %2424 = vmatpush1.msra.mxu0 %v86
    %2425 = vmatprep.subr.mxu0 0.0
    %2426 = vmatpush1.msra.mxu0 %v87
    %2427 = vmatprep.subr.mxu0 0.0
    %2428 = vmatpush1.msra.mxu0 %v88
    %2429 = vmatprep.subr.mxu0 0.0
    %2430 = vmatpush1.msra.mxu0 %v89
    %2431 = vmatprep.subr.mxu0 0.0
    %2432 = vmatpush1.msra.mxu0 %v90
    %2433 = vmatprep.subr.mxu0 0.0
    %2434 = vmatpush1.msra.mxu0 %v91
    %2435 = vmatprep.subr.mxu0 0.0
    %2436 = vmatpush1.msra.mxu0 %v92
    %2437 = vmatprep.subr.mxu0 0.0
    %2438 = vmatpush1.msra.mxu0 %v93
    %2439 = vmatprep.subr.mxu0 0.0
    %2440 = vmatpush1.msra.mxu0 %v94
    %2441 = vmatprep.subr.mxu0 0.0
    %2442 = vmatpush1.msra.mxu0 %v95
    %2443 = vmatprep.subr.mxu0 0.0
    %2444 = vmatpush1.msra.mxu0 %v96
    %2445 = vmatprep.subr.mxu0 0.0
    %2446 = vmatpush1.msra.mxu0 %v97
    %2447 = vmatprep.subr.mxu0 0.0
    %2448 = vmatpush1.msra.mxu0 %v98
    %2449 = vmatprep.subr.mxu0 0.0
    %2450 = vmatpush1.msra.mxu0 %v99
    %2451 = vmatprep.subr.mxu0 0.0
    %2452 = vmatpush1.msra.mxu0 %v100
    %2453 = vmatprep.subr.mxu0 0.0
    %2454 = vmatpush1.msra.mxu0 0.0
    %2455 = vmatprep.subr.mxu0 0.0
    %2456 = vmatpush1.msra.mxu0 0.0
    %2457 = vmatprep.subr.mxu0 0.0
    %2458 = vmatpush1.msra.mxu0 0.0
    %2459 = vmatprep.subr.mxu0 0.0
    %2460 = vmatpush1.msra.mxu0 0.0
    %2461 = vmatprep.subr.mxu0 0.0
    %2462 = vmatpush1.msra.mxu0 0.0
    %2463 = vmatprep.subr.mxu0 0.0
    %2464 = vmatpush1.msra.mxu0 0.0
    %2465 = vmatprep.subr.mxu0 0.0
    %2466 = vmatpush1.msra.mxu0 0.0
    %2467 = vmatprep.subr.mxu0 0.0
    %2468 = vmatpush1.msra.mxu0 0.0
    %2469 = vmatprep.subr.mxu0 0.0
    %2470 = vmatpush1.msra.mxu0 0.0
    %2471 = vmatprep.subr.mxu0 0.0
    %2472 = vmatpush1.msra.mxu0 0.0
    %2473 = vmatprep.subr.mxu0 0.0
    %2474 = vmatpush1.msra.mxu0 0.0
    %2475 = vmatprep.subr.mxu0 0.0
    %2476 = vmatpush1.msra.mxu0 0.0
    %2477 = vmatprep.subr.mxu0 0.0
    %2478 = vmatpush1.msra.mxu0 0.0
    %2479 = vmatprep.subr.mxu0 0.0
    %2480 = vmatpush1.msra.mxu0 0.0
    %2481 = vmatprep.subr.mxu0 0.0
    %2482 = vmatpush1.msra.mxu0 0.0
    %2483 = vmatprep.subr.mxu0 0.0
    %2484 = vmatpush1.msra.mxu0 0.0
    %2485 = vmatprep.mubr.f32.mxu0 0.0
    %2486 = vmatmul.mubr.f32.gmra.mrb[0].mxu0 %v2413
    %v2487 = vpop.f32.mrb[0].mxu0
    %v2488 = vadd.f32 %v2420, %v2487
    %v2489 = vpop.f32.mrb[0].mxu0
    %2490 = vmatprep.mubr.f32.mxu0 0.0
    %2491 = vmatmul.mubr.f32.gmra.mrb[0].mxu0 %v2414
    %v2492 = vpop.f32.mrb[0].mxu0
    %v2493 = vadd.f32 %v2420, %v2492
    %v2494 = vpop.f32.mrb[0].mxu0
    %2495 = vmatprep.mubr.f32.mxu0 0.0
    %2496 = vmatmul.mubr.f32.gmra.mrb[0].mxu0 %v2415
    %v2497 = vpop.f32.mrb[0].mxu0
    %v2498 = vadd.f32 %v2420, %v2497
    %v2499 = vpop.f32.mrb[0].mxu0
    %2500 = vmatprep.mubr.f32.mxu0 0.0
    %2501 = vmatmul.mubr.f32.gmra.mrb[0].mxu0 %v2416
    %v2502 = vpop.f32.mrb[0].mxu0
    %v2503 = vadd.f32 %v2420, %v2502
    %v2504 = vpop.f32.mrb[0].mxu0
    %2505 = vdwg.mxu0
    %v2506 = vadd.f32 %v2488, %v2308
    %v2507 = vadd.f32 %v2493, %v2309
    %v2508 = vadd.f32 %v2498, %v2310
    %v2509 = vadd.f32 %v2503, %v2311
    %v2510 = vsel %vm107, %v2506, 0.0
    %2511 = vadd.xlane.f32.xlu0 %v2510
    %v2512 = vpop.xlane.xlu0 %2511
    %v2513 = vsel %vm107, %v2507, 0.0
    %2514 = vadd.xlane.f32.xlu0 %v2513
    %v2515 = vpop.xlane.xlu0 %2514
    %v2516 = vsel %vm107, %v2508, 0.0
    %2517 = vadd.xlane.f32.xlu0 %v2516
    %v2518 = vpop.xlane.xlu0 %2517
    %v2519 = vsel %vm107, %v2509, 0.0
    %2520 = vadd.xlane.f32.xlu0 %v2519
    %v2521 = vpop.xlane.xlu0 %2520
    %v2522 = vmul.f32 %v2512, %v2255
    %v2523 = vmul.f32 %v2515, %v2255
    %v2524 = vmul.f32 %v2518, %v2255
    %v2525 = vmul.f32 %v2521, %v2255
    %v2526 = vsub.f32 %v2506, %v2522
    %v2527 = vsub.f32 %v2507, %v2523
    %v2528 = vsub.f32 %v2508, %v2524
    %v2529 = vsub.f32 %v2509, %v2525
    %v2530 = vmul.f32 %v2526, %v2526
    %v2531 = vmul.f32 %v2527, %v2527
    %v2532 = vmul.f32 %v2528, %v2528
    %v2533 = vmul.f32 %v2529, %v2529
    %v2534 = vsel %vm107, %v2530, 0.0
    %2535 = vadd.xlane.f32.xlu0 %v2534
    %v2536 = vpop.xlane.xlu0 %2535
    %v2537 = vsel %vm107, %v2531, 0.0
    %2538 = vadd.xlane.f32.xlu0 %v2537
    %v2539 = vpop.xlane.xlu0 %2538
    %v2540 = vsel %vm107, %v2532, 0.0
    %2541 = vadd.xlane.f32.xlu0 %v2540
    %v2542 = vpop.xlane.xlu0 %2541
    %v2543 = vsel %vm107, %v2533, 0.0
    %2544 = vadd.xlane.f32.xlu0 %v2543
    %v2545 = vpop.xlane.xlu0 %2544
    %v2546 = vmul.f32 %v2536, %v2255
    %v2547 = vmul.f32 %v2539, %v2255
    %v2548 = vmul.f32 %v2542, %v2255
    %v2549 = vmul.f32 %v2545, %v2255
    %v2550 = vadd.f32 %v2546, 1e-05
    %v2551 = vadd.f32 %v2547, 1e-05
    %v2552 = vadd.f32 %v2548, 1e-05
    %v2553 = vadd.f32 %v2549, 1e-05
    %v2554 = vrsqrt.pop %v2550
    %v2555 = vrsqrt.pop %v2551
    %v2556 = vrsqrt.pop %v2552
    %v2557 = vrsqrt.pop %v2553
    %v2558 = vmul.f32 %v2526, %v2554
    %v2559 = vmul.f32 %v2527, %v2555
    %v2560 = vmul.f32 %v2528, %v2556
    %v2561 = vmul.f32 %v2529, %v2557
    %v2562 = vlaneseq
    %v2563 = vshrl.u32 %v2562, 7
    %v2564 = vsub.s32 3, %v2563
    %v2565 = vrot.slane %v102, %v2564
    %v2566 = vmul.f32 %v2558, %v2565
    %v2567 = vmul.f32 %v2559, %v2565
    %v2568 = vmul.f32 %v2560, %v2565
    %v2569 = vmul.f32 %v2561, %v2565
    %v2570 = vlaneseq
    %v2571 = vshrl.u32 %v2570, 7
    %v2572 = vsub.s32 4, %v2571
    %v2573 = vrot.slane %v102, %v2572
    %v2574 = vadd.f32 %v2566, %v2573
    %v2575 = vadd.f32 %v2567, %v2573
    %v2576 = vadd.f32 %v2568, %v2573
    %v2577 = vadd.f32 %v2569, %v2573
    %s2578 = sld [smem:[#allocation2]]
    %v2579 = vstv %s2578
    %v2580 = vmul.f32 %v2579, %v2574
    %v2581 = vmul.f32 %v2579, %v2575
    %v2582 = vmul.f32 %v2579, %v2576
    %v2583 = vmul.f32 %v2579, %v2577
    %v2584 = vadd.f32 %v2580, 0.0
    %v2585 = vadd.f32 %v2581, 0.0
    %v2586 = vadd.f32 %v2582, 0.0
    %v2587 = vadd.f32 %v2583, 0.0
    %s2588 = scalar_lea.vmem %s4, 32
    %v2589 = vld [vmem:[%s2588] sm:$0xff]
    %v2590 = vld [vmem:[%s2588 + $0x8] sm:$0xff]
    %v2591 = vld [vmem:[%s2588 + $0x10] sm:$0xff]
    %v2592 = vld [vmem:[%s2588 + $0x18] sm:$0xff]
    %s2593 = scalar_lea.vmem %s5, 32
    %v2594 = vld [vmem:[%s2593] sm:$0xff]
    %v2595 = vld [vmem:[%s2593 + $0x8] sm:$0xff]
    %v2596 = vld [vmem:[%s2593 + $0x10] sm:$0xff]
    %v2597 = vld [vmem:[%s2593 + $0x18] sm:$0xff]
    %s2598 = scalar_lea.vmem %s6, 32
    %v2599 = vld [vmem:[%s2598] sm:$0xff]
    %v2600 = vld [vmem:[%s2598 + $0x8] sm:$0xff]
    %v2601 = vld [vmem:[%s2598 + $0x10] sm:$0xff]
    %v2602 = vld [vmem:[%s2598 + $0x18] sm:$0xff]
    %s2603 = scalar_lea.vmem %s7, 128
    %v2604 = vld [vmem:[%s2603] sm:$0xff]
    %v2605 = vld [vmem:[%s2603 + $0x8] sm:$0xff]
    %v2606 = vld [vmem:[%s2603 + $0x10] sm:$0xff]
    %v2607 = vld [vmem:[%s2603 + $0x18] sm:$0xff]
    %v2608 = vld [vmem:[%s2603 + $0x20] sm:$0xff]
    %v2609 = vld [vmem:[%s2603 + $0x28] sm:$0xff]
    %v2610 = vld [vmem:[%s2603 + $0x30] sm:$0xff]
    %v2611 = vld [vmem:[%s2603 + $0x38] sm:$0xff]
    %v2612 = vld [vmem:[%s2603 + $0x40] sm:$0xff]
    %v2613 = vld [vmem:[%s2603 + $0x48] sm:$0xff]
    %v2614 = vld [vmem:[%s2603 + $0x50] sm:$0xff]
    %v2615 = vld [vmem:[%s2603 + $0x58] sm:$0xff]
    %v2616 = vld [vmem:[%s2603 + $0x60] sm:$0xff]
    %v2617 = vld [vmem:[%s2603 + $0x68] sm:$0xff]
    %v2618 = vld [vmem:[%s2603 + $0x70] sm:$0xff]
    %v2619 = vld [vmem:[%s2603 + $0x78] sm:$0xff]
    %s2620 = scalar_lea.vmem %s8, 2
    %v2621 = vld [vmem:[%s2620] sm:$0x3]
    %s2622 = scalar_lea.vmem %s9, 8
    %v2623 = vld [vmem:[%s2622] sm:$0x1f]
    %v2624 = vlaneseq
    %v2625 = vshrl.u32 %v2624, 7
    %v2626 = vsub.s32 0, %v2625
    %v2627 = vrot.slane %v2621, %v2626
    %v2629 = vsel %vm107, %v2574, 0
    %v2632 = vsel %vm107, %v2575, 0
    %v2635 = vsel %vm107, %v2576, 0
    %v2638 = vsel %vm107, %v2577, 0
    %2640 = vmatprep.subr.mxu0 0.0
    %2641 = vmatpush1.msra.mxu0 %v2589
    %2642 = vmatprep.subr.mxu0 0.0
    %2643 = vmatpush1.msra.mxu0 %v2590
    %2644 = vmatprep.subr.mxu0 0.0
    %2645 = vmatpush1.msra.mxu0 %v2591
    %2646 = vmatprep.subr.mxu0 0.0
    %2647 = vmatpush1.msra.mxu0 %v2592
    %2648 = vmatprep.subr.mxu0 0.0
    %2649 = vmatpush1.msra.mxu0 0.0
    %2650 = vmatprep.subr.mxu0 0.0
    %2651 = vmatpush1.msra.mxu0 0.0
    %2652 = vmatprep.subr.mxu0 0.0
    %2653 = vmatpush1.msra.mxu0 0.0
    %2654 = vmatprep.subr.mxu0 0.0
    %2655 = vmatpush1.msra.mxu0 0.0
    %2656 = vmatprep.subr.mxu0 0.0
    %2657 = vmatpush1.msra.mxu0 0.0
    %2658 = vmatprep.subr.mxu0 0.0
    %2659 = vmatpush1.msra.mxu0 0.0
    %2660 = vmatprep.subr.mxu0 0.0
    %2661 = vmatpush1.msra.mxu0 0.0
    %2662 = vmatprep.subr.mxu0 0.0
    %2663 = vmatpush1.msra.mxu0 0.0
    %2664 = vmatprep.subr.mxu0 0.0
    %2665 = vmatpush1.msra.mxu0 0.0
    %2666 = vmatprep.subr.mxu0 0.0
    %2667 = vmatpush1.msra.mxu0 0.0
    %2668 = vmatprep.subr.mxu0 0.0
    %2669 = vmatpush1.msra.mxu0 0.0
    %2670 = vmatprep.subr.mxu0 0.0
    %2671 = vmatpush1.msra.mxu0 0.0
    %2672 = vmatprep.subr.mxu0 0.0
    %2673 = vmatpush1.msra.mxu0 0.0
    %2674 = vmatprep.subr.mxu0 0.0
    %2675 = vmatpush1.msra.mxu0 0.0
    %2676 = vmatprep.subr.mxu0 0.0
    %2677 = vmatpush1.msra.mxu0 0.0
    %2678 = vmatprep.subr.mxu0 0.0
    %2679 = vmatpush1.msra.mxu0 0.0
    %2680 = vmatprep.subr.mxu0 0.0
    %2681 = vmatpush1.msra.mxu0 0.0
    %2682 = vmatprep.subr.mxu0 0.0
    %2683 = vmatpush1.msra.mxu0 0.0
    %2684 = vmatprep.subr.mxu0 0.0
    %2685 = vmatpush1.msra.mxu0 0.0
    %2686 = vmatprep.subr.mxu0 0.0
    %2687 = vmatpush1.msra.mxu0 0.0
    %2688 = vmatprep.subr.mxu0 0.0
    %2689 = vmatpush1.msra.mxu0 0.0
    %2690 = vmatprep.subr.mxu0 0.0
    %2691 = vmatpush1.msra.mxu0 0.0
    %2692 = vmatprep.subr.mxu0 0.0
    %2693 = vmatpush1.msra.mxu0 0.0
    %2694 = vmatprep.subr.mxu0 0.0
    %2695 = vmatpush1.msra.mxu0 0.0
    %2696 = vmatprep.subr.mxu0 0.0
    %2697 = vmatpush1.msra.mxu0 0.0
    %2698 = vmatprep.subr.mxu0 0.0
    %2699 = vmatpush1.msra.mxu0 0.0
    %2700 = vmatprep.subr.mxu0 0.0
    %2701 = vmatpush1.msra.mxu0 0.0
    %2702 = vmatprep.subr.mxu0 0.0
    %2703 = vmatpush1.msra.mxu0 0.0
    %2704 = vmatprep.mubr.f32.mxu0 0.0
    %2705 = vmatmul.mubr.f32.gmra.mrb[0].mxu0 %v2629
    %v2706 = vpop.f32.mrb[0].mxu0
    %v2707 = vadd.f32 %v2627, %v2706
    %v2708 = vpop.f32.mrb[0].mxu0
    %2709 = vmatprep.mubr.f32.mxu0 0.0
    %2710 = vmatmul.mubr.f32.gmra.mrb[0].mxu0 %v2632
    %v2711 = vpop.f32.mrb[0].mxu0
    %v2712 = vadd.f32 %v2627, %v2711
    %v2713 = vpop.f32.mrb[0].mxu0
    %2714 = vmatprep.mubr.f32.mxu0 0.0
    %2715 = vmatmul.mubr.f32.gmra.mrb[0].mxu0 %v2635
    %v2716 = vpop.f32.mrb[0].mxu0
    %v2717 = vadd.f32 %v2627, %v2716
    %v2718 = vpop.f32.mrb[0].mxu0
    %2719 = vmatprep.mubr.f32.mxu0 0.0
    %2720 = vmatmul.mubr.f32.gmra.mrb[0].mxu0 %v2638
    %v2721 = vpop.f32.mrb[0].mxu0
    %v2722 = vadd.f32 %v2627, %v2721
    %v2723 = vpop.f32.mrb[0].mxu0
    %2724 = vdwg.mxu0
    %2727 = vrot.lane.b32.xlu0 %v2707, 96
    %v2728 = vpop.permute.xlu0 %2727
    %2729 = vrot.lane.b32.xlu0 %v2712, 96
    %v2730 = vpop.permute.xlu0 %2729
    %v2731 = vsel %vm211, %v2707, 0
    %v2733 = vsel %vm211, %v2712, 0
    %v2735 = vsel %vm211, %v2728, 0
    %v2737 = vsel %vm211, %v2730, 0
    %2739 = vmatprep.subr.mxu0 0.0
    %2740 = vmatpush1.xpose.msra.mxu0 %v2735
    %2741 = vmatprep.subr.mxu0 0.0
    %2742 = vmatpush1.xpose.msra.mxu0 %v2737
    %2743 = vmatprep.subr.mxu0 0.0
    %2744 = vmatpush1.xpose.msra.mxu0 0.0
    %2745 = vmatprep.subr.mxu0 0.0
    %2746 = vmatpush1.xpose.msra.mxu0 0.0
    %2747 = vmatprep.subr.mxu0 0.0
    %2748 = vmatpush1.xpose.msra.mxu0 0.0
    %2749 = vmatprep.subr.mxu0 0.0
    %2750 = vmatpush1.xpose.msra.mxu0 0.0
    %2751 = vmatprep.subr.mxu0 0.0
    %2752 = vmatpush1.xpose.msra.mxu0 0.0
    %2753 = vmatprep.subr.mxu0 0.0
    %2754 = vmatpush1.xpose.msra.mxu0 0.0
    %2755 = vmatprep.subr.mxu0 0.0
    %2756 = vmatpush1.xpose.msra.mxu0 0.0
    %2757 = vmatprep.subr.mxu0 0.0
    %2758 = vmatpush1.xpose.msra.mxu0 0.0
    %2759 = vmatprep.subr.mxu0 0.0
    %2760 = vmatpush1.xpose.msra.mxu0 0.0
    %2761 = vmatprep.subr.mxu0 0.0
    %2762 = vmatpush1.xpose.msra.mxu0 0.0
    %2763 = vmatprep.subr.mxu0 0.0
    %2764 = vmatpush1.xpose.msra.mxu0 0.0
    %2765 = vmatprep.subr.mxu0 0.0
    %2766 = vmatpush1.xpose.msra.mxu0 0.0
    %2767 = vmatprep.subr.mxu0 0.0
    %2768 = vmatpush1.xpose.msra.mxu0 0.0
    %2769 = vmatprep.subr.mxu0 0.0
    %2770 = vmatpush1.xpose.msra.mxu0 0.0
    %2771 = vmatprep.subr.mxu0 0.0
    %2772 = vmatpush1.xpose.msra.mxu0 0.0
    %2773 = vmatprep.subr.mxu0 0.0
    %2774 = vmatpush1.xpose.msra.mxu0 0.0
    %2775 = vmatprep.subr.mxu0 0.0
    %2776 = vmatpush1.xpose.msra.mxu0 0.0
    %2777 = vmatprep.subr.mxu0 0.0
    %2778 = vmatpush1.xpose.msra.mxu0 0.0
    %2779 = vmatprep.subr.mxu0 0.0
    %2780 = vmatpush1.xpose.msra.mxu0 0.0
    %2781 = vmatprep.subr.mxu0 0.0
    %2782 = vmatpush1.xpose.msra.mxu0 0.0
    %2783 = vmatprep.subr.mxu0 0.0
    %2784 = vmatpush1.xpose.msra.mxu0 0.0
    %2785 = vmatprep.subr.mxu0 0.0
    %2786 = vmatpush1.xpose.msra.mxu0 0.0
    %2787 = vmatprep.subr.mxu0 0.0
    %2788 = vmatpush1.xpose.msra.mxu0 0.0
    %2789 = vmatprep.subr.mxu0 0.0
    %2790 = vmatpush1.xpose.msra.mxu0 0.0
    %2791 = vmatprep.subr.mxu0 0.0
    %2792 = vmatpush1.xpose.msra.mxu0 0.0
    %2793 = vmatprep.subr.mxu0 0.0
    %2794 = vmatpush1.xpose.msra.mxu0 0.0
    %2795 = vmatprep.subr.mxu0 0.0
    %2796 = vmatpush1.xpose.msra.mxu0 0.0
    %2797 = vmatprep.subr.mxu0 0.0
    %2798 = vmatpush1.xpose.msra.mxu0 0.0
    %2799 = vmatprep.subr.mxu0 0.0
    %2800 = vmatpush1.xpose.msra.mxu0 0.0
    %2801 = vmatprep.subr.mxu0 0.0
    %2802 = vmatpush1.xpose.msra.mxu0 0.0
    %2803 = vmatprep.mubr.f32.mxu0 0.0
    %2804 = vmatmul.mubr.f32.gmra.mrb[0].mxu0 %v2731
    %v2805 = vpop.f32.mrb[0].mxu0
    %v2806 = vadd.f32 0.0, %v2805
    %v2807 = vpop.f32.mrb[0].mxu0
    %2808 = vmatprep.mubr.f32.mxu0 0.0
    %2809 = vmatmul.mubr.f32.gmra.mrb[0].mxu0 %v2733
    %v2810 = vpop.f32.mrb[0].mxu0
    %v2811 = vadd.f32 0.0, %v2810
    %v2812 = vpop.f32.mrb[0].mxu0
    %2813 = vdwg.mxu0
    %2816 = vrot.lane.b32.xlu0 %v2717, 96
    %v2817 = vpop.permute.xlu0 %2816
    %2818 = vrot.lane.b32.xlu0 %v2722, 96
    %v2819 = vpop.permute.xlu0 %2818
    %v2820 = vsel %vm211, %v2717, 0
    %v2822 = vsel %vm211, %v2722, 0
    %v2824 = vsel %vm211, %v2817, 0
    %v2826 = vsel %vm211, %v2819, 0
    %2828 = vmatprep.subr.mxu0 0.0
    %2829 = vmatpush1.xpose.msra.mxu0 %v2824
    %2830 = vmatprep.subr.mxu0 0.0
    %2831 = vmatpush1.xpose.msra.mxu0 %v2826
    %2832 = vmatprep.subr.mxu0 0.0
    %2833 = vmatpush1.xpose.msra.mxu0 0.0
    %2834 = vmatprep.subr.mxu0 0.0
    %2835 = vmatpush1.xpose.msra.mxu0 0.0
    %2836 = vmatprep.subr.mxu0 0.0
    %2837 = vmatpush1.xpose.msra.mxu0 0.0
    %2838 = vmatprep.subr.mxu0 0.0
    %2839 = vmatpush1.xpose.msra.mxu0 0.0
    %2840 = vmatprep.subr.mxu0 0.0
    %2841 = vmatpush1.xpose.msra.mxu0 0.0
    %2842 = vmatprep.subr.mxu0 0.0
    %2843 = vmatpush1.xpose.msra.mxu0 0.0
    %2844 = vmatprep.subr.mxu0 0.0
    %2845 = vmatpush1.xpose.msra.mxu0 0.0
    %2846 = vmatprep.subr.mxu0 0.0
    %2847 = vmatpush1.xpose.msra.mxu0 0.0
    %2848 = vmatprep.subr.mxu0 0.0
    %2849 = vmatpush1.xpose.msra.mxu0 0.0
    %2850 = vmatprep.subr.mxu0 0.0
    %2851 = vmatpush1.xpose.msra.mxu0 0.0
    %2852 = vmatprep.subr.mxu0 0.0
    %2853 = vmatpush1.xpose.msra.mxu0 0.0
    %2854 = vmatprep.subr.mxu0 0.0
    %2855 = vmatpush1.xpose.msra.mxu0 0.0
    %2856 = vmatprep.subr.mxu0 0.0
    %2857 = vmatpush1.xpose.msra.mxu0 0.0
    %2858 = vmatprep.subr.mxu0 0.0
    %2859 = vmatpush1.xpose.msra.mxu0 0.0
    %2860 = vmatprep.subr.mxu0 0.0
    %2861 = vmatpush1.xpose.msra.mxu0 0.0
    %2862 = vmatprep.subr.mxu0 0.0
    %2863 = vmatpush1.xpose.msra.mxu0 0.0
    %2864 = vmatprep.subr.mxu0 0.0
    %2865 = vmatpush1.xpose.msra.mxu0 0.0
    %2866 = vmatprep.subr.mxu0 0.0
    %2867 = vmatpush1.xpose.msra.mxu0 0.0
    %2868 = vmatprep.subr.mxu0 0.0
    %2869 = vmatpush1.xpose.msra.mxu0 0.0
    %2870 = vmatprep.subr.mxu0 0.0
    %2871 = vmatpush1.xpose.msra.mxu0 0.0
    %2872 = vmatprep.subr.mxu0 0.0
    %2873 = vmatpush1.xpose.msra.mxu0 0.0
    %2874 = vmatprep.subr.mxu0 0.0
    %2875 = vmatpush1.xpose.msra.mxu0 0.0
    %2876 = vmatprep.subr.mxu0 0.0
    %2877 = vmatpush1.xpose.msra.mxu0 0.0
    %2878 = vmatprep.subr.mxu0 0.0
    %2879 = vmatpush1.xpose.msra.mxu0 0.0
    %2880 = vmatprep.subr.mxu0 0.0
    %2881 = vmatpush1.xpose.msra.mxu0 0.0
    %2882 = vmatprep.subr.mxu0 0.0
    %2883 = vmatpush1.xpose.msra.mxu0 0.0
    %2884 = vmatprep.subr.mxu0 0.0
    %2885 = vmatpush1.xpose.msra.mxu0 0.0
    %2886 = vmatprep.subr.mxu0 0.0
    %2887 = vmatpush1.xpose.msra.mxu0 0.0
    %2888 = vmatprep.subr.mxu0 0.0
    %2889 = vmatpush1.xpose.msra.mxu0 0.0
    %2890 = vmatprep.subr.mxu0 0.0
    %2891 = vmatpush1.xpose.msra.mxu0 0.0
    %2892 = vmatprep.mubr.f32.mxu0 0.0
    %2893 = vmatmul.mubr.f32.gmra.mrb[0].mxu0 %v2820
    %v2894 = vpop.f32.mrb[0].mxu0
    %v2895 = vadd.f32 0.0, %v2894
    %v2896 = vpop.f32.mrb[0].mxu0
    %2897 = vmatprep.mubr.f32.mxu0 0.0
    %2898 = vmatmul.mubr.f32.gmra.mrb[0].mxu0 %v2822
    %v2899 = vpop.f32.mrb[0].mxu0
    %v2900 = vadd.f32 0.0, %v2899
    %v2901 = vpop.f32.mrb[0].mxu0
    %2902 = vdwg.mxu0
    %v2903 = vmul.f32 %v2806, 0.35355338
    %v2904 = vmul.f32 %v2811, 0.35355338
    %v2905 = vmul.f32 %v2895, 0.35355338
    %v2906 = vmul.f32 %v2900, 0.35355338
    %v2907 = vadd.f32 %v2903, %v65
    %v2908 = vadd.f32 %v2904, %v66
    %v2909 = vadd.f32 %v2905, %v67
    %v2910 = vadd.f32 %v2906, %v68
    %v2911 = vsel %vm392, %v2907, -inf
    %2912 = vmax.xlane.f32.xlu0 %v2911
    %v2913 = vpop.xlane.xlu0 %2912
    %v2914 = vsel %vm392, %v2908, -inf
    %2915 = vmax.xlane.f32.xlu0 %v2914
    %v2916 = vpop.xlane.xlu0 %2915
    %v2917 = vsel %vm392, %v2909, -inf
    %2918 = vmax.xlane.f32.xlu0 %v2917
    %v2919 = vpop.xlane.xlu0 %2918
    %v2920 = vsel %vm392, %v2910, -inf
    %2921 = vmax.xlane.f32.xlu0 %v2920
    %v2922 = vpop.xlane.xlu0 %2921
    %v2923 = vsub.f32 %v2907, %v2913
    %v2924 = vsub.f32 %v2908, %v2916
    %v2925 = vsub.f32 %v2909, %v2919
    %v2926 = vsub.f32 %v2910, %v2922
    %v2927 = vmul.f32 %v2923, 1.442695
    %v2928 = vpow.pop %v2927
    %v2929 = vmul.f32 %v2924, 1.442695
    %v2930 = vpow.pop %v2929
    %v2931 = vmul.f32 %v2925, 1.442695
    %v2932 = vpow.pop %v2931
    %v2933 = vmul.f32 %v2926, 1.442695
    %v2934 = vpow.pop %v2933
    %v2935 = vsel %vm392, %v2928, 0.0
    %2936 = vadd.xlane.f32.xlu0 %v2935
    %v2937 = vpop.xlane.xlu0 %2936
    %v2938 = vsel %vm392, %v2930, 0.0
    %2939 = vadd.xlane.f32.xlu0 %v2938
    %v2940 = vpop.xlane.xlu0 %2939
    %v2941 = vsel %vm392, %v2932, 0.0
    %2942 = vadd.xlane.f32.xlu0 %v2941
    %v2943 = vpop.xlane.xlu0 %2942
    %v2944 = vsel %vm392, %v2934, 0.0
    %2945 = vadd.xlane.f32.xlu0 %v2944
    %v2946 = vpop.xlane.xlu0 %2945
    %v2947 = vrcp.pop %v2937
    %v2948 = vrcp.pop %v2940
    %v2949 = vrcp.pop %v2943
    %v2950 = vrcp.pop %v2946
    %v2951 = vmul.f32 %v2928, %v2947
    %v2952 = vmul.f32 %v2930, %v2948
    %v2953 = vmul.f32 %v2932, %v2949
    %v2954 = vmul.f32 %v2934, %v2950
    %2955 = vrot.lane.b32.xlu0 %v2707, 64
    %v2956 = vpop.permute.xlu0 %2955
    %2957 = vrot.lane.b32.xlu0 %v2712, 64
    %v2958 = vpop.permute.xlu0 %2957
    %v2962 = vsel %vm392, %v2951, 0
    %v2965 = vsel %vm392, %v2952, 0
    %2967 = vmatprep.subr.mxu0 0.0
    %2968 = vmatpush1.msra.mxu0 %v2956
    %2969 = vmatprep.subr.mxu0 0.0
    %2970 = vmatpush1.msra.mxu0 %v2958
    %2971 = vmatprep.subr.mxu0 0.0
    %2972 = vmatpush1.msra.mxu0 0.0
    %2973 = vmatprep.subr.mxu0 0.0
    %2974 = vmatpush1.msra.mxu0 0.0
    %2975 = vmatprep.subr.mxu0 0.0
    %2976 = vmatpush1.msra.mxu0 0.0
    %2977 = vmatprep.subr.mxu0 0.0
    %2978 = vmatpush1.msra.mxu0 0.0
    %2979 = vmatprep.subr.mxu0 0.0
    %2980 = vmatpush1.msra.mxu0 0.0
    %2981 = vmatprep.subr.mxu0 0.0
    %2982 = vmatpush1.msra.mxu0 0.0
    %2983 = vmatprep.subr.mxu0 0.0
    %2984 = vmatpush1.msra.mxu0 0.0
    %2985 = vmatprep.subr.mxu0 0.0
    %2986 = vmatpush1.msra.mxu0 0.0
    %2987 = vmatprep.subr.mxu0 0.0
    %2988 = vmatpush1.msra.mxu0 0.0
    %2989 = vmatprep.subr.mxu0 0.0
    %2990 = vmatpush1.msra.mxu0 0.0
    %2991 = vmatprep.subr.mxu0 0.0
    %2992 = vmatpush1.msra.mxu0 0.0
    %2993 = vmatprep.subr.mxu0 0.0
    %2994 = vmatpush1.msra.mxu0 0.0
    %2995 = vmatprep.subr.mxu0 0.0
    %2996 = vmatpush1.msra.mxu0 0.0
    %2997 = vmatprep.subr.mxu0 0.0
    %2998 = vmatpush1.msra.mxu0 0.0
    %2999 = vmatprep.subr.mxu0 0.0
    %3000 = vmatpush1.msra.mxu0 0.0
    %3001 = vmatprep.subr.mxu0 0.0
    %3002 = vmatpush1.msra.mxu0 0.0
    %3003 = vmatprep.subr.mxu0 0.0
    %3004 = vmatpush1.msra.mxu0 0.0
    %3005 = vmatprep.subr.mxu0 0.0
    %3006 = vmatpush1.msra.mxu0 0.0
    %3007 = vmatprep.subr.mxu0 0.0
    %3008 = vmatpush1.msra.mxu0 0.0
    %3009 = vmatprep.subr.mxu0 0.0
    %3010 = vmatpush1.msra.mxu0 0.0
    %3011 = vmatprep.subr.mxu0 0.0
    %3012 = vmatpush1.msra.mxu0 0.0
    %3013 = vmatprep.subr.mxu0 0.0
    %3014 = vmatpush1.msra.mxu0 0.0
    %3015 = vmatprep.subr.mxu0 0.0
    %3016 = vmatpush1.msra.mxu0 0.0
    %3017 = vmatprep.subr.mxu0 0.0
    %3018 = vmatpush1.msra.mxu0 0.0
    %3019 = vmatprep.subr.mxu0 0.0
    %3020 = vmatpush1.msra.mxu0 0.0
    %3021 = vmatprep.subr.mxu0 0.0
    %3022 = vmatpush1.msra.mxu0 0.0
    %3023 = vmatprep.subr.mxu0 0.0
    %3024 = vmatpush1.msra.mxu0 0.0
    %3025 = vmatprep.subr.mxu0 0.0
    %3026 = vmatpush1.msra.mxu0 0.0
    %3027 = vmatprep.subr.mxu0 0.0
    %3028 = vmatpush1.msra.mxu0 0.0
    %3029 = vmatprep.subr.mxu0 0.0
    %3030 = vmatpush1.msra.mxu0 0.0
    %3031 = vmatprep.mubr.f32.mxu0 0.0
    %3032 = vmatmul.mubr.f32.gmra.mrb[0].mxu0 %v2962
    %v3033 = vpop.f32.mrb[0].mxu0
    %v3034 = vadd.f32 0.0, %v3033
    %v3035 = vpop.f32.mrb[0].mxu0
    %3036 = vmatprep.mubr.f32.mxu0 0.0
    %3037 = vmatmul.mubr.f32.gmra.mrb[0].mxu0 %v2965
    %v3038 = vpop.f32.mrb[0].mxu0
    %v3039 = vadd.f32 0.0, %v3038
    %v3040 = vpop.f32.mrb[0].mxu0
    %3041 = vdwg.mxu0
    %3042 = vrot.lane.b32.xlu0 %v2717, 64
    %v3043 = vpop.permute.xlu0 %3042
    %3044 = vrot.lane.b32.xlu0 %v2722, 64
    %v3045 = vpop.permute.xlu0 %3044
    %v3049 = vsel %vm392, %v2953, 0
    %v3052 = vsel %vm392, %v2954, 0
    %3054 = vmatprep.subr.mxu0 0.0
    %3055 = vmatpush1.msra.mxu0 %v3043
    %3056 = vmatprep.subr.mxu0 0.0
    %3057 = vmatpush1.msra.mxu0 %v3045
    %3058 = vmatprep.subr.mxu0 0.0
    %3059 = vmatpush1.msra.mxu0 0.0
    %3060 = vmatprep.subr.mxu0 0.0
    %3061 = vmatpush1.msra.mxu0 0.0
    %3062 = vmatprep.subr.mxu0 0.0
    %3063 = vmatpush1.msra.mxu0 0.0
    %3064 = vmatprep.subr.mxu0 0.0
    %3065 = vmatpush1.msra.mxu0 0.0
    %3066 = vmatprep.subr.mxu0 0.0
    %3067 = vmatpush1.msra.mxu0 0.0
    %3068 = vmatprep.subr.mxu0 0.0
    %3069 = vmatpush1.msra.mxu0 0.0
    %3070 = vmatprep.subr.mxu0 0.0
    %3071 = vmatpush1.msra.mxu0 0.0
    %3072 = vmatprep.subr.mxu0 0.0
    %3073 = vmatpush1.msra.mxu0 0.0
    %3074 = vmatprep.subr.mxu0 0.0
    %3075 = vmatpush1.msra.mxu0 0.0
    %3076 = vmatprep.subr.mxu0 0.0
    %3077 = vmatpush1.msra.mxu0 0.0
    %3078 = vmatprep.subr.mxu0 0.0
    %3079 = vmatpush1.msra.mxu0 0.0
    %3080 = vmatprep.subr.mxu0 0.0
    %3081 = vmatpush1.msra.mxu0 0.0
    %3082 = vmatprep.subr.mxu0 0.0
    %3083 = vmatpush1.msra.mxu0 0.0
    %3084 = vmatprep.subr.mxu0 0.0
    %3085 = vmatpush1.msra.mxu0 0.0
    %3086 = vmatprep.subr.mxu0 0.0
    %3087 = vmatpush1.msra.mxu0 0.0
    %3088 = vmatprep.subr.mxu0 0.0
    %3089 = vmatpush1.msra.mxu0 0.0
    %3090 = vmatprep.subr.mxu0 0.0
    %3091 = vmatpush1.msra.mxu0 0.0
    %3092 = vmatprep.subr.mxu0 0.0
    %3093 = vmatpush1.msra.mxu0 0.0
    %3094 = vmatprep.subr.mxu0 0.0
    %3095 = vmatpush1.msra.mxu0 0.0
    %3096 = vmatprep.subr.mxu0 0.0
    %3097 = vmatpush1.msra.mxu0 0.0
    %3098 = vmatprep.subr.mxu0 0.0
    %3099 = vmatpush1.msra.mxu0 0.0
    %3100 = vmatprep.subr.mxu0 0.0
    %3101 = vmatpush1.msra.mxu0 0.0
    %3102 = vmatprep.subr.mxu0 0.0
    %3103 = vmatpush1.msra.mxu0 0.0
    %3104 = vmatprep.subr.mxu0 0.0
    %3105 = vmatpush1.msra.mxu0 0.0
    %3106 = vmatprep.subr.mxu0 0.0
    %3107 = vmatpush1.msra.mxu0 0.0
    %3108 = vmatprep.subr.mxu0 0.0
    %3109 = vmatpush1.msra.mxu0 0.0
    %3110 = vmatprep.subr.mxu0 0.0
    %3111 = vmatpush1.msra.mxu0 0.0
    %3112 = vmatprep.subr.mxu0 0.0
    %3113 = vmatpush1.msra.mxu0 0.0
    %3114 = vmatprep.subr.mxu0 0.0
    %3115 = vmatpush1.msra.mxu0 0.0
    %3116 = vmatprep.subr.mxu0 0.0
    %3117 = vmatpush1.msra.mxu0 0.0
    %3118 = vmatprep.mubr.f32.mxu0 0.0
    %3119 = vmatmul.mubr.f32.gmra.mrb[0].mxu0 %v3049
    %v3120 = vpop.f32.mrb[0].mxu0
    %v3121 = vadd.f32 0.0, %v3120
    %v3122 = vpop.f32.mrb[0].mxu0
    %3123 = vmatprep.mubr.f32.mxu0 0.0
    %3124 = vmatmul.mubr.f32.gmra.mrb[0].mxu0 %v3052
    %v3125 = vpop.f32.mrb[0].mxu0
    %v3126 = vadd.f32 0.0, %v3125
    %v3127 = vpop.f32.mrb[0].mxu0
    %3128 = vdwg.mxu0
    %3129 = vrot.lane.b32.xlu0 %v2707, 120
    %v3130 = vpop.permute.xlu0 %3129
    %3131 = vrot.lane.b32.xlu0 %v2712, 120
    %v3132 = vpop.permute.xlu0 %3131
    %3133 = vrot.lane.b32.xlu0 %v2707, 88
    %v3134 = vpop.permute.xlu0 %3133
    %3135 = vrot.lane.b32.xlu0 %v2712, 88
    %v3136 = vpop.permute.xlu0 %3135
    %v3137 = vsel %vm211, %v3130, 0
    %v3139 = vsel %vm211, %v3132, 0
    %v3141 = vsel %vm211, %v3134, 0
    %v3143 = vsel %vm211, %v3136, 0
    %3145 = vmatprep.subr.mxu0 0.0
    %3146 = vmatpush1.xpose.msra.mxu0 %v3141
    %3147 = vmatprep.subr.mxu0 0.0
    %3148 = vmatpush1.xpose.msra.mxu0 %v3143
    %3149 = vmatprep.subr.mxu0 0.0
    %3150 = vmatpush1.xpose.msra.mxu0 0.0
    %3151 = vmatprep.subr.mxu0 0.0
    %3152 = vmatpush1.xpose.msra.mxu0 0.0
    %3153 = vmatprep.subr.mxu0 0.0
    %3154 = vmatpush1.xpose.msra.mxu0 0.0
    %3155 = vmatprep.subr.mxu0 0.0
    %3156 = vmatpush1.xpose.msra.mxu0 0.0
    %3157 = vmatprep.subr.mxu0 0.0
    %3158 = vmatpush1.xpose.msra.mxu0 0.0
    %3159 = vmatprep.subr.mxu0 0.0
    %3160 = vmatpush1.xpose.msra.mxu0 0.0
    %3161 = vmatprep.subr.mxu0 0.0
    %3162 = vmatpush1.xpose.msra.mxu0 0.0
    %3163 = vmatprep.subr.mxu0 0.0
    %3164 = vmatpush1.xpose.msra.mxu0 0.0
    %3165 = vmatprep.subr.mxu0 0.0
    %3166 = vmatpush1.xpose.msra.mxu0 0.0
    %3167 = vmatprep.subr.mxu0 0.0
    %3168 = vmatpush1.xpose.msra.mxu0 0.0
    %3169 = vmatprep.subr.mxu0 0.0
    %3170 = vmatpush1.xpose.msra.mxu0 0.0
    %3171 = vmatprep.subr.mxu0 0.0
    %3172 = vmatpush1.xpose.msra.mxu0 0.0
    %3173 = vmatprep.subr.mxu0 0.0
    %3174 = vmatpush1.xpose.msra.mxu0 0.0
    %3175 = vmatprep.subr.mxu0 0.0
    %3176 = vmatpush1.xpose.msra.mxu0 0.0
    %3177 = vmatprep.subr.mxu0 0.0
    %3178 = vmatpush1.xpose.msra.mxu0 0.0
    %3179 = vmatprep.subr.mxu0 0.0
    %3180 = vmatpush1.xpose.msra.mxu0 0.0
    %3181 = vmatprep.subr.mxu0 0.0
    %3182 = vmatpush1.xpose.msra.mxu0 0.0
    %3183 = vmatprep.subr.mxu0 0.0
    %3184 = vmatpush1.xpose.msra.mxu0 0.0
    %3185 = vmatprep.subr.mxu0 0.0
    %3186 = vmatpush1.xpose.msra.mxu0 0.0
    %3187 = vmatprep.subr.mxu0 0.0
    %3188 = vmatpush1.xpose.msra.mxu0 0.0
    %3189 = vmatprep.subr.mxu0 0.0
    %3190 = vmatpush1.xpose.msra.mxu0 0.0
    %3191 = vmatprep.subr.mxu0 0.0
    %3192 = vmatpush1.xpose.msra.mxu0 0.0
    %3193 = vmatprep.subr.mxu0 0.0
    %3194 = vmatpush1.xpose.msra.mxu0 0.0
    %3195 = vmatprep.subr.mxu0 0.0
    %3196 = vmatpush1.xpose.msra.mxu0 0.0
    %3197 = vmatprep.subr.mxu0 0.0
    %3198 = vmatpush1.xpose.msra.mxu0 0.0
    %3199 = vmatprep.subr.mxu0 0.0
    %3200 = vmatpush1.xpose.msra.mxu0 0.0
    %3201 = vmatprep.subr.mxu0 0.0
    %3202 = vmatpush1.xpose.msra.mxu0 0.0
    %3203 = vmatprep.subr.mxu0 0.0
    %3204 = vmatpush1.xpose.msra.mxu0 0.0
    %3205 = vmatprep.subr.mxu0 0.0
    %3206 = vmatpush1.xpose.msra.mxu0 0.0
    %3207 = vmatprep.subr.mxu0 0.0
    %3208 = vmatpush1.xpose.msra.mxu0 0.0
    %3209 = vmatprep.mubr.f32.mxu0 0.0
    %3210 = vmatmul.mubr.f32.gmra.mrb[0].mxu0 %v3137
    %v3211 = vpop.f32.mrb[0].mxu0
    %v3212 = vadd.f32 0.0, %v3211
    %v3213 = vpop.f32.mrb[0].mxu0
    %3214 = vmatprep.mubr.f32.mxu0 0.0
    %3215 = vmatmul.mubr.f32.gmra.mrb[0].mxu0 %v3139
    %v3216 = vpop.f32.mrb[0].mxu0
    %v3217 = vadd.f32 0.0, %v3216
    %v3218 = vpop.f32.mrb[0].mxu0
    %3219 = vdwg.mxu0
    %3220 = vrot.lane.b32.xlu0 %v2717, 120
    %v3221 = vpop.permute.xlu0 %3220
    %3222 = vrot.lane.b32.xlu0 %v2722, 120
    %v3223 = vpop.permute.xlu0 %3222
    %3224 = vrot.lane.b32.xlu0 %v2717, 88
    %v3225 = vpop.permute.xlu0 %3224
    %3226 = vrot.lane.b32.xlu0 %v2722, 88
    %v3227 = vpop.permute.xlu0 %3226
    %v3228 = vsel %vm211, %v3221, 0
    %v3230 = vsel %vm211, %v3223, 0
    %v3232 = vsel %vm211, %v3225, 0
    %v3234 = vsel %vm211, %v3227, 0
    %3236 = vmatprep.subr.mxu0 0.0
    %3237 = vmatpush1.xpose.msra.mxu0 %v3232
    %3238 = vmatprep.subr.mxu0 0.0
    %3239 = vmatpush1.xpose.msra.mxu0 %v3234
    %3240 = vmatprep.subr.mxu0 0.0
    %3241 = vmatpush1.xpose.msra.mxu0 0.0
    %3242 = vmatprep.subr.mxu0 0.0
    %3243 = vmatpush1.xpose.msra.mxu0 0.0
    %3244 = vmatprep.subr.mxu0 0.0
    %3245 = vmatpush1.xpose.msra.mxu0 0.0
    %3246 = vmatprep.subr.mxu0 0.0
    %3247 = vmatpush1.xpose.msra.mxu0 0.0
    %3248 = vmatprep.subr.mxu0 0.0
    %3249 = vmatpush1.xpose.msra.mxu0 0.0
    %3250 = vmatprep.subr.mxu0 0.0
    %3251 = vmatpush1.xpose.msra.mxu0 0.0
    %3252 = vmatprep.subr.mxu0 0.0
    %3253 = vmatpush1.xpose.msra.mxu0 0.0
    %3254 = vmatprep.subr.mxu0 0.0
    %3255 = vmatpush1.xpose.msra.mxu0 0.0
    %3256 = vmatprep.subr.mxu0 0.0
    %3257 = vmatpush1.xpose.msra.mxu0 0.0
    %3258 = vmatprep.subr.mxu0 0.0
    %3259 = vmatpush1.xpose.msra.mxu0 0.0
    %3260 = vmatprep.subr.mxu0 0.0
    %3261 = vmatpush1.xpose.msra.mxu0 0.0
    %3262 = vmatprep.subr.mxu0 0.0
    %3263 = vmatpush1.xpose.msra.mxu0 0.0
    %3264 = vmatprep.subr.mxu0 0.0
    %3265 = vmatpush1.xpose.msra.mxu0 0.0
    %3266 = vmatprep.subr.mxu0 0.0
    %3267 = vmatpush1.xpose.msra.mxu0 0.0
    %3268 = vmatprep.subr.mxu0 0.0
    %3269 = vmatpush1.xpose.msra.mxu0 0.0
    %3270 = vmatprep.subr.mxu0 0.0
    %3271 = vmatpush1.xpose.msra.mxu0 0.0
    %3272 = vmatprep.subr.mxu0 0.0
    %3273 = vmatpush1.xpose.msra.mxu0 0.0
    %3274 = vmatprep.subr.mxu0 0.0
    %3275 = vmatpush1.xpose.msra.mxu0 0.0
    %3276 = vmatprep.subr.mxu0 0.0
    %3277 = vmatpush1.xpose.msra.mxu0 0.0
    %3278 = vmatprep.subr.mxu0 0.0
    %3279 = vmatpush1.xpose.msra.mxu0 0.0
    %3280 = vmatprep.subr.mxu0 0.0
    %3281 = vmatpush1.xpose.msra.mxu0 0.0
    %3282 = vmatprep.subr.mxu0 0.0
    %3283 = vmatpush1.xpose.msra.mxu0 0.0
    %3284 = vmatprep.subr.mxu0 0.0
    %3285 = vmatpush1.xpose.msra.mxu0 0.0
    %3286 = vmatprep.subr.mxu0 0.0
    %3287 = vmatpush1.xpose.msra.mxu0 0.0
    %3288 = vmatprep.subr.mxu0 0.0
    %3289 = vmatpush1.xpose.msra.mxu0 0.0
    %3290 = vmatprep.subr.mxu0 0.0
    %3291 = vmatpush1.xpose.msra.mxu0 0.0
    %3292 = vmatprep.subr.mxu0 0.0
    %3293 = vmatpush1.xpose.msra.mxu0 0.0
    %3294 = vmatprep.subr.mxu0 0.0
    %3295 = vmatpush1.xpose.msra.mxu0 0.0
    %3296 = vmatprep.subr.mxu0 0.0
    %3297 = vmatpush1.xpose.msra.mxu0 0.0
    %3298 = vmatprep.subr.mxu0 0.0
    %3299 = vmatpush1.xpose.msra.mxu0 0.0
    %3300 = vmatprep.mubr.f32.mxu0 0.0
    %3301 = vmatmul.mubr.f32.gmra.mrb[0].mxu0 %v3228
    %v3302 = vpop.f32.mrb[0].mxu0
    %v3303 = vadd.f32 0.0, %v3302
    %v3304 = vpop.f32.mrb[0].mxu0
    %3305 = vmatprep.mubr.f32.mxu0 0.0
    %3306 = vmatmul.mubr.f32.gmra.mrb[0].mxu0 %v3230
    %v3307 = vpop.f32.mrb[0].mxu0
    %v3308 = vadd.f32 0.0, %v3307
    %v3309 = vpop.f32.mrb[0].mxu0
    %3310 = vdwg.mxu0
    %v3311 = vmul.f32 %v3212, 0.35355338
    %v3312 = vmul.f32 %v3217, 0.35355338
    %v3313 = vmul.f32 %v3303, 0.35355338
    %v3314 = vmul.f32 %v3308, 0.35355338
    %v3315 = vadd.f32 %v3311, %v65
    %v3316 = vadd.f32 %v3312, %v66
    %v3317 = vadd.f32 %v3313, %v67
    %v3318 = vadd.f32 %v3314, %v68
    %v3319 = vsel %vm392, %v3315, -inf
    %3320 = vmax.xlane.f32.xlu0 %v3319
    %v3321 = vpop.xlane.xlu0 %3320
    %v3322 = vsel %vm392, %v3316, -inf
    %3323 = vmax.xlane.f32.xlu0 %v3322
    %v3324 = vpop.xlane.xlu0 %3323
    %v3325 = vsel %vm392, %v3317, -inf
    %3326 = vmax.xlane.f32.xlu0 %v3325
    %v3327 = vpop.xlane.xlu0 %3326
    %v3328 = vsel %vm392, %v3318, -inf
    %3329 = vmax.xlane.f32.xlu0 %v3328
    %v3330 = vpop.xlane.xlu0 %3329
    %v3331 = vsub.f32 %v3315, %v3321
    %v3332 = vsub.f32 %v3316, %v3324
    %v3333 = vsub.f32 %v3317, %v3327
    %v3334 = vsub.f32 %v3318, %v3330
    %v3335 = vmul.f32 %v3331, 1.442695
    %v3336 = vpow.pop %v3335
    %v3337 = vmul.f32 %v3332, 1.442695
    %v3338 = vpow.pop %v3337
    %v3339 = vmul.f32 %v3333, 1.442695
    %v3340 = vpow.pop %v3339
    %v3341 = vmul.f32 %v3334, 1.442695
    %v3342 = vpow.pop %v3341
    %v3343 = vsel %vm392, %v3336, 0.0
    %3344 = vadd.xlane.f32.xlu0 %v3343
    %v3345 = vpop.xlane.xlu0 %3344
    %v3346 = vsel %vm392, %v3338, 0.0
    %3347 = vadd.xlane.f32.xlu0 %v3346
    %v3348 = vpop.xlane.xlu0 %3347
    %v3349 = vsel %vm392, %v3340, 0.0
    %3350 = vadd.xlane.f32.xlu0 %v3349
    %v3351 = vpop.xlane.xlu0 %3350
    %v3352 = vsel %vm392, %v3342, 0.0
    %3353 = vadd.xlane.f32.xlu0 %v3352
    %v3354 = vpop.xlane.xlu0 %3353
    %v3355 = vrcp.pop %v3345
    %v3356 = vrcp.pop %v3348
    %v3357 = vrcp.pop %v3351
    %v3358 = vrcp.pop %v3354
    %v3359 = vmul.f32 %v3336, %v3355
    %v3360 = vmul.f32 %v3338, %v3356
    %v3361 = vmul.f32 %v3340, %v3357
    %v3362 = vmul.f32 %v3342, %v3358
    %3363 = vrot.lane.b32.xlu0 %v2707, 56
    %v3364 = vpop.permute.xlu0 %3363
    %3365 = vrot.lane.b32.xlu0 %v2712, 56
    %v3366 = vpop.permute.xlu0 %3365
    %v3370 = vsel %vm392, %v3359, 0
    %v3373 = vsel %vm392, %v3360, 0
    %3375 = vmatprep.subr.mxu0 0.0
    %3376 = vmatpush1.msra.mxu0 %v3364
    %3377 = vmatprep.subr.mxu0 0.0
    %3378 = vmatpush1.msra.mxu0 %v3366
    %3379 = vmatprep.subr.mxu0 0.0
    %3380 = vmatpush1.msra.mxu0 0.0
    %3381 = vmatprep.subr.mxu0 0.0
    %3382 = vmatpush1.msra.mxu0 0.0
    %3383 = vmatprep.subr.mxu0 0.0
    %3384 = vmatpush1.msra.mxu0 0.0
    %3385 = vmatprep.subr.mxu0 0.0
    %3386 = vmatpush1.msra.mxu0 0.0
    %3387 = vmatprep.subr.mxu0 0.0
    %3388 = vmatpush1.msra.mxu0 0.0
    %3389 = vmatprep.subr.mxu0 0.0
    %3390 = vmatpush1.msra.mxu0 0.0
    %3391 = vmatprep.subr.mxu0 0.0
    %3392 = vmatpush1.msra.mxu0 0.0
    %3393 = vmatprep.subr.mxu0 0.0
    %3394 = vmatpush1.msra.mxu0 0.0
    %3395 = vmatprep.subr.mxu0 0.0
    %3396 = vmatpush1.msra.mxu0 0.0
    %3397 = vmatprep.subr.mxu0 0.0
    %3398 = vmatpush1.msra.mxu0 0.0
    %3399 = vmatprep.subr.mxu0 0.0
    %3400 = vmatpush1.msra.mxu0 0.0
    %3401 = vmatprep.subr.mxu0 0.0
    %3402 = vmatpush1.msra.mxu0 0.0
    %3403 = vmatprep.subr.mxu0 0.0
    %3404 = vmatpush1.msra.mxu0 0.0
    %3405 = vmatprep.subr.mxu0 0.0
    %3406 = vmatpush1.msra.mxu0 0.0
    %3407 = vmatprep.subr.mxu0 0.0
    %3408 = vmatpush1.msra.mxu0 0.0
    %3409 = vmatprep.subr.mxu0 0.0
    %3410 = vmatpush1.msra.mxu0 0.0
    %3411 = vmatprep.subr.mxu0 0.0
    %3412 = vmatpush1.msra.mxu0 0.0
    %3413 = vmatprep.subr.mxu0 0.0
    %3414 = vmatpush1.msra.mxu0 0.0
    %3415 = vmatprep.subr.mxu0 0.0
    %3416 = vmatpush1.msra.mxu0 0.0
    %3417 = vmatprep.subr.mxu0 0.0
    %3418 = vmatpush1.msra.mxu0 0.0
    %3419 = vmatprep.subr.mxu0 0.0
    %3420 = vmatpush1.msra.mxu0 0.0
    %3421 = vmatprep.subr.mxu0 0.0
    %3422 = vmatpush1.msra.mxu0 0.0
    %3423 = vmatprep.subr.mxu0 0.0
    %3424 = vmatpush1.msra.mxu0 0.0
    %3425 = vmatprep.subr.mxu0 0.0
    %3426 = vmatpush1.msra.mxu0 0.0
    %3427 = vmatprep.subr.mxu0 0.0
    %3428 = vmatpush1.msra.mxu0 0.0
    %3429 = vmatprep.subr.mxu0 0.0
    %3430 = vmatpush1.msra.mxu0 0.0
    %3431 = vmatprep.subr.mxu0 0.0
    %3432 = vmatpush1.msra.mxu0 0.0
    %3433 = vmatprep.subr.mxu0 0.0
    %3434 = vmatpush1.msra.mxu0 0.0
    %3435 = vmatprep.subr.mxu0 0.0
    %3436 = vmatpush1.msra.mxu0 0.0
    %3437 = vmatprep.subr.mxu0 0.0
    %3438 = vmatpush1.msra.mxu0 0.0
    %3439 = vmatprep.mubr.f32.mxu0 0.0
    %3440 = vmatmul.mubr.f32.gmra.mrb[0].mxu0 %v3370
    %v3441 = vpop.f32.mrb[0].mxu0
    %v3442 = vadd.f32 0.0, %v3441
    %v3443 = vpop.f32.mrb[0].mxu0
    %3444 = vmatprep.mubr.f32.mxu0 0.0
    %3445 = vmatmul.mubr.f32.gmra.mrb[0].mxu0 %v3373
    %v3446 = vpop.f32.mrb[0].mxu0
    %v3447 = vadd.f32 0.0, %v3446
    %v3448 = vpop.f32.mrb[0].mxu0
    %3449 = vdwg.mxu0
    %3450 = vrot.lane.b32.xlu0 %v2717, 56
    %v3451 = vpop.permute.xlu0 %3450
    %3452 = vrot.lane.b32.xlu0 %v2722, 56
    %v3453 = vpop.permute.xlu0 %3452
    %v3457 = vsel %vm392, %v3361, 0
    %v3460 = vsel %vm392, %v3362, 0
    %3462 = vmatprep.subr.mxu0 0.0
    %3463 = vmatpush1.msra.mxu0 %v3451
    %3464 = vmatprep.subr.mxu0 0.0
    %3465 = vmatpush1.msra.mxu0 %v3453
    %3466 = vmatprep.subr.mxu0 0.0
    %3467 = vmatpush1.msra.mxu0 0.0
    %3468 = vmatprep.subr.mxu0 0.0
    %3469 = vmatpush1.msra.mxu0 0.0
    %3470 = vmatprep.subr.mxu0 0.0
    %3471 = vmatpush1.msra.mxu0 0.0
    %3472 = vmatprep.subr.mxu0 0.0
    %3473 = vmatpush1.msra.mxu0 0.0
    %3474 = vmatprep.subr.mxu0 0.0
    %3475 = vmatpush1.msra.mxu0 0.0
    %3476 = vmatprep.subr.mxu0 0.0
    %3477 = vmatpush1.msra.mxu0 0.0
    %3478 = vmatprep.subr.mxu0 0.0
    %3479 = vmatpush1.msra.mxu0 0.0
    %3480 = vmatprep.subr.mxu0 0.0
    %3481 = vmatpush1.msra.mxu0 0.0
    %3482 = vmatprep.subr.mxu0 0.0
    %3483 = vmatpush1.msra.mxu0 0.0
    %3484 = vmatprep.subr.mxu0 0.0
    %3485 = vmatpush1.msra.mxu0 0.0
    %3486 = vmatprep.subr.mxu0 0.0
    %3487 = vmatpush1.msra.mxu0 0.0
    %3488 = vmatprep.subr.mxu0 0.0
    %3489 = vmatpush1.msra.mxu0 0.0
    %3490 = vmatprep.subr.mxu0 0.0
    %3491 = vmatpush1.msra.mxu0 0.0
    %3492 = vmatprep.subr.mxu0 0.0
    %3493 = vmatpush1.msra.mxu0 0.0
    %3494 = vmatprep.subr.mxu0 0.0
    %3495 = vmatpush1.msra.mxu0 0.0
    %3496 = vmatprep.subr.mxu0 0.0
    %3497 = vmatpush1.msra.mxu0 0.0
    %3498 = vmatprep.subr.mxu0 0.0
    %3499 = vmatpush1.msra.mxu0 0.0
    %3500 = vmatprep.subr.mxu0 0.0
    %3501 = vmatpush1.msra.mxu0 0.0
    %3502 = vmatprep.subr.mxu0 0.0
    %3503 = vmatpush1.msra.mxu0 0.0
    %3504 = vmatprep.subr.mxu0 0.0
    %3505 = vmatpush1.msra.mxu0 0.0
    %3506 = vmatprep.subr.mxu0 0.0
    %3507 = vmatpush1.msra.mxu0 0.0
    %3508 = vmatprep.subr.mxu0 0.0
    %3509 = vmatpush1.msra.mxu0 0.0
    %3510 = vmatprep.subr.mxu0 0.0
    %3511 = vmatpush1.msra.mxu0 0.0
    %3512 = vmatprep.subr.mxu0 0.0
    %3513 = vmatpush1.msra.mxu0 0.0
    %3514 = vmatprep.subr.mxu0 0.0
    %3515 = vmatpush1.msra.mxu0 0.0
    %3516 = vmatprep.subr.mxu0 0.0
    %3517 = vmatpush1.msra.mxu0 0.0
    %3518 = vmatprep.subr.mxu0 0.0
    %3519 = vmatpush1.msra.mxu0 0.0
    %3520 = vmatprep.subr.mxu0 0.0
    %3521 = vmatpush1.msra.mxu0 0.0
    %3522 = vmatprep.subr.mxu0 0.0
    %3523 = vmatpush1.msra.mxu0 0.0
    %3524 = vmatprep.subr.mxu0 0.0
    %3525 = vmatpush1.msra.mxu0 0.0
    %3526 = vmatprep.mubr.f32.mxu0 0.0
    %3527 = vmatmul.mubr.f32.gmra.mrb[0].mxu0 %v3457
    %v3528 = vpop.f32.mrb[0].mxu0
    %v3529 = vadd.f32 0.0, %v3528
    %v3530 = vpop.f32.mrb[0].mxu0
    %3531 = vmatprep.mubr.f32.mxu0 0.0
    %3532 = vmatmul.mubr.f32.gmra.mrb[0].mxu0 %v3460
    %v3533 = vpop.f32.mrb[0].mxu0
    %v3534 = vadd.f32 0.0, %v3533
    %v3535 = vpop.f32.mrb[0].mxu0
    %3536 = vdwg.mxu0
    %v3538 = vsel %vm211, %v3442, 0
    %v3541 = vsel %vm211, %v3447, 0
    %v3544 = vsel %vm211, %v3529, 0
    %v3547 = vsel %vm211, %v3534, 0
    %3549 = vmatprep.subr.mxu0 0.0
    %3550 = vmatpush1.msra.mxu0 %v2595
    %3551 = vmatprep.subr.mxu0 0.0
    %3552 = vmatpush1.msra.mxu0 0.0
    %3553 = vmatprep.subr.mxu0 0.0
    %3554 = vmatpush1.msra.mxu0 0.0
    %3555 = vmatprep.subr.mxu0 0.0
    %3556 = vmatpush1.msra.mxu0 0.0
    %3557 = vmatprep.subr.mxu0 0.0
    %3558 = vmatpush1.msra.mxu0 0.0
    %3559 = vmatprep.subr.mxu0 0.0
    %3560 = vmatpush1.msra.mxu0 0.0
    %3561 = vmatprep.subr.mxu0 0.0
    %3562 = vmatpush1.msra.mxu0 0.0
    %3563 = vmatprep.subr.mxu0 0.0
    %3564 = vmatpush1.msra.mxu0 0.0
    %3565 = vmatprep.subr.mxu0 0.0
    %3566 = vmatpush1.msra.mxu0 0.0
    %3567 = vmatprep.subr.mxu0 0.0
    %3568 = vmatpush1.msra.mxu0 0.0
    %3569 = vmatprep.subr.mxu0 0.0
    %3570 = vmatpush1.msra.mxu0 0.0
    %3571 = vmatprep.subr.mxu0 0.0
    %3572 = vmatpush1.msra.mxu0 0.0
    %3573 = vmatprep.subr.mxu0 0.0
    %3574 = vmatpush1.msra.mxu0 0.0
    %3575 = vmatprep.subr.mxu0 0.0
    %3576 = vmatpush1.msra.mxu0 0.0
    %3577 = vmatprep.subr.mxu0 0.0
    %3578 = vmatpush1.msra.mxu0 0.0
    %3579 = vmatprep.subr.mxu0 0.0
    %3580 = vmatpush1.msra.mxu0 0.0
    %3581 = vmatprep.subr.mxu0 0.0
    %3582 = vmatpush1.msra.mxu0 0.0
    %3583 = vmatprep.subr.mxu0 0.0
    %3584 = vmatpush1.msra.mxu0 0.0
    %3585 = vmatprep.subr.mxu0 0.0
    %3586 = vmatpush1.msra.mxu0 0.0
    %3587 = vmatprep.subr.mxu0 0.0
    %3588 = vmatpush1.msra.mxu0 0.0
    %3589 = vmatprep.subr.mxu0 0.0
    %3590 = vmatpush1.msra.mxu0 0.0
    %3591 = vmatprep.subr.mxu0 0.0
    %3592 = vmatpush1.msra.mxu0 0.0
    %3593 = vmatprep.subr.mxu0 0.0
    %3594 = vmatpush1.msra.mxu0 0.0
    %3595 = vmatprep.subr.mxu0 0.0
    %3596 = vmatpush1.msra.mxu0 0.0
    %3597 = vmatprep.subr.mxu0 0.0
    %3598 = vmatpush1.msra.mxu0 0.0
    %3599 = vmatprep.subr.mxu0 0.0
    %3600 = vmatpush1.msra.mxu0 0.0
    %3601 = vmatprep.subr.mxu0 0.0
    %3602 = vmatpush1.msra.mxu0 0.0
    %3603 = vmatprep.subr.mxu0 0.0
    %3604 = vmatpush1.msra.mxu0 0.0
    %3605 = vmatprep.subr.mxu0 0.0
    %3606 = vmatpush1.msra.mxu0 0.0
    %3607 = vmatprep.subr.mxu0 0.0
    %3608 = vmatpush1.msra.mxu0 0.0
    %3609 = vmatprep.subr.mxu0 0.0
    %3610 = vmatpush1.msra.mxu0 0.0
    %3611 = vmatprep.subr.mxu0 0.0
    %3612 = vmatpush1.msra.mxu0 0.0
    %3613 = vmatprep.mubr.f32.mxu0 0.0
    %3614 = vmatmul.mubr.f32.gmra.mrb[0].mxu0 %v3538
    %v3615 = vpop.f32.mrb[0].mxu0
    %v3616 = vadd.f32 0.0, %v3615
    %v3617 = vpop.f32.mrb[0].mxu0
    %3618 = vmatprep.mubr.f32.mxu0 0.0
    %3619 = vmatmul.mubr.f32.gmra.mrb[0].mxu0 %v3541
    %v3620 = vpop.f32.mrb[0].mxu0
    %v3621 = vadd.f32 0.0, %v3620
    %v3622 = vpop.f32.mrb[0].mxu0
    %3623 = vmatprep.mubr.f32.mxu0 0.0
    %3624 = vmatmul.mubr.f32.gmra.mrb[0].mxu0 %v3544
    %v3625 = vpop.f32.mrb[0].mxu0
    %v3626 = vadd.f32 0.0, %v3625
    %v3627 = vpop.f32.mrb[0].mxu0
    %3628 = vmatprep.mubr.f32.mxu0 0.0
    %3629 = vmatmul.mubr.f32.gmra.mrb[0].mxu0 %v3547
    %v3630 = vpop.f32.mrb[0].mxu0
    %v3631 = vadd.f32 0.0, %v3630
    %v3632 = vpop.f32.mrb[0].mxu0
    %3633 = vdwg.mxu0
    %v3635 = vsel %vm211, %v3034, 0
    %v3638 = vsel %vm211, %v3039, 0
    %v3641 = vsel %vm211, %v3121, 0
    %v3644 = vsel %vm211, %v3126, 0
    %3646 = vmatprep.subr.mxu0 0.0
    %3647 = vmatpush1.msra.mxu0 %v2594
    %3648 = vmatprep.subr.mxu0 0.0
    %3649 = vmatpush1.msra.mxu0 0.0
    %3650 = vmatprep.subr.mxu0 0.0
    %3651 = vmatpush1.msra.mxu0 0.0
    %3652 = vmatprep.subr.mxu0 0.0
    %3653 = vmatpush1.msra.mxu0 0.0
    %3654 = vmatprep.subr.mxu0 0.0
    %3655 = vmatpush1.msra.mxu0 0.0
    %3656 = vmatprep.subr.mxu0 0.0
    %3657 = vmatpush1.msra.mxu0 0.0
    %3658 = vmatprep.subr.mxu0 0.0
    %3659 = vmatpush1.msra.mxu0 0.0
    %3660 = vmatprep.subr.mxu0 0.0
    %3661 = vmatpush1.msra.mxu0 0.0
    %3662 = vmatprep.subr.mxu0 0.0
    %3663 = vmatpush1.msra.mxu0 0.0
    %3664 = vmatprep.subr.mxu0 0.0
    %3665 = vmatpush1.msra.mxu0 0.0
    %3666 = vmatprep.subr.mxu0 0.0
    %3667 = vmatpush1.msra.mxu0 0.0
    %3668 = vmatprep.subr.mxu0 0.0
    %3669 = vmatpush1.msra.mxu0 0.0
    %3670 = vmatprep.subr.mxu0 0.0
    %3671 = vmatpush1.msra.mxu0 0.0
    %3672 = vmatprep.subr.mxu0 0.0
    %3673 = vmatpush1.msra.mxu0 0.0
    %3674 = vmatprep.subr.mxu0 0.0
    %3675 = vmatpush1.msra.mxu0 0.0
    %3676 = vmatprep.subr.mxu0 0.0
    %3677 = vmatpush1.msra.mxu0 0.0
    %3678 = vmatprep.subr.mxu0 0.0
    %3679 = vmatpush1.msra.mxu0 0.0
    %3680 = vmatprep.subr.mxu0 0.0
    %3681 = vmatpush1.msra.mxu0 0.0
    %3682 = vmatprep.subr.mxu0 0.0
    %3683 = vmatpush1.msra.mxu0 0.0
    %3684 = vmatprep.subr.mxu0 0.0
    %3685 = vmatpush1.msra.mxu0 0.0
    %3686 = vmatprep.subr.mxu0 0.0
    %3687 = vmatpush1.msra.mxu0 0.0
    %3688 = vmatprep.subr.mxu0 0.0
    %3689 = vmatpush1.msra.mxu0 0.0
    %3690 = vmatprep.subr.mxu0 0.0
    %3691 = vmatpush1.msra.mxu0 0.0
    %3692 = vmatprep.subr.mxu0 0.0
    %3693 = vmatpush1.msra.mxu0 0.0
    %3694 = vmatprep.subr.mxu0 0.0
    %3695 = vmatpush1.msra.mxu0 0.0
    %3696 = vmatprep.subr.mxu0 0.0
    %3697 = vmatpush1.msra.mxu0 0.0
    %3698 = vmatprep.subr.mxu0 0.0
    %3699 = vmatpush1.msra.mxu0 0.0
    %3700 = vmatprep.subr.mxu0 0.0
    %3701 = vmatpush1.msra.mxu0 0.0
    %3702 = vmatprep.subr.mxu0 0.0
    %3703 = vmatpush1.msra.mxu0 0.0
    %3704 = vmatprep.subr.mxu0 0.0
    %3705 = vmatpush1.msra.mxu0 0.0
    %3706 = vmatprep.subr.mxu0 0.0
    %3707 = vmatpush1.msra.mxu0 0.0
    %3708 = vmatprep.subr.mxu0 0.0
    %3709 = vmatpush1.msra.mxu0 0.0
    %3710 = vmatprep.mubr.f32.mxu0 0.0
    %3711 = vmatmul.mubr.f32.gmra.mrb[0].mxu0 %v3635
    %v3712 = vpop.f32.mrb[0].mxu0
    %v3713 = vadd.f32 %v3616, %v3712
    %v3714 = vpop.f32.mrb[0].mxu0
    %3715 = vmatprep.mubr.f32.mxu0 0.0
    %3716 = vmatmul.mubr.f32.gmra.mrb[0].mxu0 %v3638
    %v3717 = vpop.f32.mrb[0].mxu0
    %v3718 = vadd.f32 %v3621, %v3717
    %v3719 = vpop.f32.mrb[0].mxu0
    %3720 = vmatprep.mubr.f32.mxu0 0.0
    %3721 = vmatmul.mubr.f32.gmra.mrb[0].mxu0 %v3641
    %v3722 = vpop.f32.mrb[0].mxu0
    %v3723 = vadd.f32 %v3626, %v3722
    %v3724 = vpop.f32.mrb[0].mxu0
    %3725 = vmatprep.mubr.f32.mxu0 0.0
    %3726 = vmatmul.mubr.f32.gmra.mrb[0].mxu0 %v3644
    %v3727 = vpop.f32.mrb[0].mxu0
    %v3728 = vadd.f32 %v3631, %v3727
    %v3729 = vpop.f32.mrb[0].mxu0
    %3730 = vdwg.mxu0
    %3731 = vrot.lane.b32.xlu0 %v2707, 112
    %v3732 = vpop.permute.xlu0 %3731
    %3733 = vrot.lane.b32.xlu0 %v2712, 112
    %v3734 = vpop.permute.xlu0 %3733
    %3735 = vrot.lane.b32.xlu0 %v2707, 80
    %v3736 = vpop.permute.xlu0 %3735
    %3737 = vrot.lane.b32.xlu0 %v2712, 80
    %v3738 = vpop.permute.xlu0 %3737
    %v3739 = vsel %vm211, %v3732, 0
    %v3741 = vsel %vm211, %v3734, 0
    %v3743 = vsel %vm211, %v3736, 0
    %v3745 = vsel %vm211, %v3738, 0
    %3747 = vmatprep.subr.mxu0 0.0
    %3748 = vmatpush1.xpose.msra.mxu0 %v3743
    %3749 = vmatprep.subr.mxu0 0.0
    %3750 = vmatpush1.xpose.msra.mxu0 %v3745
    %3751 = vmatprep.subr.mxu0 0.0
    %3752 = vmatpush1.xpose.msra.mxu0 0.0
    %3753 = vmatprep.subr.mxu0 0.0
    %3754 = vmatpush1.xpose.msra.mxu0 0.0
    %3755 = vmatprep.subr.mxu0 0.0
    %3756 = vmatpush1.xpose.msra.mxu0 0.0
    %3757 = vmatprep.subr.mxu0 0.0
    %3758 = vmatpush1.xpose.msra.mxu0 0.0
    %3759 = vmatprep.subr.mxu0 0.0
    %3760 = vmatpush1.xpose.msra.mxu0 0.0
    %3761 = vmatprep.subr.mxu0 0.0
    %3762 = vmatpush1.xpose.msra.mxu0 0.0
    %3763 = vmatprep.subr.mxu0 0.0
    %3764 = vmatpush1.xpose.msra.mxu0 0.0
    %3765 = vmatprep.subr.mxu0 0.0
    %3766 = vmatpush1.xpose.msra.mxu0 0.0
    %3767 = vmatprep.subr.mxu0 0.0
    %3768 = vmatpush1.xpose.msra.mxu0 0.0
    %3769 = vmatprep.subr.mxu0 0.0
    %3770 = vmatpush1.xpose.msra.mxu0 0.0
    %3771 = vmatprep.subr.mxu0 0.0
    %3772 = vmatpush1.xpose.msra.mxu0 0.0
    %3773 = vmatprep.subr.mxu0 0.0
    %3774 = vmatpush1.xpose.msra.mxu0 0.0
    %3775 = vmatprep.subr.mxu0 0.0
    %3776 = vmatpush1.xpose.msra.mxu0 0.0
    %3777 = vmatprep.subr.mxu0 0.0
    %3778 = vmatpush1.xpose.msra.mxu0 0.0
    %3779 = vmatprep.subr.mxu0 0.0
    %3780 = vmatpush1.xpose.msra.mxu0 0.0
    %3781 = vmatprep.subr.mxu0 0.0
    %3782 = vmatpush1.xpose.msra.mxu0 0.0
    %3783 = vmatprep.subr.mxu0 0.0
    %3784 = vmatpush1.xpose.msra.mxu0 0.0
    %3785 = vmatprep.subr.mxu0 0.0
    %3786 = vmatpush1.xpose.msra.mxu0 0.0
    %3787 = vmatprep.subr.mxu0 0.0
    %3788 = vmatpush1.xpose.msra.mxu0 0.0
    %3789 = vmatprep.subr.mxu0 0.0
    %3790 = vmatpush1.xpose.msra.mxu0 0.0
    %3791 = vmatprep.subr.mxu0 0.0
    %3792 = vmatpush1.xpose.msra.mxu0 0.0
    %3793 = vmatprep.subr.mxu0 0.0
    %3794 = vmatpush1.xpose.msra.mxu0 0.0
    %3795 = vmatprep.subr.mxu0 0.0
    %3796 = vmatpush1.xpose.msra.mxu0 0.0
    %3797 = vmatprep.subr.mxu0 0.0
    %3798 = vmatpush1.xpose.msra.mxu0 0.0
    %3799 = vmatprep.subr.mxu0 0.0
    %3800 = vmatpush1.xpose.msra.mxu0 0.0
    %3801 = vmatprep.subr.mxu0 0.0
    %3802 = vmatpush1.xpose.msra.mxu0 0.0
    %3803 = vmatprep.subr.mxu0 0.0
    %3804 = vmatpush1.xpose.msra.mxu0 0.0
    %3805 = vmatprep.subr.mxu0 0.0
    %3806 = vmatpush1.xpose.msra.mxu0 0.0
    %3807 = vmatprep.subr.mxu0 0.0
    %3808 = vmatpush1.xpose.msra.mxu0 0.0
    %3809 = vmatprep.subr.mxu0 0.0
    %3810 = vmatpush1.xpose.msra.mxu0 0.0
    %3811 = vmatprep.mubr.f32.mxu0 0.0
    %3812 = vmatmul.mubr.f32.gmra.mrb[0].mxu0 %v3739
    %v3813 = vpop.f32.mrb[0].mxu0
    %v3814 = vadd.f32 0.0, %v3813
    %v3815 = vpop.f32.mrb[0].mxu0
    %3816 = vmatprep.mubr.f32.mxu0 0.0
    %3817 = vmatmul.mubr.f32.gmra.mrb[0].mxu0 %v3741
    %v3818 = vpop.f32.mrb[0].mxu0
    %v3819 = vadd.f32 0.0, %v3818
    %v3820 = vpop.f32.mrb[0].mxu0
    %3821 = vdwg.mxu0
    %3822 = vrot.lane.b32.xlu0 %v2717, 112
    %v3823 = vpop.permute.xlu0 %3822
    %3824 = vrot.lane.b32.xlu0 %v2722, 112
    %v3825 = vpop.permute.xlu0 %3824
    %3826 = vrot.lane.b32.xlu0 %v2717, 80
    %v3827 = vpop.permute.xlu0 %3826
    %3828 = vrot.lane.b32.xlu0 %v2722, 80
    %v3829 = vpop.permute.xlu0 %3828
    %v3830 = vsel %vm211, %v3823, 0
    %v3832 = vsel %vm211, %v3825, 0
    %v3834 = vsel %vm211, %v3827, 0
    %v3836 = vsel %vm211, %v3829, 0
    %3838 = vmatprep.subr.mxu0 0.0
    %3839 = vmatpush1.xpose.msra.mxu0 %v3834
    %3840 = vmatprep.subr.mxu0 0.0
    %3841 = vmatpush1.xpose.msra.mxu0 %v3836
    %3842 = vmatprep.subr.mxu0 0.0
    %3843 = vmatpush1.xpose.msra.mxu0 0.0
    %3844 = vmatprep.subr.mxu0 0.0
    %3845 = vmatpush1.xpose.msra.mxu0 0.0
    %3846 = vmatprep.subr.mxu0 0.0
    %3847 = vmatpush1.xpose.msra.mxu0 0.0
    %3848 = vmatprep.subr.mxu0 0.0
    %3849 = vmatpush1.xpose.msra.mxu0 0.0
    %3850 = vmatprep.subr.mxu0 0.0
    %3851 = vmatpush1.xpose.msra.mxu0 0.0
    %3852 = vmatprep.subr.mxu0 0.0
    %3853 = vmatpush1.xpose.msra.mxu0 0.0
    %3854 = vmatprep.subr.mxu0 0.0
    %3855 = vmatpush1.xpose.msra.mxu0 0.0
    %3856 = vmatprep.subr.mxu0 0.0
    %3857 = vmatpush1.xpose.msra.mxu0 0.0
    %3858 = vmatprep.subr.mxu0 0.0
    %3859 = vmatpush1.xpose.msra.mxu0 0.0
    %3860 = vmatprep.subr.mxu0 0.0
    %3861 = vmatpush1.xpose.msra.mxu0 0.0
    %3862 = vmatprep.subr.mxu0 0.0
    %3863 = vmatpush1.xpose.msra.mxu0 0.0
    %3864 = vmatprep.subr.mxu0 0.0
    %3865 = vmatpush1.xpose.msra.mxu0 0.0
    %3866 = vmatprep.subr.mxu0 0.0
    %3867 = vmatpush1.xpose.msra.mxu0 0.0
    %3868 = vmatprep.subr.mxu0 0.0
    %3869 = vmatpush1.xpose.msra.mxu0 0.0
    %3870 = vmatprep.subr.mxu0 0.0
    %3871 = vmatpush1.xpose.msra.mxu0 0.0
    %3872 = vmatprep.subr.mxu0 0.0
    %3873 = vmatpush1.xpose.msra.mxu0 0.0
    %3874 = vmatprep.subr.mxu0 0.0
    %3875 = vmatpush1.xpose.msra.mxu0 0.0
    %3876 = vmatprep.subr.mxu0 0.0
    %3877 = vmatpush1.xpose.msra.mxu0 0.0
    %3878 = vmatprep.subr.mxu0 0.0
    %3879 = vmatpush1.xpose.msra.mxu0 0.0
    %3880 = vmatprep.subr.mxu0 0.0
    %3881 = vmatpush1.xpose.msra.mxu0 0.0
    %3882 = vmatprep.subr.mxu0 0.0
    %3883 = vmatpush1.xpose.msra.mxu0 0.0
    %3884 = vmatprep.subr.mxu0 0.0
    %3885 = vmatpush1.xpose.msra.mxu0 0.0
    %3886 = vmatprep.subr.mxu0 0.0
    %3887 = vmatpush1.xpose.msra.mxu0 0.0
    %3888 = vmatprep.subr.mxu0 0.0
    %3889 = vmatpush1.xpose.msra.mxu0 0.0
    %3890 = vmatprep.subr.mxu0 0.0
    %3891 = vmatpush1.xpose.msra.mxu0 0.0
    %3892 = vmatprep.subr.mxu0 0.0
    %3893 = vmatpush1.xpose.msra.mxu0 0.0
    %3894 = vmatprep.subr.mxu0 0.0
    %3895 = vmatpush1.xpose.msra.mxu0 0.0
    %3896 = vmatprep.subr.mxu0 0.0
    %3897 = vmatpush1.xpose.msra.mxu0 0.0
    %3898 = vmatprep.subr.mxu0 0.0
    %3899 = vmatpush1.xpose.msra.mxu0 0.0
    %3900 = vmatprep.subr.mxu0 0.0
    %3901 = vmatpush1.xpose.msra.mxu0 0.0
    %3902 = vmatprep.mubr.f32.mxu0 0.0
    %3903 = vmatmul.mubr.f32.gmra.mrb[0].mxu0 %v3830
    %v3904 = vpop.f32.mrb[0].mxu0
    %v3905 = vadd.f32 0.0, %v3904
    %v3906 = vpop.f32.mrb[0].mxu0
    %3907 = vmatprep.mubr.f32.mxu0 0.0
    %3908 = vmatmul.mubr.f32.gmra.mrb[0].mxu0 %v3832
    %v3909 = vpop.f32.mrb[0].mxu0
    %v3910 = vadd.f32 0.0, %v3909
    %v3911 = vpop.f32.mrb[0].mxu0
    %3912 = vdwg.mxu0
    %v3913 = vmul.f32 %v3814, 0.35355338
    %v3914 = vmul.f32 %v3819, 0.35355338
    %v3915 = vmul.f32 %v3905, 0.35355338
    %v3916 = vmul.f32 %v3910, 0.35355338
    %v3917 = vadd.f32 %v3913, %v65
    %v3918 = vadd.f32 %v3914, %v66
    %v3919 = vadd.f32 %v3915, %v67
    %v3920 = vadd.f32 %v3916, %v68
    %v3921 = vsel %vm392, %v3917, -inf
    %3922 = vmax.xlane.f32.xlu0 %v3921
    %v3923 = vpop.xlane.xlu0 %3922
    %v3924 = vsel %vm392, %v3918, -inf
    %3925 = vmax.xlane.f32.xlu0 %v3924
    %v3926 = vpop.xlane.xlu0 %3925
    %v3927 = vsel %vm392, %v3919, -inf
    %3928 = vmax.xlane.f32.xlu0 %v3927
    %v3929 = vpop.xlane.xlu0 %3928
    %v3930 = vsel %vm392, %v3920, -inf
    %3931 = vmax.xlane.f32.xlu0 %v3930
    %v3932 = vpop.xlane.xlu0 %3931
    %v3933 = vsub.f32 %v3917, %v3923
    %v3934 = vsub.f32 %v3918, %v3926
    %v3935 = vsub.f32 %v3919, %v3929
    %v3936 = vsub.f32 %v3920, %v3932
    %v3937 = vmul.f32 %v3933, 1.442695
    %v3938 = vpow.pop %v3937
    %v3939 = vmul.f32 %v3934, 1.442695
    %v3940 = vpow.pop %v3939
    %v3941 = vmul.f32 %v3935, 1.442695
    %v3942 = vpow.pop %v3941
    %v3943 = vmul.f32 %v3936, 1.442695
    %v3944 = vpow.pop %v3943
    %v3945 = vsel %vm392, %v3938, 0.0
    %3946 = vadd.xlane.f32.xlu0 %v3945
    %v3947 = vpop.xlane.xlu0 %3946
    %v3948 = vsel %vm392, %v3940, 0.0
    %3949 = vadd.xlane.f32.xlu0 %v3948
    %v3950 = vpop.xlane.xlu0 %3949
    %v3951 = vsel %vm392, %v3942, 0.0
    %3952 = vadd.xlane.f32.xlu0 %v3951
    %v3953 = vpop.xlane.xlu0 %3952
    %v3954 = vsel %vm392, %v3944, 0.0
    %3955 = vadd.xlane.f32.xlu0 %v3954
    %v3956 = vpop.xlane.xlu0 %3955
    %v3957 = vrcp.pop %v3947
    %v3958 = vrcp.pop %v3950
    %v3959 = vrcp.pop %v3953
    %v3960 = vrcp.pop %v3956
    %v3961 = vmul.f32 %v3938, %v3957
    %v3962 = vmul.f32 %v3940, %v3958
    %v3963 = vmul.f32 %v3942, %v3959
    %v3964 = vmul.f32 %v3944, %v3960
    %3965 = vrot.lane.b32.xlu0 %v2707, 48
    %v3966 = vpop.permute.xlu0 %3965
    %3967 = vrot.lane.b32.xlu0 %v2712, 48
    %v3968 = vpop.permute.xlu0 %3967
    %v3972 = vsel %vm392, %v3961, 0
    %v3975 = vsel %vm392, %v3962, 0
    %3977 = vmatprep.subr.mxu0 0.0
    %3978 = vmatpush1.msra.mxu0 %v3966
    %3979 = vmatprep.subr.mxu0 0.0
    %3980 = vmatpush1.msra.mxu0 %v3968
    %3981 = vmatprep.subr.mxu0 0.0
    %3982 = vmatpush1.msra.mxu0 0.0
    %3983 = vmatprep.subr.mxu0 0.0
    %3984 = vmatpush1.msra.mxu0 0.0
    %3985 = vmatprep.subr.mxu0 0.0
    %3986 = vmatpush1.msra.mxu0 0.0
    %3987 = vmatprep.subr.mxu0 0.0
    %3988 = vmatpush1.msra.mxu0 0.0
    %3989 = vmatprep.subr.mxu0 0.0
    %3990 = vmatpush1.msra.mxu0 0.0
    %3991 = vmatprep.subr.mxu0 0.0
    %3992 = vmatpush1.msra.mxu0 0.0
    %3993 = vmatprep.subr.mxu0 0.0
    %3994 = vmatpush1.msra.mxu0 0.0
    %3995 = vmatprep.subr.mxu0 0.0
    %3996 = vmatpush1.msra.mxu0 0.0
    %3997 = vmatprep.subr.mxu0 0.0
    %3998 = vmatpush1.msra.mxu0 0.0
    %3999 = vmatprep.subr.mxu0 0.0
    %4000 = vmatpush1.msra.mxu0 0.0
    %4001 = vmatprep.subr.mxu0 0.0
    %4002 = vmatpush1.msra.mxu0 0.0
    %4003 = vmatprep.subr.mxu0 0.0
    %4004 = vmatpush1.msra.mxu0 0.0
    %4005 = vmatprep.subr.mxu0 0.0
    %4006 = vmatpush1.msra.mxu0 0.0
    %4007 = vmatprep.subr.mxu0 0.0
    %4008 = vmatpush1.msra.mxu0 0.0
    %4009 = vmatprep.subr.mxu0 0.0
    %4010 = vmatpush1.msra.mxu0 0.0
    %4011 = vmatprep.subr.mxu0 0.0
    %4012 = vmatpush1.msra.mxu0 0.0
    %4013 = vmatprep.subr.mxu0 0.0
    %4014 = vmatpush1.msra.mxu0 0.0
    %4015 = vmatprep.subr.mxu0 0.0
    %4016 = vmatpush1.msra.mxu0 0.0
    %4017 = vmatprep.subr.mxu0 0.0
    %4018 = vmatpush1.msra.mxu0 0.0
    %4019 = vmatprep.subr.mxu0 0.0
    %4020 = vmatpush1.msra.mxu0 0.0
    %4021 = vmatprep.subr.mxu0 0.0
    %4022 = vmatpush1.msra.mxu0 0.0
    %4023 = vmatprep.subr.mxu0 0.0
    %4024 = vmatpush1.msra.mxu0 0.0
    %4025 = vmatprep.subr.mxu0 0.0
    %4026 = vmatpush1.msra.mxu0 0.0
    %4027 = vmatprep.subr.mxu0 0.0
    %4028 = vmatpush1.msra.mxu0 0.0
    %4029 = vmatprep.subr.mxu0 0.0
    %4030 = vmatpush1.msra.mxu0 0.0
    %4031 = vmatprep.subr.mxu0 0.0
    %4032 = vmatpush1.msra.mxu0 0.0
    %4033 = vmatprep.subr.mxu0 0.0
    %4034 = vmatpush1.msra.mxu0 0.0
    %4035 = vmatprep.subr.mxu0 0.0
    %4036 = vmatpush1.msra.mxu0 0.0
    %4037 = vmatprep.subr.mxu0 0.0
    %4038 = vmatpush1.msra.mxu0 0.0
    %4039 = vmatprep.subr.mxu0 0.0
    %4040 = vmatpush1.msra.mxu0 0.0
    %4041 = vmatprep.mubr.f32.mxu0 0.0
    %4042 = vmatmul.mubr.f32.gmra.mrb[0].mxu0 %v3972
    %v4043 = vpop.f32.mrb[0].mxu0
    %v4044 = vadd.f32 0.0, %v4043
    %v4045 = vpop.f32.mrb[0].mxu0
    %4046 = vmatprep.mubr.f32.mxu0 0.0
    %4047 = vmatmul.mubr.f32.gmra.mrb[0].mxu0 %v3975
    %v4048 = vpop.f32.mrb[0].mxu0
    %v4049 = vadd.f32 0.0, %v4048
    %v4050 = vpop.f32.mrb[0].mxu0
    %4051 = vdwg.mxu0
    %4052 = vrot.lane.b32.xlu0 %v2717, 48
    %v4053 = vpop.permute.xlu0 %4052
    %4054 = vrot.lane.b32.xlu0 %v2722, 48
    %v4055 = vpop.permute.xlu0 %4054
    %v4059 = vsel %vm392, %v3963, 0
    %v4062 = vsel %vm392, %v3964, 0
    %4064 = vmatprep.subr.mxu0 0.0
    %4065 = vmatpush1.msra.mxu0 %v4053
    %4066 = vmatprep.subr.mxu0 0.0
    %4067 = vmatpush1.msra.mxu0 %v4055
    %4068 = vmatprep.subr.mxu0 0.0
    %4069 = vmatpush1.msra.mxu0 0.0
    %4070 = vmatprep.subr.mxu0 0.0
    %4071 = vmatpush1.msra.mxu0 0.0
    %4072 = vmatprep.subr.mxu0 0.0
    %4073 = vmatpush1.msra.mxu0 0.0
    %4074 = vmatprep.subr.mxu0 0.0
    %4075 = vmatpush1.msra.mxu0 0.0
    %4076 = vmatprep.subr.mxu0 0.0
    %4077 = vmatpush1.msra.mxu0 0.0
    %4078 = vmatprep.subr.mxu0 0.0
    %4079 = vmatpush1.msra.mxu0 0.0
    %4080 = vmatprep.subr.mxu0 0.0
    %4081 = vmatpush1.msra.mxu0 0.0
    %4082 = vmatprep.subr.mxu0 0.0
    %4083 = vmatpush1.msra.mxu0 0.0
    %4084 = vmatprep.subr.mxu0 0.0
    %4085 = vmatpush1.msra.mxu0 0.0
    %4086 = vmatprep.subr.mxu0 0.0
    %4087 = vmatpush1.msra.mxu0 0.0
    %4088 = vmatprep.subr.mxu0 0.0
    %4089 = vmatpush1.msra.mxu0 0.0
    %4090 = vmatprep.subr.mxu0 0.0
    %4091 = vmatpush1.msra.mxu0 0.0
    %4092 = vmatprep.subr.mxu0 0.0
    %4093 = vmatpush1.msra.mxu0 0.0
    %4094 = vmatprep.subr.mxu0 0.0
    %4095 = vmatpush1.msra.mxu0 0.0
    %4096 = vmatprep.subr.mxu0 0.0
    %4097 = vmatpush1.msra.mxu0 0.0
    %4098 = vmatprep.subr.mxu0 0.0
    %4099 = vmatpush1.msra.mxu0 0.0
    %4100 = vmatprep.subr.mxu0 0.0
    %4101 = vmatpush1.msra.mxu0 0.0
    %4102 = vmatprep.subr.mxu0 0.0
    %4103 = vmatpush1.msra.mxu0 0.0
    %4104 = vmatprep.subr.mxu0 0.0
    %4105 = vmatpush1.msra.mxu0 0.0
    %4106 = vmatprep.subr.mxu0 0.0
    %4107 = vmatpush1.msra.mxu0 0.0
    %4108 = vmatprep.subr.mxu0 0.0
    %4109 = vmatpush1.msra.mxu0 0.0
    %4110 = vmatprep.subr.mxu0 0.0
    %4111 = vmatpush1.msra.mxu0 0.0
    %4112 = vmatprep.subr.mxu0 0.0
    %4113 = vmatpush1.msra.mxu0 0.0
    %4114 = vmatprep.subr.mxu0 0.0
    %4115 = vmatpush1.msra.mxu0 0.0
    %4116 = vmatprep.subr.mxu0 0.0
    %4117 = vmatpush1.msra.mxu0 0.0
    %4118 = vmatprep.subr.mxu0 0.0
    %4119 = vmatpush1.msra.mxu0 0.0
    %4120 = vmatprep.subr.mxu0 0.0
    %4121 = vmatpush1.msra.mxu0 0.0
    %4122 = vmatprep.subr.mxu0 0.0
    %4123 = vmatpush1.msra.mxu0 0.0
    %4124 = vmatprep.subr.mxu0 0.0
    %4125 = vmatpush1.msra.mxu0 0.0
    %4126 = vmatprep.subr.mxu0 0.0
    %4127 = vmatpush1.msra.mxu0 0.0
    %4128 = vmatprep.mubr.f32.mxu0 0.0
    %4129 = vmatmul.mubr.f32.gmra.mrb[0].mxu0 %v4059
    %v4130 = vpop.f32.mrb[0].mxu0
    %v4131 = vadd.f32 0.0, %v4130
    %v4132 = vpop.f32.mrb[0].mxu0
    %4133 = vmatprep.mubr.f32.mxu0 0.0
    %4134 = vmatmul.mubr.f32.gmra.mrb[0].mxu0 %v4062
    %v4135 = vpop.f32.mrb[0].mxu0
    %v4136 = vadd.f32 0.0, %v4135
    %v4137 = vpop.f32.mrb[0].mxu0
    %4138 = vdwg.mxu0
    %v4140 = vsel %vm211, %v4044, 0
    %v4143 = vsel %vm211, %v4049, 0
    %v4146 = vsel %vm211, %v4131, 0
    %v4149 = vsel %vm211, %v4136, 0
    %4151 = vmatprep.subr.mxu0 0.0
    %4152 = vmatpush1.msra.mxu0 %v2596
    %4153 = vmatprep.subr.mxu0 0.0
    %4154 = vmatpush1.msra.mxu0 0.0
    %4155 = vmatprep.subr.mxu0 0.0
    %4156 = vmatpush1.msra.mxu0 0.0
    %4157 = vmatprep.subr.mxu0 0.0
    %4158 = vmatpush1.msra.mxu0 0.0
    %4159 = vmatprep.subr.mxu0 0.0
    %4160 = vmatpush1.msra.mxu0 0.0
    %4161 = vmatprep.subr.mxu0 0.0
    %4162 = vmatpush1.msra.mxu0 0.0
    %4163 = vmatprep.subr.mxu0 0.0
    %4164 = vmatpush1.msra.mxu0 0.0
    %4165 = vmatprep.subr.mxu0 0.0
    %4166 = vmatpush1.msra.mxu0 0.0
    %4167 = vmatprep.subr.mxu0 0.0
    %4168 = vmatpush1.msra.mxu0 0.0
    %4169 = vmatprep.subr.mxu0 0.0
    %4170 = vmatpush1.msra.mxu0 0.0
    %4171 = vmatprep.subr.mxu0 0.0
    %4172 = vmatpush1.msra.mxu0 0.0
    %4173 = vmatprep.subr.mxu0 0.0
    %4174 = vmatpush1.msra.mxu0 0.0
    %4175 = vmatprep.subr.mxu0 0.0
    %4176 = vmatpush1.msra.mxu0 0.0
    %4177 = vmatprep.subr.mxu0 0.0
    %4178 = vmatpush1.msra.mxu0 0.0
    %4179 = vmatprep.subr.mxu0 0.0
    %4180 = vmatpush1.msra.mxu0 0.0
    %4181 = vmatprep.subr.mxu0 0.0
    %4182 = vmatpush1.msra.mxu0 0.0
    %4183 = vmatprep.subr.mxu0 0.0
    %4184 = vmatpush1.msra.mxu0 0.0
    %4185 = vmatprep.subr.mxu0 0.0
    %4186 = vmatpush1.msra.mxu0 0.0
    %4187 = vmatprep.subr.mxu0 0.0
    %4188 = vmatpush1.msra.mxu0 0.0
    %4189 = vmatprep.subr.mxu0 0.0
    %4190 = vmatpush1.msra.mxu0 0.0
    %4191 = vmatprep.subr.mxu0 0.0
    %4192 = vmatpush1.msra.mxu0 0.0
    %4193 = vmatprep.subr.mxu0 0.0
    %4194 = vmatpush1.msra.mxu0 0.0
    %4195 = vmatprep.subr.mxu0 0.0
    %4196 = vmatpush1.msra.mxu0 0.0
    %4197 = vmatprep.subr.mxu0 0.0
    %4198 = vmatpush1.msra.mxu0 0.0
    %4199 = vmatprep.subr.mxu0 0.0
    %4200 = vmatpush1.msra.mxu0 0.0
    %4201 = vmatprep.subr.mxu0 0.0
    %4202 = vmatpush1.msra.mxu0 0.0
    %4203 = vmatprep.subr.mxu0 0.0
    %4204 = vmatpush1.msra.mxu0 0.0
    %4205 = vmatprep.subr.mxu0 0.0
    %4206 = vmatpush1.msra.mxu0 0.0
    %4207 = vmatprep.subr.mxu0 0.0
    %4208 = vmatpush1.msra.mxu0 0.0
    %4209 = vmatprep.subr.mxu0 0.0
    %4210 = vmatpush1.msra.mxu0 0.0
    %4211 = vmatprep.subr.mxu0 0.0
    %4212 = vmatpush1.msra.mxu0 0.0
    %4213 = vmatprep.subr.mxu0 0.0
    %4214 = vmatpush1.msra.mxu0 0.0
    %4215 = vmatprep.mubr.f32.mxu0 0.0
    %4216 = vmatmul.mubr.f32.gmra.mrb[0].mxu0 %v4140
    %v4217 = vpop.f32.mrb[0].mxu0
    %v4218 = vadd.f32 0.0, %v4217
    %v4219 = vpop.f32.mrb[0].mxu0
    %4220 = vmatprep.mubr.f32.mxu0 0.0
    %4221 = vmatmul.mubr.f32.gmra.mrb[0].mxu0 %v4143
    %v4222 = vpop.f32.mrb[0].mxu0
    %v4223 = vadd.f32 0.0, %v4222
    %v4224 = vpop.f32.mrb[0].mxu0
    %4225 = vmatprep.mubr.f32.mxu0 0.0
    %4226 = vmatmul.mubr.f32.gmra.mrb[0].mxu0 %v4146
    %v4227 = vpop.f32.mrb[0].mxu0
    %v4228 = vadd.f32 0.0, %v4227
    %v4229 = vpop.f32.mrb[0].mxu0
    %4230 = vmatprep.mubr.f32.mxu0 0.0
    %4231 = vmatmul.mubr.f32.gmra.mrb[0].mxu0 %v4149
    %v4232 = vpop.f32.mrb[0].mxu0
    %v4233 = vadd.f32 0.0, %v4232
    %v4234 = vpop.f32.mrb[0].mxu0
    %4235 = vdwg.mxu0
    %v4236 = vadd.f32 %v3713, %v4218
    %v4237 = vadd.f32 %v3718, %v4223
    %v4238 = vadd.f32 %v3723, %v4228
    %v4239 = vadd.f32 %v3728, %v4233
    %4240 = vrot.lane.b32.xlu0 %v2707, 104
    %v4241 = vpop.permute.xlu0 %4240
    %4242 = vrot.lane.b32.xlu0 %v2712, 104
    %v4243 = vpop.permute.xlu0 %4242
    %4244 = vrot.lane.b32.xlu0 %v2707, 72
    %v4245 = vpop.permute.xlu0 %4244
    %4246 = vrot.lane.b32.xlu0 %v2712, 72
    %v4247 = vpop.permute.xlu0 %4246
    %v4248 = vsel %vm211, %v4241, 0
    %v4250 = vsel %vm211, %v4243, 0
    %v4252 = vsel %vm211, %v4245, 0
    %v4254 = vsel %vm211, %v4247, 0
    %4256 = vmatprep.subr.mxu0 0.0
    %4257 = vmatpush1.xpose.msra.mxu0 %v4252
    %4258 = vmatprep.subr.mxu0 0.0
    %4259 = vmatpush1.xpose.msra.mxu0 %v4254
    %4260 = vmatprep.subr.mxu0 0.0
    %4261 = vmatpush1.xpose.msra.mxu0 0.0
    %4262 = vmatprep.subr.mxu0 0.0
    %4263 = vmatpush1.xpose.msra.mxu0 0.0
    %4264 = vmatprep.subr.mxu0 0.0
    %4265 = vmatpush1.xpose.msra.mxu0 0.0
    %4266 = vmatprep.subr.mxu0 0.0
    %4267 = vmatpush1.xpose.msra.mxu0 0.0
    %4268 = vmatprep.subr.mxu0 0.0
    %4269 = vmatpush1.xpose.msra.mxu0 0.0
    %4270 = vmatprep.subr.mxu0 0.0
    %4271 = vmatpush1.xpose.msra.mxu0 0.0
    %4272 = vmatprep.subr.mxu0 0.0
    %4273 = vmatpush1.xpose.msra.mxu0 0.0
    %4274 = vmatprep.subr.mxu0 0.0
    %4275 = vmatpush1.xpose.msra.mxu0 0.0
    %4276 = vmatprep.subr.mxu0 0.0
    %4277 = vmatpush1.xpose.msra.mxu0 0.0
    %4278 = vmatprep.subr.mxu0 0.0
    %4279 = vmatpush1.xpose.msra.mxu0 0.0
    %4280 = vmatprep.subr.mxu0 0.0
    %4281 = vmatpush1.xpose.msra.mxu0 0.0
    %4282 = vmatprep.subr.mxu0 0.0
    %4283 = vmatpush1.xpose.msra.mxu0 0.0
    %4284 = vmatprep.subr.mxu0 0.0
    %4285 = vmatpush1.xpose.msra.mxu0 0.0
    %4286 = vmatprep.subr.mxu0 0.0
    %4287 = vmatpush1.xpose.msra.mxu0 0.0
    %4288 = vmatprep.subr.mxu0 0.0
    %4289 = vmatpush1.xpose.msra.mxu0 0.0
    %4290 = vmatprep.subr.mxu0 0.0
    %4291 = vmatpush1.xpose.msra.mxu0 0.0
    %4292 = vmatprep.subr.mxu0 0.0
    %4293 = vmatpush1.xpose.msra.mxu0 0.0
    %4294 = vmatprep.subr.mxu0 0.0
    %4295 = vmatpush1.xpose.msra.mxu0 0.0
    %4296 = vmatprep.subr.mxu0 0.0
    %4297 = vmatpush1.xpose.msra.mxu0 0.0
    %4298 = vmatprep.subr.mxu0 0.0
    %4299 = vmatpush1.xpose.msra.mxu0 0.0
    %4300 = vmatprep.subr.mxu0 0.0
    %4301 = vmatpush1.xpose.msra.mxu0 0.0
    %4302 = vmatprep.subr.mxu0 0.0
    %4303 = vmatpush1.xpose.msra.mxu0 0.0
    %4304 = vmatprep.subr.mxu0 0.0
    %4305 = vmatpush1.xpose.msra.mxu0 0.0
    %4306 = vmatprep.subr.mxu0 0.0
    %4307 = vmatpush1.xpose.msra.mxu0 0.0
    %4308 = vmatprep.subr.mxu0 0.0
    %4309 = vmatpush1.xpose.msra.mxu0 0.0
    %4310 = vmatprep.subr.mxu0 0.0
    %4311 = vmatpush1.xpose.msra.mxu0 0.0
    %4312 = vmatprep.subr.mxu0 0.0
    %4313 = vmatpush1.xpose.msra.mxu0 0.0
    %4314 = vmatprep.subr.mxu0 0.0
    %4315 = vmatpush1.xpose.msra.mxu0 0.0
    %4316 = vmatprep.subr.mxu0 0.0
    %4317 = vmatpush1.xpose.msra.mxu0 0.0
    %4318 = vmatprep.subr.mxu0 0.0
    %4319 = vmatpush1.xpose.msra.mxu0 0.0
    %4320 = vmatprep.mubr.f32.mxu0 0.0
    %4321 = vmatmul.mubr.f32.gmra.mrb[0].mxu0 %v4248
    %v4322 = vpop.f32.mrb[0].mxu0
    %v4323 = vadd.f32 0.0, %v4322
    %v4324 = vpop.f32.mrb[0].mxu0
    %4325 = vmatprep.mubr.f32.mxu0 0.0
    %4326 = vmatmul.mubr.f32.gmra.mrb[0].mxu0 %v4250
    %v4327 = vpop.f32.mrb[0].mxu0
    %v4328 = vadd.f32 0.0, %v4327
    %v4329 = vpop.f32.mrb[0].mxu0
    %4330 = vdwg.mxu0
    %4331 = vrot.lane.b32.xlu0 %v2717, 104
    %v4332 = vpop.permute.xlu0 %4331
    %4333 = vrot.lane.b32.xlu0 %v2722, 104
    %v4334 = vpop.permute.xlu0 %4333
    %4335 = vrot.lane.b32.xlu0 %v2717, 72
    %v4336 = vpop.permute.xlu0 %4335
    %4337 = vrot.lane.b32.xlu0 %v2722, 72
    %v4338 = vpop.permute.xlu0 %4337
    %v4339 = vsel %vm211, %v4332, 0
    %v4341 = vsel %vm211, %v4334, 0
    %v4343 = vsel %vm211, %v4336, 0
    %v4345 = vsel %vm211, %v4338, 0
    %4347 = vmatprep.subr.mxu0 0.0
    %4348 = vmatpush1.xpose.msra.mxu0 %v4343
    %4349 = vmatprep.subr.mxu0 0.0
    %4350 = vmatpush1.xpose.msra.mxu0 %v4345
    %4351 = vmatprep.subr.mxu0 0.0
    %4352 = vmatpush1.xpose.msra.mxu0 0.0
    %4353 = vmatprep.subr.mxu0 0.0
    %4354 = vmatpush1.xpose.msra.mxu0 0.0
    %4355 = vmatprep.subr.mxu0 0.0
    %4356 = vmatpush1.xpose.msra.mxu0 0.0
    %4357 = vmatprep.subr.mxu0 0.0
    %4358 = vmatpush1.xpose.msra.mxu0 0.0
    %4359 = vmatprep.subr.mxu0 0.0
    %4360 = vmatpush1.xpose.msra.mxu0 0.0
    %4361 = vmatprep.subr.mxu0 0.0
    %4362 = vmatpush1.xpose.msra.mxu0 0.0
    %4363 = vmatprep.subr.mxu0 0.0
    %4364 = vmatpush1.xpose.msra.mxu0 0.0
    %4365 = vmatprep.subr.mxu0 0.0
    %4366 = vmatpush1.xpose.msra.mxu0 0.0
    %4367 = vmatprep.subr.mxu0 0.0
    %4368 = vmatpush1.xpose.msra.mxu0 0.0
    %4369 = vmatprep.subr.mxu0 0.0
    %4370 = vmatpush1.xpose.msra.mxu0 0.0
    %4371 = vmatprep.subr.mxu0 0.0
    %4372 = vmatpush1.xpose.msra.mxu0 0.0
    %4373 = vmatprep.subr.mxu0 0.0
    %4374 = vmatpush1.xpose.msra.mxu0 0.0
    %4375 = vmatprep.subr.mxu0 0.0
    %4376 = vmatpush1.xpose.msra.mxu0 0.0
    %4377 = vmatprep.subr.mxu0 0.0
    %4378 = vmatpush1.xpose.msra.mxu0 0.0
    %4379 = vmatprep.subr.mxu0 0.0
    %4380 = vmatpush1.xpose.msra.mxu0 0.0
    %4381 = vmatprep.subr.mxu0 0.0
    %4382 = vmatpush1.xpose.msra.mxu0 0.0
    %4383 = vmatprep.subr.mxu0 0.0
    %4384 = vmatpush1.xpose.msra.mxu0 0.0
    %4385 = vmatprep.subr.mxu0 0.0
    %4386 = vmatpush1.xpose.msra.mxu0 0.0
    %4387 = vmatprep.subr.mxu0 0.0
    %4388 = vmatpush1.xpose.msra.mxu0 0.0
    %4389 = vmatprep.subr.mxu0 0.0
    %4390 = vmatpush1.xpose.msra.mxu0 0.0
    %4391 = vmatprep.subr.mxu0 0.0
    %4392 = vmatpush1.xpose.msra.mxu0 0.0
    %4393 = vmatprep.subr.mxu0 0.0
    %4394 = vmatpush1.xpose.msra.mxu0 0.0
    %4395 = vmatprep.subr.mxu0 0.0
    %4396 = vmatpush1.xpose.msra.mxu0 0.0
    %4397 = vmatprep.subr.mxu0 0.0
    %4398 = vmatpush1.xpose.msra.mxu0 0.0
    %4399 = vmatprep.subr.mxu0 0.0
    %4400 = vmatpush1.xpose.msra.mxu0 0.0
    %4401 = vmatprep.subr.mxu0 0.0
    %4402 = vmatpush1.xpose.msra.mxu0 0.0
    %4403 = vmatprep.subr.mxu0 0.0
    %4404 = vmatpush1.xpose.msra.mxu0 0.0
    %4405 = vmatprep.subr.mxu0 0.0
    %4406 = vmatpush1.xpose.msra.mxu0 0.0
    %4407 = vmatprep.subr.mxu0 0.0
    %4408 = vmatpush1.xpose.msra.mxu0 0.0
    %4409 = vmatprep.subr.mxu0 0.0
    %4410 = vmatpush1.xpose.msra.mxu0 0.0
    %4411 = vmatprep.mubr.f32.mxu0 0.0
    %4412 = vmatmul.mubr.f32.gmra.mrb[0].mxu0 %v4339
    %v4413 = vpop.f32.mrb[0].mxu0
    %v4414 = vadd.f32 0.0, %v4413
    %v4415 = vpop.f32.mrb[0].mxu0
    %4416 = vmatprep.mubr.f32.mxu0 0.0
    %4417 = vmatmul.mubr.f32.gmra.mrb[0].mxu0 %v4341
    %v4418 = vpop.f32.mrb[0].mxu0
    %v4419 = vadd.f32 0.0, %v4418
    %v4420 = vpop.f32.mrb[0].mxu0
    %4421 = vdwg.mxu0
    %v4422 = vmul.f32 %v4323, 0.35355338
    %v4423 = vmul.f32 %v4328, 0.35355338
    %v4424 = vmul.f32 %v4414, 0.35355338
    %v4425 = vmul.f32 %v4419, 0.35355338
    %v4426 = vadd.f32 %v4422, %v65
    %v4427 = vadd.f32 %v4423, %v66
    %v4428 = vadd.f32 %v4424, %v67
    %v4429 = vadd.f32 %v4425, %v68
    %v4430 = vsel %vm392, %v4426, -inf
    %4431 = vmax.xlane.f32.xlu0 %v4430
    %v4432 = vpop.xlane.xlu0 %4431
    %v4433 = vsel %vm392, %v4427, -inf
    %4434 = vmax.xlane.f32.xlu0 %v4433
    %v4435 = vpop.xlane.xlu0 %4434
    %v4436 = vsel %vm392, %v4428, -inf
    %4437 = vmax.xlane.f32.xlu0 %v4436
    %v4438 = vpop.xlane.xlu0 %4437
    %v4439 = vsel %vm392, %v4429, -inf
    %4440 = vmax.xlane.f32.xlu0 %v4439
    %v4441 = vpop.xlane.xlu0 %4440
    %v4442 = vsub.f32 %v4426, %v4432
    %v4443 = vsub.f32 %v4427, %v4435
    %v4444 = vsub.f32 %v4428, %v4438
    %v4445 = vsub.f32 %v4429, %v4441
    %v4446 = vmul.f32 %v4442, 1.442695
    %v4447 = vpow.pop %v4446
    %v4448 = vmul.f32 %v4443, 1.442695
    %v4449 = vpow.pop %v4448
    %v4450 = vmul.f32 %v4444, 1.442695
    %v4451 = vpow.pop %v4450
    %v4452 = vmul.f32 %v4445, 1.442695
    %v4453 = vpow.pop %v4452
    %v4454 = vsel %vm392, %v4447, 0.0
    %4455 = vadd.xlane.f32.xlu0 %v4454
    %v4456 = vpop.xlane.xlu0 %4455
    %v4457 = vsel %vm392, %v4449, 0.0
    %4458 = vadd.xlane.f32.xlu0 %v4457
    %v4459 = vpop.xlane.xlu0 %4458
    %v4460 = vsel %vm392, %v4451, 0.0
    %4461 = vadd.xlane.f32.xlu0 %v4460
    %v4462 = vpop.xlane.xlu0 %4461
    %v4463 = vsel %vm392, %v4453, 0.0
    %4464 = vadd.xlane.f32.xlu0 %v4463
    %v4465 = vpop.xlane.xlu0 %4464
    %v4466 = vrcp.pop %v4456
    %v4467 = vrcp.pop %v4459
    %v4468 = vrcp.pop %v4462
    %v4469 = vrcp.pop %v4465
    %v4470 = vmul.f32 %v4447, %v4466
    %v4471 = vmul.f32 %v4449, %v4467
    %v4472 = vmul.f32 %v4451, %v4468
    %v4473 = vmul.f32 %v4453, %v4469
    %4474 = vrot.lane.b32.xlu0 %v2707, 40
    %v4475 = vpop.permute.xlu0 %4474
    %4476 = vrot.lane.b32.xlu0 %v2712, 40
    %v4477 = vpop.permute.xlu0 %4476
    %v4481 = vsel %vm392, %v4470, 0
    %v4484 = vsel %vm392, %v4471, 0
    %4486 = vmatprep.subr.mxu0 0.0
    %4487 = vmatpush1.msra.mxu0 %v4475
    %4488 = vmatprep.subr.mxu0 0.0
    %4489 = vmatpush1.msra.mxu0 %v4477
    %4490 = vmatprep.subr.mxu0 0.0
    %4491 = vmatpush1.msra.mxu0 0.0
    %4492 = vmatprep.subr.mxu0 0.0
    %4493 = vmatpush1.msra.mxu0 0.0
    %4494 = vmatprep.subr.mxu0 0.0
    %4495 = vmatpush1.msra.mxu0 0.0
    %4496 = vmatprep.subr.mxu0 0.0
    %4497 = vmatpush1.msra.mxu0 0.0
    %4498 = vmatprep.subr.mxu0 0.0
    %4499 = vmatpush1.msra.mxu0 0.0
    %4500 = vmatprep.subr.mxu0 0.0
    %4501 = vmatpush1.msra.mxu0 0.0
    %4502 = vmatprep.subr.mxu0 0.0
    %4503 = vmatpush1.msra.mxu0 0.0
    %4504 = vmatprep.subr.mxu0 0.0
    %4505 = vmatpush1.msra.mxu0 0.0
    %4506 = vmatprep.subr.mxu0 0.0
    %4507 = vmatpush1.msra.mxu0 0.0
    %4508 = vmatprep.subr.mxu0 0.0
    %4509 = vmatpush1.msra.mxu0 0.0
    %4510 = vmatprep.subr.mxu0 0.0
    %4511 = vmatpush1.msra.mxu0 0.0
    %4512 = vmatprep.subr.mxu0 0.0
    %4513 = vmatpush1.msra.mxu0 0.0
    %4514 = vmatprep.subr.mxu0 0.0
    %4515 = vmatpush1.msra.mxu0 0.0
    %4516 = vmatprep.subr.mxu0 0.0
    %4517 = vmatpush1.msra.mxu0 0.0
    %4518 = vmatprep.subr.mxu0 0.0
    %4519 = vmatpush1.msra.mxu0 0.0
    %4520 = vmatprep.subr.mxu0 0.0
    %4521 = vmatpush1.msra.mxu0 0.0
    %4522 = vmatprep.subr.mxu0 0.0
    %4523 = vmatpush1.msra.mxu0 0.0
    %4524 = vmatprep.subr.mxu0 0.0
    %4525 = vmatpush1.msra.mxu0 0.0
    %4526 = vmatprep.subr.mxu0 0.0
    %4527 = vmatpush1.msra.mxu0 0.0
    %4528 = vmatprep.subr.mxu0 0.0
    %4529 = vmatpush1.msra.mxu0 0.0
    %4530 = vmatprep.subr.mxu0 0.0
    %4531 = vmatpush1.msra.mxu0 0.0
    %4532 = vmatprep.subr.mxu0 0.0
    %4533 = vmatpush1.msra.mxu0 0.0
    %4534 = vmatprep.subr.mxu0 0.0
    %4535 = vmatpush1.msra.mxu0 0.0
    %4536 = vmatprep.subr.mxu0 0.0
    %4537 = vmatpush1.msra.mxu0 0.0
    %4538 = vmatprep.subr.mxu0 0.0
    %4539 = vmatpush1.msra.mxu0 0.0
    %4540 = vmatprep.subr.mxu0 0.0
    %4541 = vmatpush1.msra.mxu0 0.0
    %4542 = vmatprep.subr.mxu0 0.0
    %4543 = vmatpush1.msra.mxu0 0.0
    %4544 = vmatprep.subr.mxu0 0.0
    %4545 = vmatpush1.msra.mxu0 0.0
    %4546 = vmatprep.subr.mxu0 0.0
    %4547 = vmatpush1.msra.mxu0 0.0
    %4548 = vmatprep.subr.mxu0 0.0
    %4549 = vmatpush1.msra.mxu0 0.0
    %4550 = vmatprep.mubr.f32.mxu0 0.0
    %4551 = vmatmul.mubr.f32.gmra.mrb[0].mxu0 %v4481
    %v4552 = vpop.f32.mrb[0].mxu0
    %v4553 = vadd.f32 0.0, %v4552
    %v4554 = vpop.f32.mrb[0].mxu0
    %4555 = vmatprep.mubr.f32.mxu0 0.0
    %4556 = vmatmul.mubr.f32.gmra.mrb[0].mxu0 %v4484
    %v4557 = vpop.f32.mrb[0].mxu0
    %v4558 = vadd.f32 0.0, %v4557
    %v4559 = vpop.f32.mrb[0].mxu0
    %4560 = vdwg.mxu0
    %4561 = vrot.lane.b32.xlu0 %v2717, 40
    %v4562 = vpop.permute.xlu0 %4561
    %4563 = vrot.lane.b32.xlu0 %v2722, 40
    %v4564 = vpop.permute.xlu0 %4563
    %v4568 = vsel %vm392, %v4472, 0
    %v4571 = vsel %vm392, %v4473, 0
    %4573 = vmatprep.subr.mxu0 0.0
    %4574 = vmatpush1.msra.mxu0 %v4562
    %4575 = vmatprep.subr.mxu0 0.0
    %4576 = vmatpush1.msra.mxu0 %v4564
    %4577 = vmatprep.subr.mxu0 0.0
    %4578 = vmatpush1.msra.mxu0 0.0
    %4579 = vmatprep.subr.mxu0 0.0
    %4580 = vmatpush1.msra.mxu0 0.0
    %4581 = vmatprep.subr.mxu0 0.0
    %4582 = vmatpush1.msra.mxu0 0.0
    %4583 = vmatprep.subr.mxu0 0.0
    %4584 = vmatpush1.msra.mxu0 0.0
    %4585 = vmatprep.subr.mxu0 0.0
    %4586 = vmatpush1.msra.mxu0 0.0
    %4587 = vmatprep.subr.mxu0 0.0
    %4588 = vmatpush1.msra.mxu0 0.0
    %4589 = vmatprep.subr.mxu0 0.0
    %4590 = vmatpush1.msra.mxu0 0.0
    %4591 = vmatprep.subr.mxu0 0.0
    %4592 = vmatpush1.msra.mxu0 0.0
    %4593 = vmatprep.subr.mxu0 0.0
    %4594 = vmatpush1.msra.mxu0 0.0
    %4595 = vmatprep.subr.mxu0 0.0
    %4596 = vmatpush1.msra.mxu0 0.0
    %4597 = vmatprep.subr.mxu0 0.0
    %4598 = vmatpush1.msra.mxu0 0.0
    %4599 = vmatprep.subr.mxu0 0.0
    %4600 = vmatpush1.msra.mxu0 0.0
    %4601 = vmatprep.subr.mxu0 0.0
    %4602 = vmatpush1.msra.mxu0 0.0
    %4603 = vmatprep.subr.mxu0 0.0
    %4604 = vmatpush1.msra.mxu0 0.0
    %4605 = vmatprep.subr.mxu0 0.0
    %4606 = vmatpush1.msra.mxu0 0.0
    %4607 = vmatprep.subr.mxu0 0.0
    %4608 = vmatpush1.msra.mxu0 0.0
    %4609 = vmatprep.subr.mxu0 0.0
    %4610 = vmatpush1.msra.mxu0 0.0
    %4611 = vmatprep.subr.mxu0 0.0
    %4612 = vmatpush1.msra.mxu0 0.0
    %4613 = vmatprep.subr.mxu0 0.0
    %4614 = vmatpush1.msra.mxu0 0.0
    %4615 = vmatprep.subr.mxu0 0.0
    %4616 = vmatpush1.msra.mxu0 0.0
    %4617 = vmatprep.subr.mxu0 0.0
    %4618 = vmatpush1.msra.mxu0 0.0
    %4619 = vmatprep.subr.mxu0 0.0
    %4620 = vmatpush1.msra.mxu0 0.0
    %4621 = vmatprep.subr.mxu0 0.0
    %4622 = vmatpush1.msra.mxu0 0.0
    %4623 = vmatprep.subr.mxu0 0.0
    %4624 = vmatpush1.msra.mxu0 0.0
    %4625 = vmatprep.subr.mxu0 0.0
    %4626 = vmatpush1.msra.mxu0 0.0
    %4627 = vmatprep.subr.mxu0 0.0
    %4628 = vmatpush1.msra.mxu0 0.0
    %4629 = vmatprep.subr.mxu0 0.0
    %4630 = vmatpush1.msra.mxu0 0.0
    %4631 = vmatprep.subr.mxu0 0.0
    %4632 = vmatpush1.msra.mxu0 0.0
    %4633 = vmatprep.subr.mxu0 0.0
    %4634 = vmatpush1.msra.mxu0 0.0
    %4635 = vmatprep.subr.mxu0 0.0
    %4636 = vmatpush1.msra.mxu0 0.0
    %4637 = vmatprep.mubr.f32.mxu0 0.0
    %4638 = vmatmul.mubr.f32.gmra.mrb[0].mxu0 %v4568
    %v4639 = vpop.f32.mrb[0].mxu0
    %v4640 = vadd.f32 0.0, %v4639
    %v4641 = vpop.f32.mrb[0].mxu0
    %4642 = vmatprep.mubr.f32.mxu0 0.0
    %4643 = vmatmul.mubr.f32.gmra.mrb[0].mxu0 %v4571
    %v4644 = vpop.f32.mrb[0].mxu0
    %v4645 = vadd.f32 0.0, %v4644
    %v4646 = vpop.f32.mrb[0].mxu0
    %4647 = vdwg.mxu0
    %v4649 = vsel %vm211, %v4553, 0
    %v4652 = vsel %vm211, %v4558, 0
    %v4655 = vsel %vm211, %v4640, 0
    %v4658 = vsel %vm211, %v4645, 0
    %4660 = vmatprep.subr.mxu0 0.0
    %4661 = vmatpush1.msra.mxu0 %v2597
    %4662 = vmatprep.subr.mxu0 0.0
    %4663 = vmatpush1.msra.mxu0 0.0
    %4664 = vmatprep.subr.mxu0 0.0
    %4665 = vmatpush1.msra.mxu0 0.0
    %4666 = vmatprep.subr.mxu0 0.0
    %4667 = vmatpush1.msra.mxu0 0.0
    %4668 = vmatprep.subr.mxu0 0.0
    %4669 = vmatpush1.msra.mxu0 0.0
    %4670 = vmatprep.subr.mxu0 0.0
    %4671 = vmatpush1.msra.mxu0 0.0
    %4672 = vmatprep.subr.mxu0 0.0
    %4673 = vmatpush1.msra.mxu0 0.0
    %4674 = vmatprep.subr.mxu0 0.0
    %4675 = vmatpush1.msra.mxu0 0.0
    %4676 = vmatprep.subr.mxu0 0.0
    %4677 = vmatpush1.msra.mxu0 0.0
    %4678 = vmatprep.subr.mxu0 0.0
    %4679 = vmatpush1.msra.mxu0 0.0
    %4680 = vmatprep.subr.mxu0 0.0
    %4681 = vmatpush1.msra.mxu0 0.0
    %4682 = vmatprep.subr.mxu0 0.0
    %4683 = vmatpush1.msra.mxu0 0.0
    %4684 = vmatprep.subr.mxu0 0.0
    %4685 = vmatpush1.msra.mxu0 0.0
    %4686 = vmatprep.subr.mxu0 0.0
    %4687 = vmatpush1.msra.mxu0 0.0
    %4688 = vmatprep.subr.mxu0 0.0
    %4689 = vmatpush1.msra.mxu0 0.0
    %4690 = vmatprep.subr.mxu0 0.0
    %4691 = vmatpush1.msra.mxu0 0.0
    %4692 = vmatprep.subr.mxu0 0.0
    %4693 = vmatpush1.msra.mxu0 0.0
    %4694 = vmatprep.subr.mxu0 0.0
    %4695 = vmatpush1.msra.mxu0 0.0
    %4696 = vmatprep.subr.mxu0 0.0
    %4697 = vmatpush1.msra.mxu0 0.0
    %4698 = vmatprep.subr.mxu0 0.0
    %4699 = vmatpush1.msra.mxu0 0.0
    %4700 = vmatprep.subr.mxu0 0.0
    %4701 = vmatpush1.msra.mxu0 0.0
    %4702 = vmatprep.subr.mxu0 0.0
    %4703 = vmatpush1.msra.mxu0 0.0
    %4704 = vmatprep.subr.mxu0 0.0
    %4705 = vmatpush1.msra.mxu0 0.0
    %4706 = vmatprep.subr.mxu0 0.0
    %4707 = vmatpush1.msra.mxu0 0.0
    %4708 = vmatprep.subr.mxu0 0.0
    %4709 = vmatpush1.msra.mxu0 0.0
    %4710 = vmatprep.subr.mxu0 0.0
    %4711 = vmatpush1.msra.mxu0 0.0
    %4712 = vmatprep.subr.mxu0 0.0
    %4713 = vmatpush1.msra.mxu0 0.0
    %4714 = vmatprep.subr.mxu0 0.0
    %4715 = vmatpush1.msra.mxu0 0.0
    %4716 = vmatprep.subr.mxu0 0.0
    %4717 = vmatpush1.msra.mxu0 0.0
    %4718 = vmatprep.subr.mxu0 0.0
    %4719 = vmatpush1.msra.mxu0 0.0
    %4720 = vmatprep.subr.mxu0 0.0
    %4721 = vmatpush1.msra.mxu0 0.0
    %4722 = vmatprep.subr.mxu0 0.0
    %4723 = vmatpush1.msra.mxu0 0.0
    %4724 = vmatprep.mubr.f32.mxu0 0.0
    %4725 = vmatmul.mubr.f32.gmra.mrb[0].mxu0 %v4649
    %v4726 = vpop.f32.mrb[0].mxu0
    %v4727 = vadd.f32 0.0, %v4726
    %v4728 = vpop.f32.mrb[0].mxu0
    %4729 = vmatprep.mubr.f32.mxu0 0.0
    %4730 = vmatmul.mubr.f32.gmra.mrb[0].mxu0 %v4652
    %v4731 = vpop.f32.mrb[0].mxu0
    %v4732 = vadd.f32 0.0, %v4731
    %v4733 = vpop.f32.mrb[0].mxu0
    %4734 = vmatprep.mubr.f32.mxu0 0.0
    %4735 = vmatmul.mubr.f32.gmra.mrb[0].mxu0 %v4655
    %v4736 = vpop.f32.mrb[0].mxu0
    %v4737 = vadd.f32 0.0, %v4736
    %v4738 = vpop.f32.mrb[0].mxu0
    %4739 = vmatprep.mubr.f32.mxu0 0.0
    %4740 = vmatmul.mubr.f32.gmra.mrb[0].mxu0 %v4658
    %v4741 = vpop.f32.mrb[0].mxu0
    %v4742 = vadd.f32 0.0, %v4741
    %v4743 = vpop.f32.mrb[0].mxu0
    %4744 = vdwg.mxu0
    %v4745 = vadd.f32 %v4236, %v4727
    %v4746 = vadd.f32 %v4237, %v4732
    %v4747 = vadd.f32 %v4238, %v4737
    %v4748 = vadd.f32 %v4239, %v4742
    %4750 = vrot.lane.b32.xlu0 %v2627, 32
    %v4751 = vpop.permute.xlu0 %4750
    %v4753 = vadd.f32 %v4745, %v4751
    %v4754 = vadd.f32 %v4746, %v4751
    %v4755 = vadd.f32 %v4747, %v4751
    %v4756 = vadd.f32 %v4748, %v4751
    %v4757 = vadd.f32 %v4753, %v2574
    %v4758 = vadd.f32 %v4754, %v2575
    %v4759 = vadd.f32 %v4755, %v2576
    %v4760 = vadd.f32 %v4756, %v2577
    %v4761 = vsel %vm107, %v4757, 0.0
    %4762 = vadd.xlane.f32.xlu0 %v4761
    %v4763 = vpop.xlane.xlu0 %4762
    %v4764 = vsel %vm107, %v4758, 0.0
    %4765 = vadd.xlane.f32.xlu0 %v4764
    %v4766 = vpop.xlane.xlu0 %4765
    %v4767 = vsel %vm107, %v4759, 0.0
    %4768 = vadd.xlane.f32.xlu0 %v4767
    %v4769 = vpop.xlane.xlu0 %4768
    %v4770 = vsel %vm107, %v4760, 0.0
    %4771 = vadd.xlane.f32.xlu0 %v4770
    %v4772 = vpop.xlane.xlu0 %4771
    %v4773 = vmul.f32 %v4763, %v2255
    %v4774 = vmul.f32 %v4766, %v2255
    %v4775 = vmul.f32 %v4769, %v2255
    %v4776 = vmul.f32 %v4772, %v2255
    %v4777 = vsub.f32 %v4757, %v4773
    %v4778 = vsub.f32 %v4758, %v4774
    %v4779 = vsub.f32 %v4759, %v4775
    %v4780 = vsub.f32 %v4760, %v4776
    %v4781 = vmul.f32 %v4777, %v4777
    %v4782 = vmul.f32 %v4778, %v4778
    %v4783 = vmul.f32 %v4779, %v4779
    %v4784 = vmul.f32 %v4780, %v4780
    %v4785 = vsel %vm107, %v4781, 0.0
    %4786 = vadd.xlane.f32.xlu0 %v4785
    %v4787 = vpop.xlane.xlu0 %4786
    %v4788 = vsel %vm107, %v4782, 0.0
    %4789 = vadd.xlane.f32.xlu0 %v4788
    %v4790 = vpop.xlane.xlu0 %4789
    %v4791 = vsel %vm107, %v4783, 0.0
    %4792 = vadd.xlane.f32.xlu0 %v4791
    %v4793 = vpop.xlane.xlu0 %4792
    %v4794 = vsel %vm107, %v4784, 0.0
    %4795 = vadd.xlane.f32.xlu0 %v4794
    %v4796 = vpop.xlane.xlu0 %4795
    %v4797 = vmul.f32 %v4787, %v2255
    %v4798 = vmul.f32 %v4790, %v2255
    %v4799 = vmul.f32 %v4793, %v2255
    %v4800 = vmul.f32 %v4796, %v2255
    %v4801 = vadd.f32 %v4797, 1e-05
    %v4802 = vadd.f32 %v4798, 1e-05
    %v4803 = vadd.f32 %v4799, 1e-05
    %v4804 = vadd.f32 %v4800, 1e-05
    %v4805 = vrsqrt.pop %v4801
    %v4806 = vrsqrt.pop %v4802
    %v4807 = vrsqrt.pop %v4803
    %v4808 = vrsqrt.pop %v4804
    %v4809 = vmul.f32 %v4777, %v4805
    %v4810 = vmul.f32 %v4778, %v4806
    %v4811 = vmul.f32 %v4779, %v4807
    %v4812 = vmul.f32 %v4780, %v4808
    %v4813 = vlaneseq
    %v4814 = vshrl.u32 %v4813, 7
    %v4815 = vsub.s32 1, %v4814
    %v4816 = vrot.slane %v2623, %v4815
    %v4817 = vmul.f32 %v4809, %v4816
    %v4818 = vmul.f32 %v4810, %v4816
    %v4819 = vmul.f32 %v4811, %v4816
    %v4820 = vmul.f32 %v4812, %v4816
    %v4821 = vlaneseq
    %v4822 = vshrl.u32 %v4821, 7
    %v4823 = vsub.s32 2, %v4822
    %v4824 = vrot.slane %v2623, %v4823
    %v4825 = vadd.f32 %v4817, %v4824
    %v4826 = vadd.f32 %v4818, %v4824
    %v4827 = vadd.f32 %v4819, %v4824
    %v4828 = vadd.f32 %v4820, %v4824
    %v4829 = vlaneseq
    %v4830 = vshrl.u32 %v4829, 7
    %v4831 = vsub.s32 1, %v4830
    %v4832 = vrot.slane %v2621, %v4831
    %v4834 = vsel %vm107, %v4825, 0
    %v4837 = vsel %vm107, %v4826, 0
    %v4840 = vsel %vm107, %v4827, 0
    %v4843 = vsel %vm107, %v4828, 0
    %4845 = vmatprep.subr.mxu0 0.0
    %4846 = vmatpush1.msra.mxu0 %v2599
    %4847 = vmatprep.subr.mxu0 0.0
    %4848 = vmatpush1.msra.mxu0 %v2600
    %4849 = vmatprep.subr.mxu0 0.0
    %4850 = vmatpush1.msra.mxu0 %v2601
    %4851 = vmatprep.subr.mxu0 0.0
    %4852 = vmatpush1.msra.mxu0 %v2602
    %4853 = vmatprep.subr.mxu0 0.0
    %4854 = vmatpush1.msra.mxu0 0.0
    %4855 = vmatprep.subr.mxu0 0.0
    %4856 = vmatpush1.msra.mxu0 0.0
    %4857 = vmatprep.subr.mxu0 0.0
    %4858 = vmatpush1.msra.mxu0 0.0
    %4859 = vmatprep.subr.mxu0 0.0
    %4860 = vmatpush1.msra.mxu0 0.0
    %4861 = vmatprep.subr.mxu0 0.0
    %4862 = vmatpush1.msra.mxu0 0.0
    %4863 = vmatprep.subr.mxu0 0.0
    %4864 = vmatpush1.msra.mxu0 0.0
    %4865 = vmatprep.subr.mxu0 0.0
    %4866 = vmatpush1.msra.mxu0 0.0
    %4867 = vmatprep.subr.mxu0 0.0
    %4868 = vmatpush1.msra.mxu0 0.0
    %4869 = vmatprep.subr.mxu0 0.0
    %4870 = vmatpush1.msra.mxu0 0.0
    %4871 = vmatprep.subr.mxu0 0.0
    %4872 = vmatpush1.msra.mxu0 0.0
    %4873 = vmatprep.subr.mxu0 0.0
    %4874 = vmatpush1.msra.mxu0 0.0
    %4875 = vmatprep.subr.mxu0 0.0
    %4876 = vmatpush1.msra.mxu0 0.0
    %4877 = vmatprep.subr.mxu0 0.0
    %4878 = vmatpush1.msra.mxu0 0.0
    %4879 = vmatprep.subr.mxu0 0.0
    %4880 = vmatpush1.msra.mxu0 0.0
    %4881 = vmatprep.subr.mxu0 0.0
    %4882 = vmatpush1.msra.mxu0 0.0
    %4883 = vmatprep.subr.mxu0 0.0
    %4884 = vmatpush1.msra.mxu0 0.0
    %4885 = vmatprep.subr.mxu0 0.0
    %4886 = vmatpush1.msra.mxu0 0.0
    %4887 = vmatprep.subr.mxu0 0.0
    %4888 = vmatpush1.msra.mxu0 0.0
    %4889 = vmatprep.subr.mxu0 0.0
    %4890 = vmatpush1.msra.mxu0 0.0
    %4891 = vmatprep.subr.mxu0 0.0
    %4892 = vmatpush1.msra.mxu0 0.0
    %4893 = vmatprep.subr.mxu0 0.0
    %4894 = vmatpush1.msra.mxu0 0.0
    %4895 = vmatprep.subr.mxu0 0.0
    %4896 = vmatpush1.msra.mxu0 0.0
    %4897 = vmatprep.subr.mxu0 0.0
    %4898 = vmatpush1.msra.mxu0 0.0
    %4899 = vmatprep.subr.mxu0 0.0
    %4900 = vmatpush1.msra.mxu0 0.0
    %4901 = vmatprep.subr.mxu0 0.0
    %4902 = vmatpush1.msra.mxu0 0.0
    %4903 = vmatprep.subr.mxu0 0.0
    %4904 = vmatpush1.msra.mxu0 0.0
    %4905 = vmatprep.subr.mxu0 0.0
    %4906 = vmatpush1.msra.mxu0 0.0
    %4907 = vmatprep.subr.mxu0 0.0
    %4908 = vmatpush1.msra.mxu0 0.0
    %4909 = vmatprep.mubr.f32.mxu0 0.0
    %4910 = vmatmul.mubr.f32.gmra.mrb[0].mxu0 %v4834
    %v4911 = vpop.f32.mrb[0].mxu0
    %v4912 = vadd.f32 %v4832, %v4911
    %v4913 = vpop.f32.mrb[0].mxu0
    %4914 = vmatprep.mubr.f32.mxu0 0.0
    %4915 = vmatmul.mubr.f32.gmra.mrb[0].mxu0 %v4837
    %v4916 = vpop.f32.mrb[0].mxu0
    %v4917 = vadd.f32 %v4832, %v4916
    %v4918 = vpop.f32.mrb[0].mxu0
    %4919 = vmatprep.mubr.f32.mxu0 0.0
    %4920 = vmatmul.mubr.f32.gmra.mrb[0].mxu0 %v4840
    %v4921 = vpop.f32.mrb[0].mxu0
    %v4922 = vadd.f32 %v4832, %v4921
    %v4923 = vpop.f32.mrb[0].mxu0
    %4924 = vmatprep.mubr.f32.mxu0 0.0
    %4925 = vmatmul.mubr.f32.gmra.mrb[0].mxu0 %v4843
    %v4926 = vpop.f32.mrb[0].mxu0
    %v4927 = vadd.f32 %v4832, %v4926
    %v4928 = vpop.f32.mrb[0].mxu0
    %4929 = vdwg.mxu0
    %v4930 = vmax.f32 %v4912, 0.0
    %v4931 = vmax.f32 %v4917, 0.0
    %v4932 = vmax.f32 %v4922, 0.0
    %v4933 = vmax.f32 %v4927, 0.0
    %v4934 = vlaneseq
    %v4935 = vshrl.u32 %v4934, 7
    %v4936 = vsub.s32 0, %v4935
    %v4937 = vrot.slane %v2623, %v4936
    %4938 = vmatprep.subr.mxu0 0.0
    %4939 = vmatpush1.msra.mxu0 %v2604
    %4940 = vmatprep.subr.mxu0 0.0
    %4941 = vmatpush1.msra.mxu0 %v2605
    %4942 = vmatprep.subr.mxu0 0.0
    %4943 = vmatpush1.msra.mxu0 %v2606
    %4944 = vmatprep.subr.mxu0 0.0
    %4945 = vmatpush1.msra.mxu0 %v2607
    %4946 = vmatprep.subr.mxu0 0.0
    %4947 = vmatpush1.msra.mxu0 %v2608
    %4948 = vmatprep.subr.mxu0 0.0
    %4949 = vmatpush1.msra.mxu0 %v2609
    %4950 = vmatprep.subr.mxu0 0.0
    %4951 = vmatpush1.msra.mxu0 %v2610
    %4952 = vmatprep.subr.mxu0 0.0
    %4953 = vmatpush1.msra.mxu0 %v2611
    %4954 = vmatprep.subr.mxu0 0.0
    %4955 = vmatpush1.msra.mxu0 %v2612
    %4956 = vmatprep.subr.mxu0 0.0
    %4957 = vmatpush1.msra.mxu0 %v2613
    %4958 = vmatprep.subr.mxu0 0.0
    %4959 = vmatpush1.msra.mxu0 %v2614
    %4960 = vmatprep.subr.mxu0 0.0
    %4961 = vmatpush1.msra.mxu0 %v2615
    %4962 = vmatprep.subr.mxu0 0.0
    %4963 = vmatpush1.msra.mxu0 %v2616
    %4964 = vmatprep.subr.mxu0 0.0
    %4965 = vmatpush1.msra.mxu0 %v2617
    %4966 = vmatprep.subr.mxu0 0.0
    %4967 = vmatpush1.msra.mxu0 %v2618
    %4968 = vmatprep.subr.mxu0 0.0
    %4969 = vmatpush1.msra.mxu0 %v2619
    %4970 = vmatprep.subr.mxu0 0.0
    %4971 = vmatpush1.msra.mxu0 0.0
    %4972 = vmatprep.subr.mxu0 0.0
    %4973 = vmatpush1.msra.mxu0 0.0
    %4974 = vmatprep.subr.mxu0 0.0
    %4975 = vmatpush1.msra.mxu0 0.0
    %4976 = vmatprep.subr.mxu0 0.0
    %4977 = vmatpush1.msra.mxu0 0.0
    %4978 = vmatprep.subr.mxu0 0.0
    %4979 = vmatpush1.msra.mxu0 0.0
    %4980 = vmatprep.subr.mxu0 0.0
    %4981 = vmatpush1.msra.mxu0 0.0
    %4982 = vmatprep.subr.mxu0 0.0
    %4983 = vmatpush1.msra.mxu0 0.0
    %4984 = vmatprep.subr.mxu0 0.0
    %4985 = vmatpush1.msra.mxu0 0.0
    %4986 = vmatprep.subr.mxu0 0.0
    %4987 = vmatpush1.msra.mxu0 0.0
    %4988 = vmatprep.subr.mxu0 0.0
    %4989 = vmatpush1.msra.mxu0 0.0
    %4990 = vmatprep.subr.mxu0 0.0
    %4991 = vmatpush1.msra.mxu0 0.0
    %4992 = vmatprep.subr.mxu0 0.0
    %4993 = vmatpush1.msra.mxu0 0.0
    %4994 = vmatprep.subr.mxu0 0.0
    %4995 = vmatpush1.msra.mxu0 0.0
    %4996 = vmatprep.subr.mxu0 0.0
    %4997 = vmatpush1.msra.mxu0 0.0
    %4998 = vmatprep.subr.mxu0 0.0
    %4999 = vmatpush1.msra.mxu0 0.0
    %5000 = vmatprep.subr.mxu0 0.0
    %5001 = vmatpush1.msra.mxu0 0.0
    %5002 = vmatprep.mubr.f32.mxu0 0.0
    %5003 = vmatmul.mubr.f32.gmra.mrb[0].mxu0 %v4930
    %v5004 = vpop.f32.mrb[0].mxu0
    %v5005 = vadd.f32 %v4937, %v5004
    %v5006 = vpop.f32.mrb[0].mxu0
    %5007 = vmatprep.mubr.f32.mxu0 0.0
    %5008 = vmatmul.mubr.f32.gmra.mrb[0].mxu0 %v4931
    %v5009 = vpop.f32.mrb[0].mxu0
    %v5010 = vadd.f32 %v4937, %v5009
    %v5011 = vpop.f32.mrb[0].mxu0
    %5012 = vmatprep.mubr.f32.mxu0 0.0
    %5013 = vmatmul.mubr.f32.gmra.mrb[0].mxu0 %v4932
    %v5014 = vpop.f32.mrb[0].mxu0
    %v5015 = vadd.f32 %v4937, %v5014
    %v5016 = vpop.f32.mrb[0].mxu0
    %5017 = vmatprep.mubr.f32.mxu0 0.0
    %5018 = vmatmul.mubr.f32.gmra.mrb[0].mxu0 %v4933
    %v5019 = vpop.f32.mrb[0].mxu0
    %v5020 = vadd.f32 %v4937, %v5019
    %v5021 = vpop.f32.mrb[0].mxu0
    %5022 = vdwg.mxu0
    %v5023 = vadd.f32 %v5005, %v4825
    %v5024 = vadd.f32 %v5010, %v4826
    %v5025 = vadd.f32 %v5015, %v4827
    %v5026 = vadd.f32 %v5020, %v4828
    %v5027 = vsel %vm107, %v5023, 0.0
    %5028 = vadd.xlane.f32.xlu0 %v5027
    %v5029 = vpop.xlane.xlu0 %5028
    %v5030 = vsel %vm107, %v5024, 0.0
    %5031 = vadd.xlane.f32.xlu0 %v5030
    %v5032 = vpop.xlane.xlu0 %5031
    %v5033 = vsel %vm107, %v5025, 0.0
    %5034 = vadd.xlane.f32.xlu0 %v5033
    %v5035 = vpop.xlane.xlu0 %5034
    %v5036 = vsel %vm107, %v5026, 0.0
    %5037 = vadd.xlane.f32.xlu0 %v5036
    %v5038 = vpop.xlane.xlu0 %5037
    %v5039 = vmul.f32 %v5029, %v2255
    %v5040 = vmul.f32 %v5032, %v2255
    %v5041 = vmul.f32 %v5035, %v2255
    %v5042 = vmul.f32 %v5038, %v2255
    %v5043 = vsub.f32 %v5023, %v5039
    %v5044 = vsub.f32 %v5024, %v5040
    %v5045 = vsub.f32 %v5025, %v5041
    %v5046 = vsub.f32 %v5026, %v5042
    %v5047 = vmul.f32 %v5043, %v5043
    %v5048 = vmul.f32 %v5044, %v5044
    %v5049 = vmul.f32 %v5045, %v5045
    %v5050 = vmul.f32 %v5046, %v5046
    %v5051 = vsel %vm107, %v5047, 0.0
    %5052 = vadd.xlane.f32.xlu0 %v5051
    %v5053 = vpop.xlane.xlu0 %5052
    %v5054 = vsel %vm107, %v5048, 0.0
    %5055 = vadd.xlane.f32.xlu0 %v5054
    %v5056 = vpop.xlane.xlu0 %5055
    %v5057 = vsel %vm107, %v5049, 0.0
    %5058 = vadd.xlane.f32.xlu0 %v5057
    %v5059 = vpop.xlane.xlu0 %5058
    %v5060 = vsel %vm107, %v5050, 0.0
    %5061 = vadd.xlane.f32.xlu0 %v5060
    %v5062 = vpop.xlane.xlu0 %5061
    %v5063 = vmul.f32 %v5053, %v2255
    %v5064 = vmul.f32 %v5056, %v2255
    %v5065 = vmul.f32 %v5059, %v2255
    %v5066 = vmul.f32 %v5062, %v2255
    %v5067 = vadd.f32 %v5063, 1e-05
    %v5068 = vadd.f32 %v5064, 1e-05
    %v5069 = vadd.f32 %v5065, 1e-05
    %v5070 = vadd.f32 %v5066, 1e-05
    %v5071 = vrsqrt.pop %v5067
    %v5072 = vrsqrt.pop %v5068
    %v5073 = vrsqrt.pop %v5069
    %v5074 = vrsqrt.pop %v5070
    %v5075 = vmul.f32 %v5043, %v5071
    %v5076 = vmul.f32 %v5044, %v5072
    %v5077 = vmul.f32 %v5045, %v5073
    %v5078 = vmul.f32 %v5046, %v5074
    %v5079 = vlaneseq
    %v5080 = vshrl.u32 %v5079, 7
    %v5081 = vsub.s32 3, %v5080
    %v5082 = vrot.slane %v2623, %v5081
    %v5083 = vmul.f32 %v5075, %v5082
    %v5084 = vmul.f32 %v5076, %v5082
    %v5085 = vmul.f32 %v5077, %v5082
    %v5086 = vmul.f32 %v5078, %v5082
    %v5087 = vlaneseq
    %v5088 = vshrl.u32 %v5087, 7
    %v5089 = vsub.s32 4, %v5088
    %v5090 = vrot.slane %v2623, %v5089
    %v5091 = vadd.f32 %v5083, %v5090
    %v5092 = vadd.f32 %v5084, %v5090
    %v5093 = vadd.f32 %v5085, %v5090
    %v5094 = vadd.f32 %v5086, %v5090
    %s5095 = sld [smem:[#allocation2 + $0x1]]
    %v5096 = vstv %s5095
    %v5097 = vmul.f32 %v5096, %v5091
    %v5098 = vmul.f32 %v5096, %v5092
    %v5099 = vmul.f32 %v5096, %v5093
    %v5100 = vmul.f32 %v5096, %v5094
    %v5101 = vadd.f32 %v2584, %v5097
    %v5102 = vadd.f32 %v2585, %v5098
    %v5103 = vadd.f32 %v2586, %v5099
    %v5104 = vadd.f32 %v2587, %v5100
    %5105 = vst.msk [vmem:[#allocation5] sm:$0xff] %vm107, %v5101
    %5106 = vst.msk [vmem:[#allocation5 + $0x8] sm:$0xff] %vm107, %v5102
    %5107 = vst.msk [vmem:[#allocation5 + $0x10] sm:$0xff] %vm107, %v5103
    %5108 = vst.msk [vmem:[#allocation5 + $0x18] sm:$0xff] %vm107, %v5104
    // Predicated region
    $region46: #{tpu_custom_call.1} parent=1 // pred_check
      _
    $region47: #{tpu_custom_call.1} parent=1 // pred_check_branch
      %5110 = sbr.rel (0) target = $region49
    $region48: #{tpu_custom_call.1} parent=1 // pred_region
      %s5112 = ssub.s32 512, 512
      %5113 = vsyncadd [#allocation3], %s5112
      %s5114 = sshll.u32 [#allocation5], 4
      %s5115 = int_to_ptr.vmem [resolvable:$true] %s5114
      %5120 = dma.vmem_to_hbm [thread:$0]  %s5115, 512, %s10, [#allocation3], 128, 128, 8
    $region49: #{tpu_custom_call.1} parent=1 // pred_fallthru
      _
    // Predicated region
    $region50: #{tpu_custom_call.1} parent=1 // pred_check
      _
    $region51: #{tpu_custom_call.1} parent=1 // pred_check_branch
      %5122 = sbr.rel (0) target = $region53
    $region52: #{tpu_custom_call.1} parent=1 // pred_region
      %5123 = dma.done [#allocation3], 512
    $region53: #{tpu_custom_call.1} parent=1 // pred_fallthru
      _
    %5124 = vsyncpa [#allocation3], 1
    %5125 = vsyncpa [#allocation4], 1

</llo_original>
